<compile_context>
chip_gen: v5e
topology: v5e:2x2
jax: 0.10.0
libtpu: 0.0.40
codegen_flags: <defaults>
</compile_context>

<pallas_src>
import numpy as np
import jax
import jax.numpy as jnp
from jax import lax
from jax.experimental import pallas as pl
from jax.experimental.pallas import tpu as pltpu


# ------------------------------ fixed geometry ------------------------------ #
IN_H, IN_W = 15, 24           # input spatial size; 32*(15-6)*(24-6) = 5184 = fc1.in
X_FLAT = IN_H * IN_W          # 360
K1, C1 = 3, 16                # conv1: 1->16, 3x3
K2, C2 = 5, 32                # conv2: 16->32, 5x5
H2_H, H2_W = IN_H - K1 - K2 + 2, IN_W - K1 - K2 + 2   # 9, 18 (conv2 output)
P_W = (H2_H - 1) * IN_W + (H2_W - 1) + 1              # 210: flat-grid width of conv2 out
H1_W = (P_W - 1) + (K2 - 1) * IN_W + (K2 - 1) + 1     # 310: flat-grid width of conv1 out
KP = C1 * K2 * K2                                     # 400: im2col K for conv2
FLAT = C2 * P_W                                       # 6720: padded flatten fed to fc1
assert (H1_W - 1) + (K1 - 1) * IN_W + (K1 - 1) < X_FLAT   # conv1 reads stay inside x


# ------------------------------ fused kernel -------------------------------- #

def _convnet_kernel(x_ref, w1_ref, b1_ref, w2_ref, b2_ref, w3_ref, b3_ref,
                    w4_ref, b4_ref, o_ref, p_ref, flat_ref):
    """Whole forward pass in one kernel.

    x_ref    (1, 360)        input flattened on the 15x24 grid (s = h*24 + w)
    w1_ref   (16, 9)         conv1 weights, [channel, tap]
    b1_ref   (16, 1)
    w2_ref   (32, 400)       conv2 weights, [c_out, tap*16 + c_in]
    b2_ref   (32, 1)
    w3_ref   (6720, hidden)  fc1 weights permuted + zero-padded to flat-grid order
    b3_ref   (1, hidden)
    w4_ref   (hidden, out)   fc2 weights
    b4_ref   (1, out)
    o_ref    (1, out)
    p_ref    VMEM (400, 210) im2col patch matrix scratch
    flat_ref VMEM (1, 6720)  flattened conv2 output scratch
    """
    # ---- conv1 (1->16, 3x3, VALID) + bias + ReLU: 9 VPU broadcast-FMAs ----
    xv = x_ref[...]                                   # (1, 360)
    w1 = w1_ref[...]                                  # (16, 9)
    acc = jnp.zeros((C1, H1_W), jnp.float32)
    for di in range(K1):
        for dj in range(K1):
            t = di * K1 + dj
            off = di * IN_W + dj
            # (16,1) * (1,310) -> (16,310); lane-offset slice of the full row
            acc = acc + w1[:, t:t + 1] * xv[:, off:off + H1_W]
    h1 = jnp.maximum(acc + b1_ref[...], 0.0)          # (16, 310)

    # ---- conv2 (16->32, 5x5, VALID): im2col scratch + single MXU matmul ----
    for di in range(K2):
        for dj in range(K2):
            t = di * K2 + dj
            off = di * IN_W + dj
            # sublane-aligned block write (rows 16t..16t+15), lane-only slice of h1
            p_ref[C1 * t:C1 * (t + 1), :] = h1[:, off:off + P_W]
    h2 = jnp.dot(w2_ref[...], p_ref[...],
                 preferred_element_type=jnp.float32)  # (32,400)x(400,210) -> (32,210)
    h2 = jnp.maximum(h2 + b2_ref[...], 0.0)

    # ---- flatten (channel-major over the padded flat grid) via VMEM scratch ----
    # fc1 weights were permuted/zero-padded offline to exactly this ordering.
    for c in range(C2):
        flat_ref[:, P_W * c:P_W * (c + 1)] = h2[c:c + 1, :]

    # ---- fc1 + ReLU + fc2 ----
    h3 = jnp.dot(flat_ref[...], w3_ref[...],
                 preferred_element_type=jnp.float32) + b3_ref[...]   # (1, hidden)
    h3 = jnp.maximum(h3, 0.0)
    o_ref[...] = jnp.dot(h3, w4_ref[...],
                         preferred_element_type=jnp.float32) + b4_ref[...]


# -------------------------------- wrappers ---------------------------------- #

_VMEM = pl.BlockSpec(memory_space=pltpu.MemorySpace.VMEM)


def convnet_fused(x_flat, w1, b1, w2, b2, w3, b3, w4, b4):
    hidden, out_dim = w4.shape
    flops = 2 * (C1 * K1 * K1 * H1_W + C2 * KP * P_W + FLAT * hidden + hidden * out_dim)
    bytes_accessed = 4 * (x_flat.size + w1.size + b1.size + w2.size + b2.size +
                          w3.size + b3.size + w4.size + b4.size + out_dim)
    return pl.pallas_call(
        _convnet_kernel,
        out_shape=jax.ShapeDtypeStruct((1, out_dim), jnp.float32),
        in_specs=[_VMEM] * 9,
        out_specs=_VMEM,
        scratch_shapes=[pltpu.VMEM((KP, P_W), jnp.float32),
                        pltpu.VMEM((1, FLAT), jnp.float32)],
        compiler_params=pltpu.CompilerParams(vmem_limit_bytes=16 * 1024 * 1024),
        cost_estimate=pl.CostEstimate(flops=flops, transcendentals=0,
                                      bytes_accessed=bytes_accessed),
    )(x_flat, w1, b1, w2, b2, w3, b3, w4, b4)


def prepare_params(p):
    """One-time (offline) layout transforms of the PyTorch parameters."""
    hidden = p['fc1_w'].shape[0]
    w1 = p['conv1_w'].reshape(C1, K1 * K1).astype(jnp.float32)          # [c, di*3+dj]
    b1 = p['conv1_b'].reshape(C1, 1).astype(jnp.float32)
    # conv2: (co, ci, di, dj) -> (co, di, dj, ci) -> (co, tap*16 + ci)
    w2 = jnp.transpose(p['conv2_w'], (0, 2, 3, 1)).reshape(C2, KP).astype(jnp.float32)
    b2 = p['conv2_b'].reshape(C2, 1).astype(jnp.float32)
    # fc1: fold torch's C-major flatten + the kernel's padded flat-grid layout
    # into the weight rows; rows for padding columns (w >= 18) are zero.
    w3 = p['fc1_w'].T.reshape(C2, H2_H, H2_W, hidden)                   # row = co*162+h*18+w
    w3 = jnp.pad(w3, ((0, 0), (0, 0), (0, IN_W - H2_W), (0, 0)))        # (32, 9, 24, hidden)
    w3 = w3.reshape(C2, H2_H * IN_W, hidden)[:, :P_W, :]                # (32, 210, hidden)
    w3 = w3.reshape(FLAT, hidden).astype(jnp.float32)                   # row = co*210 + h*24 + w
    b3 = p['fc1_b'].reshape(1, hidden).astype(jnp.float32)
    w4 = p['fc2_w'].T.astype(jnp.float32)                               # (hidden, out)
    b4 = p['fc2_b'].reshape(1, -1).astype(jnp.float32)
    return dict(w1=w1, b1=b1, w2=w2, b2=b2, w3=w3, b3=b3, w4=w4, b4=b4)


def convnet_forward(prep, x):
    """x: (1, H, W) float32 (the torch input before its internal unsqueeze(0))."""
    x_flat = x.reshape(1, X_FLAT).astype(jnp.float32)    # free metadata reshape
    return convnet_fused(x_flat, prep['w1'], prep['b1'], prep['w2'], prep['b2'],
                         prep['w3'], prep['b3'], prep['w4'], prep['b4'])


# --------------------------- reference (pure JAX) --------------------------- #

def reference_forward(p, x):
    hp = lax.Precision.HIGHEST
    xb = x[None]                                                  # (1,1,H,W)
    h = lax.conv_general_dilated(xb, p['conv1_w'], (1, 1), 'VALID',
                                 dimension_numbers=('NCHW', 'OIHW', 'NCHW'),
                                 precision=hp)
    h = jnp.maximum(h + p['conv1_b'][None, :, None, None], 0.0)
    h = lax.conv_general_dilated(h, p['conv2_w'], (1, 1), 'VALID',
                                 dimension_numbers=('NCHW', 'OIHW', 'NCHW'),
                                 precision=hp)
    h = jnp.maximum(h + p['conv2_b'][None, :, None, None], 0.0)
    h = h.reshape(-1, 5184)
    h = jnp.maximum(jnp.dot(h, p['fc1_w'].T, precision=hp) + p['fc1_b'], 0.0)
    return jnp.dot(h, p['fc2_w'].T, precision=hp) + p['fc2_b']


# ------------------------------ param init --------------------------------- #

def init_params(key, hidden_size, output_size):
    ks = jax.random.split(key, 8)

    def u(k, shape, fan_in):
        bound = 1.0 / float(np.sqrt(fan_in))
        return jax.random.uniform(k, shape, jnp.float32, -bound, bound)

    return {
        'conv1_w': u(ks[0], (16, 1, 3, 3), 1 * 3 * 3),
        'conv1_b': u(ks[1], (16,), 1 * 3 * 3),
        'conv2_w': u(ks[2], (32, 16, 5, 5), 16 * 5 * 5),
        'conv2_b': u(ks[3], (32,), 16 * 5 * 5),
        'fc1_w':   u(ks[4], (hidden_size, 5184), 5184),
        'fc1_b':   u(ks[5], (hidden_size,), 5184),
        'fc2_w':   u(ks[6], (output_size, hidden_size), hidden_size),
        'fc2_b':   u(ks[7], (output_size,), hidden_size),
    }


# --------------------------------- main ------------------------------------ #

if __name__ == "__main__":
    hidden_size, output_size = 32, 10
    key = jax.random.PRNGKey(0)
    kx, kp = jax.random.split(key)
    x = jax.random.normal(kx, (1, IN_H, IN_W), jnp.float32)   # torch input (C=1,H,W)
    params = init_params(kp, hidden_size, output_size)

    prep = prepare_params(params)            # one-time layout/weight folding
    fwd = jax.jit(convnet_forward)           # hot path = exactly one pallas_call

    out = fwd(prep, x)
    out = jax.block_until_ready(out)
    assert out.shape == (1, output_size), out.shape

    ref = reference_forward(params, x)
    np.testing.assert_allclose(np.asarray(out), np.asarray(ref),
                               rtol=1e-3, atol=1e-3)
    print("KERNEL_OK")
</pallas_src>

<mosaic_0001>
module attributes {stable_mosaic.version = 11 : i64} {
  func.func @_convnet_kernel(%arg0: memref<1x360xf32, #tpu.memory_space<vmem>>, %arg1: memref<16x9xf32, #tpu.memory_space<vmem>>, %arg2: memref<16x1xf32, #tpu.memory_space<vmem>>, %arg3: memref<32x400xf32, #tpu.memory_space<vmem>>, %arg4: memref<32x1xf32, #tpu.memory_space<vmem>>, %arg5: memref<6720x32xf32, #tpu.memory_space<vmem>>, %arg6: memref<1x32xf32, #tpu.memory_space<vmem>>, %arg7: memref<32x10xf32, #tpu.memory_space<vmem>>, %arg8: memref<1x10xf32, #tpu.memory_space<vmem>>, %arg9: memref<1x10xf32, #tpu.memory_space<vmem>>, %arg10: memref<400x210xf32, #tpu.memory_space<vmem>>, %arg11: memref<1x6720xf32, #tpu.memory_space<vmem>>) attributes {dimension_semantics = [], scalar_prefetch = 0 : i64, scratch_operands = 2 : i64, tpu.core_type = #tpu.core_type<tc>} {
    %c0 = arith.constant 0 : index
    %c0_0 = arith.constant 0 : index
    %0 = vector.load %arg0[%c0, %c0_0] : memref<1x360xf32, #tpu.memory_space<vmem>>, vector<1x360xf32>
    %c0_1 = arith.constant 0 : index
    %c0_2 = arith.constant 0 : index
    %1 = vector.load %arg1[%c0_1, %c0_2] : memref<16x9xf32, #tpu.memory_space<vmem>>, vector<16x9xf32>
    %cst = arith.constant 0.000000e+00 : f32
    %2 = vector.broadcast %cst : f32 to vector<16x310xf32>
    %3 = vector.extract_strided_slice %1 {offsets = [0, 0], sizes = [16, 1], strides = [1, 1]} : vector<16x9xf32> to vector<16x1xf32>
    %4 = vector.extract_strided_slice %0 {offsets = [0, 0], sizes = [1, 310], strides = [1, 1]} : vector<1x360xf32> to vector<1x310xf32>
    %5 = vector.broadcast %3 : vector<16x1xf32> to vector<16x310xf32>
    %6 = vector.broadcast %4 : vector<1x310xf32> to vector<16x310xf32>
    %7 = arith.mulf %5, %6 : vector<16x310xf32>
    %8 = arith.addf %2, %7 : vector<16x310xf32>
    %9 = vector.extract_strided_slice %1 {offsets = [0, 1], sizes = [16, 1], strides = [1, 1]} : vector<16x9xf32> to vector<16x1xf32>
    %10 = vector.extract_strided_slice %0 {offsets = [0, 1], sizes = [1, 310], strides = [1, 1]} : vector<1x360xf32> to vector<1x310xf32>
    %11 = vector.broadcast %9 : vector<16x1xf32> to vector<16x310xf32>
    %12 = vector.broadcast %10 : vector<1x310xf32> to vector<16x310xf32>
    %13 = arith.mulf %11, %12 : vector<16x310xf32>
    %14 = arith.addf %8, %13 : vector<16x310xf32>
    %15 = vector.extract_strided_slice %1 {offsets = [0, 2], sizes = [16, 1], strides = [1, 1]} : vector<16x9xf32> to vector<16x1xf32>
    %16 = vector.extract_strided_slice %0 {offsets = [0, 2], sizes = [1, 310], strides = [1, 1]} : vector<1x360xf32> to vector<1x310xf32>
    %17 = vector.broadcast %15 : vector<16x1xf32> to vector<16x310xf32>
    %18 = vector.broadcast %16 : vector<1x310xf32> to vector<16x310xf32>
    %19 = arith.mulf %17, %18 : vector<16x310xf32>
    %20 = arith.addf %14, %19 : vector<16x310xf32>
    %21 = vector.extract_strided_slice %1 {offsets = [0, 3], sizes = [16, 1], strides = [1, 1]} : vector<16x9xf32> to vector<16x1xf32>
    %22 = vector.extract_strided_slice %0 {offsets = [0, 24], sizes = [1, 310], strides = [1, 1]} : vector<1x360xf32> to vector<1x310xf32>
    %23 = vector.broadcast %21 : vector<16x1xf32> to vector<16x310xf32>
    %24 = vector.broadcast %22 : vector<1x310xf32> to vector<16x310xf32>
    %25 = arith.mulf %23, %24 : vector<16x310xf32>
    %26 = arith.addf %20, %25 : vector<16x310xf32>
    %27 = vector.extract_strided_slice %1 {offsets = [0, 4], sizes = [16, 1], strides = [1, 1]} : vector<16x9xf32> to vector<16x1xf32>
    %28 = vector.extract_strided_slice %0 {offsets = [0, 25], sizes = [1, 310], strides = [1, 1]} : vector<1x360xf32> to vector<1x310xf32>
    %29 = vector.broadcast %27 : vector<16x1xf32> to vector<16x310xf32>
    %30 = vector.broadcast %28 : vector<1x310xf32> to vector<16x310xf32>
    %31 = arith.mulf %29, %30 : vector<16x310xf32>
    %32 = arith.addf %26, %31 : vector<16x310xf32>
    %33 = vector.extract_strided_slice %1 {offsets = [0, 5], sizes = [16, 1], strides = [1, 1]} : vector<16x9xf32> to vector<16x1xf32>
    %34 = vector.extract_strided_slice %0 {offsets = [0, 26], sizes = [1, 310], strides = [1, 1]} : vector<1x360xf32> to vector<1x310xf32>
    %35 = vector.broadcast %33 : vector<16x1xf32> to vector<16x310xf32>
    %36 = vector.broadcast %34 : vector<1x310xf32> to vector<16x310xf32>
    %37 = arith.mulf %35, %36 : vector<16x310xf32>
    %38 = arith.addf %32, %37 : vector<16x310xf32>
    %39 = vector.extract_strided_slice %1 {offsets = [0, 6], sizes = [16, 1], strides = [1, 1]} : vector<16x9xf32> to vector<16x1xf32>
    %40 = vector.extract_strided_slice %0 {offsets = [0, 48], sizes = [1, 310], strides = [1, 1]} : vector<1x360xf32> to vector<1x310xf32>
    %41 = vector.broadcast %39 : vector<16x1xf32> to vector<16x310xf32>
    %42 = vector.broadcast %40 : vector<1x310xf32> to vector<16x310xf32>
    %43 = arith.mulf %41, %42 : vector<16x310xf32>
    %44 = arith.addf %38, %43 : vector<16x310xf32>
    %45 = vector.extract_strided_slice %1 {offsets = [0, 7], sizes = [16, 1], strides = [1, 1]} : vector<16x9xf32> to vector<16x1xf32>
    %46 = vector.extract_strided_slice %0 {offsets = [0, 49], sizes = [1, 310], strides = [1, 1]} : vector<1x360xf32> to vector<1x310xf32>
    %47 = vector.broadcast %45 : vector<16x1xf32> to vector<16x310xf32>
    %48 = vector.broadcast %46 : vector<1x310xf32> to vector<16x310xf32>
    %49 = arith.mulf %47, %48 : vector<16x310xf32>
    %50 = arith.addf %44, %49 : vector<16x310xf32>
    %51 = vector.extract_strided_slice %1 {offsets = [0, 8], sizes = [16, 1], strides = [1, 1]} : vector<16x9xf32> to vector<16x1xf32>
    %52 = vector.extract_strided_slice %0 {offsets = [0, 50], sizes = [1, 310], strides = [1, 1]} : vector<1x360xf32> to vector<1x310xf32>
    %53 = vector.broadcast %51 : vector<16x1xf32> to vector<16x310xf32>
    %54 = vector.broadcast %52 : vector<1x310xf32> to vector<16x310xf32>
    %55 = arith.mulf %53, %54 : vector<16x310xf32>
    %56 = arith.addf %50, %55 : vector<16x310xf32>
    %c0_3 = arith.constant 0 : index
    %c0_4 = arith.constant 0 : index
    %57 = vector.load %arg2[%c0_3, %c0_4] : memref<16x1xf32, #tpu.memory_space<vmem>>, vector<16x1xf32>
    %58 = vector.broadcast %57 : vector<16x1xf32> to vector<16x310xf32>
    %59 = arith.addf %56, %58 : vector<16x310xf32>
    %cst_5 = arith.constant 0.000000e+00 : f32
    %60 = vector.broadcast %cst_5 : f32 to vector<16x310xf32>
    %61 = arith.maximumf %59, %60 : vector<16x310xf32>
    %62 = vector.extract_strided_slice %61 {offsets = [0, 0], sizes = [16, 210], strides = [1, 1]} : vector<16x310xf32> to vector<16x210xf32>
    %c0_6 = arith.constant 0 : index
    %c0_7 = arith.constant 0 : index
    %63 = vector.load %arg10[%c0_6, %c0_7] : memref<400x210xf32, #tpu.memory_space<vmem>>, vector<16x210xf32>
    tpu.vector_store %arg10[%c0_6, %c0_7], %62 {strides = array<i32>} : memref<400x210xf32, #tpu.memory_space<vmem>>, vector<16x210xf32>,
    %64 = vector.extract_strided_slice %61 {offsets = [0, 1], sizes = [16, 210], strides = [1, 1]} : vector<16x310xf32> to vector<16x210xf32>
    %c16 = arith.constant 16 : index
    %c0_8 = arith.constant 0 : index
    %65 = vector.load %arg10[%c16, %c0_8] : memref<400x210xf32, #tpu.memory_space<vmem>>, vector<16x210xf32>
    tpu.vector_store %arg10[%c16, %c0_8], %64 {strides = array<i32>} : memref<400x210xf32, #tpu.memory_space<vmem>>, vector<16x210xf32>,
    %66 = vector.extract_strided_slice %61 {offsets = [0, 2], sizes = [16, 210], strides = [1, 1]} : vector<16x310xf32> to vector<16x210xf32>
    %c32 = arith.constant 32 : index
    %c0_9 = arith.constant 0 : index
    %67 = vector.load %arg10[%c32, %c0_9] : memref<400x210xf32, #tpu.memory_space<vmem>>, vector<16x210xf32>
    tpu.vector_store %arg10[%c32, %c0_9], %66 {strides = array<i32>} : memref<400x210xf32, #tpu.memory_space<vmem>>, vector<16x210xf32>,
    %68 = vector.extract_strided_slice %61 {offsets = [0, 3], sizes = [16, 210], strides = [1, 1]} : vector<16x310xf32> to vector<16x210xf32>
    %c48 = arith.constant 48 : index
    %c0_10 = arith.constant 0 : index
    %69 = vector.load %arg10[%c48, %c0_10] : memref<400x210xf32, #tpu.memory_space<vmem>>, vector<16x210xf32>
    tpu.vector_store %arg10[%c48, %c0_10], %68 {strides = array<i32>} : memref<400x210xf32, #tpu.memory_space<vmem>>, vector<16x210xf32>,
    %70 = vector.extract_strided_slice %61 {offsets = [0, 4], sizes = [16, 210], strides = [1, 1]} : vector<16x310xf32> to vector<16x210xf32>
    %c64 = arith.constant 64 : index
    %c0_11 = arith.constant 0 : index
    %71 = vector.load %arg10[%c64, %c0_11] : memref<400x210xf32, #tpu.memory_space<vmem>>, vector<16x210xf32>
    tpu.vector_store %arg10[%c64, %c0_11], %70 {strides = array<i32>} : memref<400x210xf32, #tpu.memory_space<vmem>>, vector<16x210xf32>,
    %72 = vector.extract_strided_slice %61 {offsets = [0, 24], sizes = [16, 210], strides = [1, 1]} : vector<16x310xf32> to vector<16x210xf32>
    %c80 = arith.constant 80 : index
    %c0_12 = arith.constant 0 : index
    %73 = vector.load %arg10[%c80, %c0_12] : memref<400x210xf32, #tpu.memory_space<vmem>>, vector<16x210xf32>
    tpu.vector_store %arg10[%c80, %c0_12], %72 {strides = array<i32>} : memref<400x210xf32, #tpu.memory_space<vmem>>, vector<16x210xf32>,
    %74 = vector.extract_strided_slice %61 {offsets = [0, 25], sizes = [16, 210], strides = [1, 1]} : vector<16x310xf32> to vector<16x210xf32>
    %c96 = arith.constant 96 : index
    %c0_13 = arith.constant 0 : index
    %75 = vector.load %arg10[%c96, %c0_13] : memref<400x210xf32, #tpu.memory_space<vmem>>, vector<16x210xf32>
    tpu.vector_store %arg10[%c96, %c0_13], %74 {strides = array<i32>} : memref<400x210xf32, #tpu.memory_space<vmem>>, vector<16x210xf32>,
    %76 = vector.extract_strided_slice %61 {offsets = [0, 26], sizes = [16, 210], strides = [1, 1]} : vector<16x310xf32> to vector<16x210xf32>
    %c112 = arith.constant 112 : index
    %c0_14 = arith.constant 0 : index
    %77 = vector.load %arg10[%c112, %c0_14] : memref<400x210xf32, #tpu.memory_space<vmem>>, vector<16x210xf32>
    tpu.vector_store %arg10[%c112, %c0_14], %76 {strides = array<i32>} : memref<400x210xf32, #tpu.memory_space<vmem>>, vector<16x210xf32>,
    %78 = vector.extract_strided_slice %61 {offsets = [0, 27], sizes = [16, 210], strides = [1, 1]} : vector<16x310xf32> to vector<16x210xf32>
    %c128 = arith.constant 128 : index
    %c0_15 = arith.constant 0 : index
    %79 = vector.load %arg10[%c128, %c0_15] : memref<400x210xf32, #tpu.memory_space<vmem>>, vector<16x210xf32>
    tpu.vector_store %arg10[%c128, %c0_15], %78 {strides = array<i32>} : memref<400x210xf32, #tpu.memory_space<vmem>>, vector<16x210xf32>,
    %80 = vector.extract_strided_slice %61 {offsets = [0, 28], sizes = [16, 210], strides = [1, 1]} : vector<16x310xf32> to vector<16x210xf32>
    %c144 = arith.constant 144 : index
    %c0_16 = arith.constant 0 : index
    %81 = vector.load %arg10[%c144, %c0_16] : memref<400x210xf32, #tpu.memory_space<vmem>>, vector<16x210xf32>
    tpu.vector_store %arg10[%c144, %c0_16], %80 {strides = array<i32>} : memref<400x210xf32, #tpu.memory_space<vmem>>, vector<16x210xf32>,
    %82 = vector.extract_strided_slice %61 {offsets = [0, 48], sizes = [16, 210], strides = [1, 1]} : vector<16x310xf32> to vector<16x210xf32>
    %c160 = arith.constant 160 : index
    %c0_17 = arith.constant 0 : index
    %83 = vector.load %arg10[%c160, %c0_17] : memref<400x210xf32, #tpu.memory_space<vmem>>, vector<16x210xf32>
    tpu.vector_store %arg10[%c160, %c0_17], %82 {strides = array<i32>} : memref<400x210xf32, #tpu.memory_space<vmem>>, vector<16x210xf32>,
    %84 = vector.extract_strided_slice %61 {offsets = [0, 49], sizes = [16, 210], strides = [1, 1]} : vector<16x310xf32> to vector<16x210xf32>
    %c176 = arith.constant 176 : index
    %c0_18 = arith.constant 0 : index
    %85 = vector.load %arg10[%c176, %c0_18] : memref<400x210xf32, #tpu.memory_space<vmem>>, vector<16x210xf32>
    tpu.vector_store %arg10[%c176, %c0_18], %84 {strides = array<i32>} : memref<400x210xf32, #tpu.memory_space<vmem>>, vector<16x210xf32>,
    %86 = vector.extract_strided_slice %61 {offsets = [0, 50], sizes = [16, 210], strides = [1, 1]} : vector<16x310xf32> to vector<16x210xf32>
    %c192 = arith.constant 192 : index
    %c0_19 = arith.constant 0 : index
    %87 = vector.load %arg10[%c192, %c0_19] : memref<400x210xf32, #tpu.memory_space<vmem>>, vector<16x210xf32>
    tpu.vector_store %arg10[%c192, %c0_19], %86 {strides = array<i32>} : memref<400x210xf32, #tpu.memory_space<vmem>>, vector<16x210xf32>,
    %88 = vector.extract_strided_slice %61 {offsets = [0, 51], sizes = [16, 210], strides = [1, 1]} : vector<16x310xf32> to vector<16x210xf32>
    %c208 = arith.constant 208 : index
    %c0_20 = arith.constant 0 : index
    %89 = vector.load %arg10[%c208, %c0_20] : memref<400x210xf32, #tpu.memory_space<vmem>>, vector<16x210xf32>
    tpu.vector_store %arg10[%c208, %c0_20], %88 {strides = array<i32>} : memref<400x210xf32, #tpu.memory_space<vmem>>, vector<16x210xf32>,
    %90 = vector.extract_strided_slice %61 {offsets = [0, 52], sizes = [16, 210], strides = [1, 1]} : vector<16x310xf32> to vector<16x210xf32>
    %c224 = arith.constant 224 : index
    %c0_21 = arith.constant 0 : index
    %91 = vector.load %arg10[%c224, %c0_21] : memref<400x210xf32, #tpu.memory_space<vmem>>, vector<16x210xf32>
    tpu.vector_store %arg10[%c224, %c0_21], %90 {strides = array<i32>} : memref<400x210xf32, #tpu.memory_space<vmem>>, vector<16x210xf32>,
    %92 = vector.extract_strided_slice %61 {offsets = [0, 72], sizes = [16, 210], strides = [1, 1]} : vector<16x310xf32> to vector<16x210xf32>
    %c240 = arith.constant 240 : index
    %c0_22 = arith.constant 0 : index
    %93 = vector.load %arg10[%c240, %c0_22] : memref<400x210xf32, #tpu.memory_space<vmem>>, vector<16x210xf32>
    tpu.vector_store %arg10[%c240, %c0_22], %92 {strides = array<i32>} : memref<400x210xf32, #tpu.memory_space<vmem>>, vector<16x210xf32>,
    %94 = vector.extract_strided_slice %61 {offsets = [0, 73], sizes = [16, 210], strides = [1, 1]} : vector<16x310xf32> to vector<16x210xf32>
    %c256 = arith.constant 256 : index
    %c0_23 = arith.constant 0 : index
    %95 = vector.load %arg10[%c256, %c0_23] : memref<400x210xf32, #tpu.memory_space<vmem>>, vector<16x210xf32>
    tpu.vector_store %arg10[%c256, %c0_23], %94 {strides = array<i32>} : memref<400x210xf32, #tpu.memory_space<vmem>>, vector<16x210xf32>,
    %96 = vector.extract_strided_slice %61 {offsets = [0, 74], sizes = [16, 210], strides = [1, 1]} : vector<16x310xf32> to vector<16x210xf32>
    %c272 = arith.constant 272 : index
    %c0_24 = arith.constant 0 : index
    %97 = vector.load %arg10[%c272, %c0_24] : memref<400x210xf32, #tpu.memory_space<vmem>>, vector<16x210xf32>
    tpu.vector_store %arg10[%c272, %c0_24], %96 {strides = array<i32>} : memref<400x210xf32, #tpu.memory_space<vmem>>, vector<16x210xf32>,
    %98 = vector.extract_strided_slice %61 {offsets = [0, 75], sizes = [16, 210], strides = [1, 1]} : vector<16x310xf32> to vector<16x210xf32>
    %c288 = arith.constant 288 : index
    %c0_25 = arith.constant 0 : index
    %99 = vector.load %arg10[%c288, %c0_25] : memref<400x210xf32, #tpu.memory_space<vmem>>, vector<16x210xf32>
    tpu.vector_store %arg10[%c288, %c0_25], %98 {strides = array<i32>} : memref<400x210xf32, #tpu.memory_space<vmem>>, vector<16x210xf32>,
    %100 = vector.extract_strided_slice %61 {offsets = [0, 76], sizes = [16, 210], strides = [1, 1]} : vector<16x310xf32> to vector<16x210xf32>
    %c304 = arith.constant 304 : index
    %c0_26 = arith.constant 0 : index
    %101 = vector.load %arg10[%c304, %c0_26] : memref<400x210xf32, #tpu.memory_space<vmem>>, vector<16x210xf32>
    tpu.vector_store %arg10[%c304, %c0_26], %100 {strides = array<i32>} : memref<400x210xf32, #tpu.memory_space<vmem>>, vector<16x210xf32>,
    %102 = vector.extract_strided_slice %61 {offsets = [0, 96], sizes = [16, 210], strides = [1, 1]} : vector<16x310xf32> to vector<16x210xf32>
    %c320 = arith.constant 320 : index
    %c0_27 = arith.constant 0 : index
    %103 = vector.load %arg10[%c320, %c0_27] : memref<400x210xf32, #tpu.memory_space<vmem>>, vector<16x210xf32>
    tpu.vector_store %arg10[%c320, %c0_27], %102 {strides = array<i32>} : memref<400x210xf32, #tpu.memory_space<vmem>>, vector<16x210xf32>,
    %104 = vector.extract_strided_slice %61 {offsets = [0, 97], sizes = [16, 210], strides = [1, 1]} : vector<16x310xf32> to vector<16x210xf32>
    %c336 = arith.constant 336 : index
    %c0_28 = arith.constant 0 : index
    %105 = vector.load %arg10[%c336, %c0_28] : memref<400x210xf32, #tpu.memory_space<vmem>>, vector<16x210xf32>
    tpu.vector_store %arg10[%c336, %c0_28], %104 {strides = array<i32>} : memref<400x210xf32, #tpu.memory_space<vmem>>, vector<16x210xf32>,
    %106 = vector.extract_strided_slice %61 {offsets = [0, 98], sizes = [16, 210], strides = [1, 1]} : vector<16x310xf32> to vector<16x210xf32>
    %c352 = arith.constant 352 : index
    %c0_29 = arith.constant 0 : index
    %107 = vector.load %arg10[%c352, %c0_29] : memref<400x210xf32, #tpu.memory_space<vmem>>, vector<16x210xf32>
    tpu.vector_store %arg10[%c352, %c0_29], %106 {strides = array<i32>} : memref<400x210xf32, #tpu.memory_space<vmem>>, vector<16x210xf32>,
    %108 = vector.extract_strided_slice %61 {offsets = [0, 99], sizes = [16, 210], strides = [1, 1]} : vector<16x310xf32> to vector<16x210xf32>
    %c368 = arith.constant 368 : index
    %c0_30 = arith.constant 0 : index
    %109 = vector.load %arg10[%c368, %c0_30] : memref<400x210xf32, #tpu.memory_space<vmem>>, vector<16x210xf32>
    tpu.vector_store %arg10[%c368, %c0_30], %108 {strides = array<i32>} : memref<400x210xf32, #tpu.memory_space<vmem>>, vector<16x210xf32>,
    %110 = vector.extract_strided_slice %61 {offsets = [0, 100], sizes = [16, 210], strides = [1, 1]} : vector<16x310xf32> to vector<16x210xf32>
    %c384 = arith.constant 384 : index
    %c0_31 = arith.constant 0 : index
    %111 = vector.load %arg10[%c384, %c0_31] : memref<400x210xf32, #tpu.memory_space<vmem>>, vector<16x210xf32>
    tpu.vector_store %arg10[%c384, %c0_31], %110 {strides = array<i32>} : memref<400x210xf32, #tpu.memory_space<vmem>>, vector<16x210xf32>,
    %c0_32 = arith.constant 0 : index
    %c0_33 = arith.constant 0 : index
    %112 = vector.load %arg3[%c0_32, %c0_33] : memref<32x400xf32, #tpu.memory_space<vmem>>, vector<32x400xf32>
    %c0_34 = arith.constant 0 : index
    %c0_35 = arith.constant 0 : index
    %113 = vector.load %arg10[%c0_34, %c0_35] : memref<400x210xf32, #tpu.memory_space<vmem>>, vector<400x210xf32>
    %cst_36 = arith.constant dense<0.000000e+00> : vector<32x210xf32>
    %114 = tpu.matmul %112, %113, %cst_36 {dimension_numbers = #tpu.dot_dimension_numbers<[1], [0], [0], [1], [0, 0, 1, 1], [], []>} : vector<32x400xf32>, vector<400x210xf32>, vector<32x210xf32> -> vector<32x210xf32>
    %c0_37 = arith.constant 0 : index
    %c0_38 = arith.constant 0 : index
    %115 = vector.load %arg4[%c0_37, %c0_38] : memref<32x1xf32, #tpu.memory_space<vmem>>, vector<32x1xf32>
    %116 = vector.broadcast %115 : vector<32x1xf32> to vector<32x210xf32>
    %117 = arith.addf %114, %116 : vector<32x210xf32>
    %cst_39 = arith.constant 0.000000e+00 : f32
    %118 = vector.broadcast %cst_39 : f32 to vector<32x210xf32>
    %119 = arith.maximumf %117, %118 : vector<32x210xf32>
    %120 = vector.extract_strided_slice %119 {offsets = [0, 0], sizes = [1, 210], strides = [1, 1]} : vector<32x210xf32> to vector<1x210xf32>
    %c0_40 = arith.constant 0 : index
    %c0_41 = arith.constant 0 : index
    %121 = vector.load %arg11[%c0_40, %c0_41] : memref<1x6720xf32, #tpu.memory_space<vmem>>, vector<1x210xf32>
    tpu.vector_store %arg11[%c0_40, %c0_41], %120 {strides = array<i32>} : memref<1x6720xf32, #tpu.memory_space<vmem>>, vector<1x210xf32>,
    %122 = vector.extract_strided_slice %119 {offsets = [1, 0], sizes = [1, 210], strides = [1, 1]} : vector<32x210xf32> to vector<1x210xf32>
    %c0_42 = arith.constant 0 : index
    %c210 = arith.constant 210 : index
    %123 = vector.load %arg11[%c0_42, %c210] : memref<1x6720xf32, #tpu.memory_space<vmem>>, vector<1x210xf32>
    tpu.vector_store %arg11[%c0_42, %c210], %122 {strides = array<i32>} : memref<1x6720xf32, #tpu.memory_space<vmem>>, vector<1x210xf32>,
    %124 = vector.extract_strided_slice %119 {offsets = [2, 0], sizes = [1, 210], strides = [1, 1]} : vector<32x210xf32> to vector<1x210xf32>
    %c0_43 = arith.constant 0 : index
    %c420 = arith.constant 420 : index
    %125 = vector.load %arg11[%c0_43, %c420] : memref<1x6720xf32, #tpu.memory_space<vmem>>, vector<1x210xf32>
    tpu.vector_store %arg11[%c0_43, %c420], %124 {strides = array<i32>} : memref<1x6720xf32, #tpu.memory_space<vmem>>, vector<1x210xf32>,
    %126 = vector.extract_strided_slice %119 {offsets = [3, 0], sizes = [1, 210], strides = [1, 1]} : vector<32x210xf32> to vector<1x210xf32>
    %c0_44 = arith.constant 0 : index
    %c630 = arith.constant 630 : index
    %127 = vector.load %arg11[%c0_44, %c630] : memref<1x6720xf32, #tpu.memory_space<vmem>>, vector<1x210xf32>
    tpu.vector_store %arg11[%c0_44, %c630], %126 {strides = array<i32>} : memref<1x6720xf32, #tpu.memory_space<vmem>>, vector<1x210xf32>,
    %128 = vector.extract_strided_slice %119 {offsets = [4, 0], sizes = [1, 210], strides = [1, 1]} : vector<32x210xf32> to vector<1x210xf32>
    %c0_45 = arith.constant 0 : index
    %c840 = arith.constant 840 : index
    %129 = vector.load %arg11[%c0_45, %c840] : memref<1x6720xf32, #tpu.memory_space<vmem>>, vector<1x210xf32>
    tpu.vector_store %arg11[%c0_45, %c840], %128 {strides = array<i32>} : memref<1x6720xf32, #tpu.memory_space<vmem>>, vector<1x210xf32>,
    %130 = vector.extract_strided_slice %119 {offsets = [5, 0], sizes = [1, 210], strides = [1, 1]} : vector<32x210xf32> to vector<1x210xf32>
    %c0_46 = arith.constant 0 : index
    %c1050 = arith.constant 1050 : index
    %131 = vector.load %arg11[%c0_46, %c1050] : memref<1x6720xf32, #tpu.memory_space<vmem>>, vector<1x210xf32>
    tpu.vector_store %arg11[%c0_46, %c1050], %130 {strides = array<i32>} : memref<1x6720xf32, #tpu.memory_space<vmem>>, vector<1x210xf32>,
    %132 = vector.extract_strided_slice %119 {offsets = [6, 0], sizes = [1, 210], strides = [1, 1]} : vector<32x210xf32> to vector<1x210xf32>
    %c0_47 = arith.constant 0 : index
    %c1260 = arith.constant 1260 : index
    %133 = vector.load %arg11[%c0_47, %c1260] : memref<1x6720xf32, #tpu.memory_space<vmem>>, vector<1x210xf32>
    tpu.vector_store %arg11[%c0_47, %c1260], %132 {strides = array<i32>} : memref<1x6720xf32, #tpu.memory_space<vmem>>, vector<1x210xf32>,
    %134 = vector.extract_strided_slice %119 {offsets = [7, 0], sizes = [1, 210], strides = [1, 1]} : vector<32x210xf32> to vector<1x210xf32>
    %c0_48 = arith.constant 0 : index
    %c1470 = arith.constant 1470 : index
    %135 = vector.load %arg11[%c0_48, %c1470] : memref<1x6720xf32, #tpu.memory_space<vmem>>, vector<1x210xf32>
    tpu.vector_store %arg11[%c0_48, %c1470], %134 {strides = array<i32>} : memref<1x6720xf32, #tpu.memory_space<vmem>>, vector<1x210xf32>,
    %136 = vector.extract_strided_slice %119 {offsets = [8, 0], sizes = [1, 210], strides = [1, 1]} : vector<32x210xf32> to vector<1x210xf32>
    %c0_49 = arith.constant 0 : index
    %c1680 = arith.constant 1680 : index
    %137 = vector.load %arg11[%c0_49, %c1680] : memref<1x6720xf32, #tpu.memory_space<vmem>>, vector<1x210xf32>
    tpu.vector_store %arg11[%c0_49, %c1680], %136 {strides = array<i32>} : memref<1x6720xf32, #tpu.memory_space<vmem>>, vector<1x210xf32>,
    %138 = vector.extract_strided_slice %119 {offsets = [9, 0], sizes = [1, 210], strides = [1, 1]} : vector<32x210xf32> to vector<1x210xf32>
    %c0_50 = arith.constant 0 : index
    %c1890 = arith.constant 1890 : index
    %139 = vector.load %arg11[%c0_50, %c1890] : memref<1x6720xf32, #tpu.memory_space<vmem>>, vector<1x210xf32>
    tpu.vector_store %arg11[%c0_50, %c1890], %138 {strides = array<i32>} : memref<1x6720xf32, #tpu.memory_space<vmem>>, vector<1x210xf32>,
    %140 = vector.extract_strided_slice %119 {offsets = [10, 0], sizes = [1, 210], strides = [1, 1]} : vector<32x210xf32> to vector<1x210xf32>
    %c0_51 = arith.constant 0 : index
    %c2100 = arith.constant 2100 : index
    %141 = vector.load %arg11[%c0_51, %c2100] : memref<1x6720xf32, #tpu.memory_space<vmem>>, vector<1x210xf32>
    tpu.vector_store %arg11[%c0_51, %c2100], %140 {strides = array<i32>} : memref<1x6720xf32, #tpu.memory_space<vmem>>, vector<1x210xf32>,
    %142 = vector.extract_strided_slice %119 {offsets = [11, 0], sizes = [1, 210], strides = [1, 1]} : vector<32x210xf32> to vector<1x210xf32>
    %c0_52 = arith.constant 0 : index
    %c2310 = arith.constant 2310 : index
    %143 = vector.load %arg11[%c0_52, %c2310] : memref<1x6720xf32, #tpu.memory_space<vmem>>, vector<1x210xf32>
    tpu.vector_store %arg11[%c0_52, %c2310], %142 {strides = array<i32>} : memref<1x6720xf32, #tpu.memory_space<vmem>>, vector<1x210xf32>,
    %144 = vector.extract_strided_slice %119 {offsets = [12, 0], sizes = [1, 210], strides = [1, 1]} : vector<32x210xf32> to vector<1x210xf32>
    %c0_53 = arith.constant 0 : index
    %c2520 = arith.constant 2520 : index
    %145 = vector.load %arg11[%c0_53, %c2520] : memref<1x6720xf32, #tpu.memory_space<vmem>>, vector<1x210xf32>
    tpu.vector_store %arg11[%c0_53, %c2520], %144 {strides = array<i32>} : memref<1x6720xf32, #tpu.memory_space<vmem>>, vector<1x210xf32>,
    %146 = vector.extract_strided_slice %119 {offsets = [13, 0], sizes = [1, 210], strides = [1, 1]} : vector<32x210xf32> to vector<1x210xf32>
    %c0_54 = arith.constant 0 : index
    %c2730 = arith.constant 2730 : index
    %147 = vector.load %arg11[%c0_54, %c2730] : memref<1x6720xf32, #tpu.memory_space<vmem>>, vector<1x210xf32>
    tpu.vector_store %arg11[%c0_54, %c2730], %146 {strides = array<i32>} : memref<1x6720xf32, #tpu.memory_space<vmem>>, vector<1x210xf32>,
    %148 = vector.extract_strided_slice %119 {offsets = [14, 0], sizes = [1, 210], strides = [1, 1]} : vector<32x210xf32> to vector<1x210xf32>
    %c0_55 = arith.constant 0 : index
    %c2940 = arith.constant 2940 : index
    %149 = vector.load %arg11[%c0_55, %c2940] : memref<1x6720xf32, #tpu.memory_space<vmem>>, vector<1x210xf32>
    tpu.vector_store %arg11[%c0_55, %c2940], %148 {strides = array<i32>} : memref<1x6720xf32, #tpu.memory_space<vmem>>, vector<1x210xf32>,
    %150 = vector.extract_strided_slice %119 {offsets = [15, 0], sizes = [1, 210], strides = [1, 1]} : vector<32x210xf32> to vector<1x210xf32>
    %c0_56 = arith.constant 0 : index
    %c3150 = arith.constant 3150 : index
    %151 = vector.load %arg11[%c0_56, %c3150] : memref<1x6720xf32, #tpu.memory_space<vmem>>, vector<1x210xf32>
    tpu.vector_store %arg11[%c0_56, %c3150], %150 {strides = array<i32>} : memref<1x6720xf32, #tpu.memory_space<vmem>>, vector<1x210xf32>,
    %152 = vector.extract_strided_slice %119 {offsets = [16, 0], sizes = [1, 210], strides = [1, 1]} : vector<32x210xf32> to vector<1x210xf32>
    %c0_57 = arith.constant 0 : index
    %c3360 = arith.constant 3360 : index
    %153 = vector.load %arg11[%c0_57, %c3360] : memref<1x6720xf32, #tpu.memory_space<vmem>>, vector<1x210xf32>
    tpu.vector_store %arg11[%c0_57, %c3360], %152 {strides = array<i32>} : memref<1x6720xf32, #tpu.memory_space<vmem>>, vector<1x210xf32>,
    %154 = vector.extract_strided_slice %119 {offsets = [17, 0], sizes = [1, 210], strides = [1, 1]} : vector<32x210xf32> to vector<1x210xf32>
    %c0_58 = arith.constant 0 : index
    %c3570 = arith.constant 3570 : index
    %155 = vector.load %arg11[%c0_58, %c3570] : memref<1x6720xf32, #tpu.memory_space<vmem>>, vector<1x210xf32>
    tpu.vector_store %arg11[%c0_58, %c3570], %154 {strides = array<i32>} : memref<1x6720xf32, #tpu.memory_space<vmem>>, vector<1x210xf32>,
    %156 = vector.extract_strided_slice %119 {offsets = [18, 0], sizes = [1, 210], strides = [1, 1]} : vector<32x210xf32> to vector<1x210xf32>
    %c0_59 = arith.constant 0 : index
    %c3780 = arith.constant 3780 : index
    %157 = vector.load %arg11[%c0_59, %c3780] : memref<1x6720xf32, #tpu.memory_space<vmem>>, vector<1x210xf32>
    tpu.vector_store %arg11[%c0_59, %c3780], %156 {strides = array<i32>} : memref<1x6720xf32, #tpu.memory_space<vmem>>, vector<1x210xf32>,
    %158 = vector.extract_strided_slice %119 {offsets = [19, 0], sizes = [1, 210], strides = [1, 1]} : vector<32x210xf32> to vector<1x210xf32>
    %c0_60 = arith.constant 0 : index
    %c3990 = arith.constant 3990 : index
    %159 = vector.load %arg11[%c0_60, %c3990] : memref<1x6720xf32, #tpu.memory_space<vmem>>, vector<1x210xf32>
    tpu.vector_store %arg11[%c0_60, %c3990], %158 {strides = array<i32>} : memref<1x6720xf32, #tpu.memory_space<vmem>>, vector<1x210xf32>,
    %160 = vector.extract_strided_slice %119 {offsets = [20, 0], sizes = [1, 210], strides = [1, 1]} : vector<32x210xf32> to vector<1x210xf32>
    %c0_61 = arith.constant 0 : index
    %c4200 = arith.constant 4200 : index
    %161 = vector.load %arg11[%c0_61, %c4200] : memref<1x6720xf32, #tpu.memory_space<vmem>>, vector<1x210xf32>
    tpu.vector_store %arg11[%c0_61, %c4200], %160 {strides = array<i32>} : memref<1x6720xf32, #tpu.memory_space<vmem>>, vector<1x210xf32>,
    %162 = vector.extract_strided_slice %119 {offsets = [21, 0], sizes = [1, 210], strides = [1, 1]} : vector<32x210xf32> to vector<1x210xf32>
    %c0_62 = arith.constant 0 : index
    %c4410 = arith.constant 4410 : index
    %163 = vector.load %arg11[%c0_62, %c4410] : memref<1x6720xf32, #tpu.memory_space<vmem>>, vector<1x210xf32>
    tpu.vector_store %arg11[%c0_62, %c4410], %162 {strides = array<i32>} : memref<1x6720xf32, #tpu.memory_space<vmem>>, vector<1x210xf32>,
    %164 = vector.extract_strided_slice %119 {offsets = [22, 0], sizes = [1, 210], strides = [1, 1]} : vector<32x210xf32> to vector<1x210xf32>
    %c0_63 = arith.constant 0 : index
    %c4620 = arith.constant 4620 : index
    %165 = vector.load %arg11[%c0_63, %c4620] : memref<1x6720xf32, #tpu.memory_space<vmem>>, vector<1x210xf32>
    tpu.vector_store %arg11[%c0_63, %c4620], %164 {strides = array<i32>} : memref<1x6720xf32, #tpu.memory_space<vmem>>, vector<1x210xf32>,
    %166 = vector.extract_strided_slice %119 {offsets = [23, 0], sizes = [1, 210], strides = [1, 1]} : vector<32x210xf32> to vector<1x210xf32>
    %c0_64 = arith.constant 0 : index
    %c4830 = arith.constant 4830 : index
    %167 = vector.load %arg11[%c0_64, %c4830] : memref<1x6720xf32, #tpu.memory_space<vmem>>, vector<1x210xf32>
    tpu.vector_store %arg11[%c0_64, %c4830], %166 {strides = array<i32>} : memref<1x6720xf32, #tpu.memory_space<vmem>>, vector<1x210xf32>,
    %168 = vector.extract_strided_slice %119 {offsets = [24, 0], sizes = [1, 210], strides = [1, 1]} : vector<32x210xf32> to vector<1x210xf32>
    %c0_65 = arith.constant 0 : index
    %c5040 = arith.constant 5040 : index
    %169 = vector.load %arg11[%c0_65, %c5040] : memref<1x6720xf32, #tpu.memory_space<vmem>>, vector<1x210xf32>
    tpu.vector_store %arg11[%c0_65, %c5040], %168 {strides = array<i32>} : memref<1x6720xf32, #tpu.memory_space<vmem>>, vector<1x210xf32>,
    %170 = vector.extract_strided_slice %119 {offsets = [25, 0], sizes = [1, 210], strides = [1, 1]} : vector<32x210xf32> to vector<1x210xf32>
    %c0_66 = arith.constant 0 : index
    %c5250 = arith.constant 5250 : index
    %171 = vector.load %arg11[%c0_66, %c5250] : memref<1x6720xf32, #tpu.memory_space<vmem>>, vector<1x210xf32>
    tpu.vector_store %arg11[%c0_66, %c5250], %170 {strides = array<i32>} : memref<1x6720xf32, #tpu.memory_space<vmem>>, vector<1x210xf32>,
    %172 = vector.extract_strided_slice %119 {offsets = [26, 0], sizes = [1, 210], strides = [1, 1]} : vector<32x210xf32> to vector<1x210xf32>
    %c0_67 = arith.constant 0 : index
    %c5460 = arith.constant 5460 : index
    %173 = vector.load %arg11[%c0_67, %c5460] : memref<1x6720xf32, #tpu.memory_space<vmem>>, vector<1x210xf32>
    tpu.vector_store %arg11[%c0_67, %c5460], %172 {strides = array<i32>} : memref<1x6720xf32, #tpu.memory_space<vmem>>, vector<1x210xf32>,
    %174 = vector.extract_strided_slice %119 {offsets = [27, 0], sizes = [1, 210], strides = [1, 1]} : vector<32x210xf32> to vector<1x210xf32>
    %c0_68 = arith.constant 0 : index
    %c5670 = arith.constant 5670 : index
    %175 = vector.load %arg11[%c0_68, %c5670] : memref<1x6720xf32, #tpu.memory_space<vmem>>, vector<1x210xf32>
    tpu.vector_store %arg11[%c0_68, %c5670], %174 {strides = array<i32>} : memref<1x6720xf32, #tpu.memory_space<vmem>>, vector<1x210xf32>,
    %176 = vector.extract_strided_slice %119 {offsets = [28, 0], sizes = [1, 210], strides = [1, 1]} : vector<32x210xf32> to vector<1x210xf32>
    %c0_69 = arith.constant 0 : index
    %c5880 = arith.constant 5880 : index
    %177 = vector.load %arg11[%c0_69, %c5880] : memref<1x6720xf32, #tpu.memory_space<vmem>>, vector<1x210xf32>
    tpu.vector_store %arg11[%c0_69, %c5880], %176 {strides = array<i32>} : memref<1x6720xf32, #tpu.memory_space<vmem>>, vector<1x210xf32>,
    %178 = vector.extract_strided_slice %119 {offsets = [29, 0], sizes = [1, 210], strides = [1, 1]} : vector<32x210xf32> to vector<1x210xf32>
    %c0_70 = arith.constant 0 : index
    %c6090 = arith.constant 6090 : index
    %179 = vector.load %arg11[%c0_70, %c6090] : memref<1x6720xf32, #tpu.memory_space<vmem>>, vector<1x210xf32>
    tpu.vector_store %arg11[%c0_70, %c6090], %178 {strides = array<i32>} : memref<1x6720xf32, #tpu.memory_space<vmem>>, vector<1x210xf32>,
    %180 = vector.extract_strided_slice %119 {offsets = [30, 0], sizes = [1, 210], strides = [1, 1]} : vector<32x210xf32> to vector<1x210xf32>
    %c0_71 = arith.constant 0 : index
    %c6300 = arith.constant 6300 : index
    %181 = vector.load %arg11[%c0_71, %c6300] : memref<1x6720xf32, #tpu.memory_space<vmem>>, vector<1x210xf32>
    tpu.vector_store %arg11[%c0_71, %c6300], %180 {strides = array<i32>} : memref<1x6720xf32, #tpu.memory_space<vmem>>, vector<1x210xf32>,
    %182 = vector.extract_strided_slice %119 {offsets = [31, 0], sizes = [1, 210], strides = [1, 1]} : vector<32x210xf32> to vector<1x210xf32>
    %c0_72 = arith.constant 0 : index
    %c6510 = arith.constant 6510 : index
    %183 = vector.load %arg11[%c0_72, %c6510] : memref<1x6720xf32, #tpu.memory_space<vmem>>, vector<1x210xf32>
    tpu.vector_store %arg11[%c0_72, %c6510], %182 {strides = array<i32>} : memref<1x6720xf32, #tpu.memory_space<vmem>>, vector<1x210xf32>,
    %c0_73 = arith.constant 0 : index
    %c0_74 = arith.constant 0 : index
    %184 = vector.load %arg11[%c0_73, %c0_74] : memref<1x6720xf32, #tpu.memory_space<vmem>>, vector<1x6720xf32>
    %c0_75 = arith.constant 0 : index
    %c0_76 = arith.constant 0 : index
    %185 = vector.load %arg5[%c0_75, %c0_76] : memref<6720x32xf32, #tpu.memory_space<vmem>>, vector<6720x32xf32>
    %cst_77 = arith.constant dense<0.000000e+00> : vector<1x32xf32>
    %186 = tpu.matmul %184, %185, %cst_77 {dimension_numbers = #tpu.dot_dimension_numbers<[1], [0], [0], [1], [0, 0, 1, 1], [], []>} : vector<1x6720xf32>, vector<6720x32xf32>, vector<1x32xf32> -> vector<1x32xf32>
    %c0_78 = arith.constant 0 : index
    %c0_79 = arith.constant 0 : index
    %187 = vector.load %arg6[%c0_78, %c0_79] : memref<1x32xf32, #tpu.memory_space<vmem>>, vector<1x32xf32>
    %188 = arith.addf %186, %187 : vector<1x32xf32>
    %cst_80 = arith.constant 0.000000e+00 : f32
    %189 = vector.broadcast %cst_80 : f32 to vector<1x32xf32>
    %190 = arith.maximumf %188, %189 : vector<1x32xf32>
    %c0_81 = arith.constant 0 : index
    %c0_82 = arith.constant 0 : index
    %191 = vector.load %arg7[%c0_81, %c0_82] : memref<32x10xf32, #tpu.memory_space<vmem>>, vector<32x10xf32>
    %cst_83 = arith.constant dense<0.000000e+00> : vector<1x10xf32>
    %192 = tpu.matmul %190, %191, %cst_83 {dimension_numbers = #tpu.dot_dimension_numbers<[1], [0], [0], [1], [0, 0, 1, 1], [], []>} : vector<1x32xf32>, vector<32x10xf32>, vector<1x10xf32> -> vector<1x10xf32>
    %c0_84 = arith.constant 0 : index
    %c0_85 = arith.constant 0 : index
    %193 = vector.load %arg8[%c0_84, %c0_85] : memref<1x10xf32, #tpu.memory_space<vmem>>, vector<1x10xf32>
    %194 = arith.addf %192, %193 : vector<1x10xf32>
    %c0_86 = arith.constant 0 : index
    %c0_87 = arith.constant 0 : index
    %195 = vector.load %arg9[%c0_86, %c0_87] : memref<1x10xf32, #tpu.memory_space<vmem>>, vector<1x10xf32>
    tpu.vector_store %arg9[%c0_86, %c0_87], %194 {strides = array<i32>} : memref<1x10xf32, #tpu.memory_space<vmem>>, vector<1x10xf32>,
    return
  }
}

</mosaic_0001>

<llo_original>
// kernel: convnet_forward.1
$region0: #{convnet_forward.1}
  #allocation0 [shape = 'u32[]', space=smem, size = 0x4, offset = 0x4, fixed_abs, tag = 'smem constant byte address 0x4 - core index']
  #allocation1 [shape = 'u32[72,128]{1,0:T(1,128)}', space=vmem, size = 0x9000, scoped, tag = 'internal scratch']
  #allocation2 [shape = 'f32[400,210]{1,0:T(8,128)}', space=vmem, size = 0x64000, scoped, tag = 'scratch operand']
  #allocation3 [shape = 'f32[1,6720]{1,0:T(1,128)}', space=vmem, size = 0x6a00, scoped, tag = 'scratch operand']
  %s0 = inlined_call_operand.vmem [shape: f32[1,360], index: 0, kind: input, shape index: {}]
  %s1 = inlined_call_operand.vmem [shape: f32[16,9], index: 1, kind: input, shape index: {}]
  %s2 = inlined_call_operand.vmem [shape: f32[16,1], index: 2, kind: input, shape index: {}]
  %s3 = inlined_call_operand.vmem [shape: f32[32,400], index: 3, kind: input, shape index: {}]
  %s4 = inlined_call_operand.vmem [shape: f32[32,1], index: 4, kind: input, shape index: {}]
  %s5 = inlined_call_operand.vmem [shape: f32[6720,32], index: 5, kind: input, shape index: {}]
  %s6 = inlined_call_operand.vmem [shape: f32[1,32], index: 6, kind: input, shape index: {}]
  %s7 = inlined_call_operand.vmem [shape: f32[32,10], index: 7, kind: input, shape index: {}]
  %s8 = inlined_call_operand.vmem [shape: f32[1,10], index: 8, kind: input, shape index: {}]
  %s9 = inlined_call_operand.hbm [shape: f32[1,10], index: 9, kind: output, shape index: {}]
  %s10 = sld [smem:[#allocation0]]
  $region46: #{convnet_forward.1} parent=0
    _
  %s12 = ssub.s32 1, %s10
  %s13 = scalar_select 0, %s12, %s10
  $region1: #{convnet_forward.1} parent=0
    #allocation4 [shape = 'u8[512]{0}', space=vmem, size = 0x400, scoped, tag = 'output window, operand 0, single buffered']
    #allocation5 [shape = 's32[1]{0}', space=sflag, size = 0x4, scoped, tag = 'scoped memory for convnet_forward.1']
    %14 = vsyncpa [#allocation5], 0
    // Predicated region
    $region2: #{convnet_forward.1} parent=1 // pred_check
      _
    $region3: #{convnet_forward.1} parent=1 // pred_check_branch
      %16 = sbr.rel (0) target = $region5
    $region4: #{convnet_forward.1} parent=1 // pred_region
      _
    $region5: #{convnet_forward.1} parent=1 // pred_fallthru
      _
    // Predicated region
    $region6: #{convnet_forward.1} parent=1 // pred_check
      _
    $region7: #{convnet_forward.1} parent=1 // pred_check_branch
      %18 = sbr.rel (0) target = $region9
    $region8: #{convnet_forward.1} parent=1 // pred_region
      _
    $region9: #{convnet_forward.1} parent=1 // pred_fallthru
      _
    // Predicated region
    $region10: #{convnet_forward.1} parent=1 // pred_check
      _
    $region11: #{convnet_forward.1} parent=1 // pred_check_branch
      %20 = sbr.rel (0) target = $region13
    $region12: #{convnet_forward.1} parent=1 // pred_region
      _
    $region13: #{convnet_forward.1} parent=1 // pred_fallthru
      _
    // Predicated region
    $region14: #{convnet_forward.1} parent=1 // pred_check
      _
    $region15: #{convnet_forward.1} parent=1 // pred_check_branch
      %22 = sbr.rel (0) target = $region17
    $region16: #{convnet_forward.1} parent=1 // pred_region
      _
    $region17: #{convnet_forward.1} parent=1 // pred_fallthru
      _
    // Predicated region
    $region18: #{convnet_forward.1} parent=1 // pred_check
      _
    $region19: #{convnet_forward.1} parent=1 // pred_check_branch
      %24 = sbr.rel (0) target = $region21
    $region20: #{convnet_forward.1} parent=1 // pred_region
      _
    $region21: #{convnet_forward.1} parent=1 // pred_fallthru
      _
    // Predicated region
    $region22: #{convnet_forward.1} parent=1 // pred_check
      _
    $region23: #{convnet_forward.1} parent=1 // pred_check_branch
      %26 = sbr.rel (0) target = $region25
    $region24: #{convnet_forward.1} parent=1 // pred_region
      _
    $region25: #{convnet_forward.1} parent=1 // pred_fallthru
      _
    // Predicated region
    $region26: #{convnet_forward.1} parent=1 // pred_check
      _
    $region27: #{convnet_forward.1} parent=1 // pred_check_branch
      %28 = sbr.rel (0) target = $region29
    $region28: #{convnet_forward.1} parent=1 // pred_region
      _
    $region29: #{convnet_forward.1} parent=1 // pred_fallthru
      _
    // Predicated region
    $region30: #{convnet_forward.1} parent=1 // pred_check
      _
    $region31: #{convnet_forward.1} parent=1 // pred_check_branch
      %30 = sbr.rel (0) target = $region33
    $region32: #{convnet_forward.1} parent=1 // pred_region
      _
    $region33: #{convnet_forward.1} parent=1 // pred_fallthru
      _
    // Predicated region
    $region34: #{convnet_forward.1} parent=1 // pred_check
      _
    $region35: #{convnet_forward.1} parent=1 // pred_check_branch
      %32 = sbr.rel (0) target = $region37
    $region36: #{convnet_forward.1} parent=1 // pred_region
      _
    $region37: #{convnet_forward.1} parent=1 // pred_fallthru
      _
    %v33 = vld [vmem:[%s0] sm:$0x7]
    %v34 = vld [vmem:[%s1] sm:$0xff]
    %v35 = vld [vmem:[%s1 + $0x8] sm:$0xff]
    %37 = vset.pattern.permute.xlu0 0
    %38 = vperm.xlu0 %37, %v34
    %v39 = vpop.permute.xlu0 %38
    %42 = vset.pattern.permute.xlu0 0
    %43 = vperm.xlu0 %42, %v35
    %v44 = vpop.permute.xlu0 %43
    %v47 = vperm.slane %v33, 0
    %v48 = vperm.slane %v33, 1
    %v49 = vperm.slane %v33, 2
    %v53 = vmul.f32 %v39, %v47
    %v54 = vmul.f32 %v39, %v48
    %v55 = vmul.f32 %v39, %v49
    %v56 = vmul.f32 %v44, %v47
    %v57 = vmul.f32 %v44, %v48
    %v58 = vmul.f32 %v44, %v49
    %v59 = vadd.f32 %v53, 0.0
    %v60 = vadd.f32 %v54, 0.0
    %v61 = vadd.f32 %v55, 0.0
    %v62 = vadd.f32 %v56, 0.0
    %v63 = vadd.f32 %v57, 0.0
    %v64 = vadd.f32 %v58, 0.0
    %65 = vset.pattern.permute.xlu0 1
    %66 = vperm.xlu0 %65, %v34
    %v67 = vpop.permute.xlu0 %66
    %69 = vset.pattern.permute.xlu0 1
    %70 = vperm.xlu0 %69, %v35
    %v71 = vpop.permute.xlu0 %70
    %v73 = vmul.f32 %v67, %v47
    %v74 = vmul.f32 %v67, %v48
    %v75 = vmul.f32 %v67, %v49
    %v76 = vmul.f32 %v71, %v47
    %v77 = vmul.f32 %v71, %v48
    %v78 = vmul.f32 %v71, %v49
    %85 = vrot.lane.b32.xlu0 %v73, 127
    %v86 = vpop.permute.xlu0 %85
    %87 = vrot.lane.b32.xlu0 %v74, 127
    %v88 = vpop.permute.xlu0 %87
    %89 = vrot.lane.b32.xlu0 %v75, 127
    %v90 = vpop.permute.xlu0 %89
    %91 = vrot.lane.b32.xlu0 %v76, 127
    %v92 = vpop.permute.xlu0 %91
    %93 = vrot.lane.b32.xlu0 %v77, 127
    %v94 = vpop.permute.xlu0 %93
    %95 = vrot.lane.b32.xlu0 %v78, 127
    %v96 = vpop.permute.xlu0 %95
    %vm97 = vcmask 1039360
    %v98 = vsel %vm97, %v86, %v88
    %v99 = vsel %vm97, %v88, %v90
    %v100 = vsel %vm97, %v92, %v94
    %v101 = vsel %vm97, %v94, %v96
    %v108 = vadd.f32 %v59, %v98
    %v109 = vadd.f32 %v60, %v99
    %v110 = vadd.f32 %v61, %v90
    %v111 = vadd.f32 %v62, %v100
    %v112 = vadd.f32 %v63, %v101
    %v113 = vadd.f32 %v64, %v96
    %114 = vset.pattern.permute.xlu0 2
    %115 = vperm.xlu0 %114, %v34
    %v116 = vpop.permute.xlu0 %115
    %118 = vset.pattern.permute.xlu0 2
    %119 = vperm.xlu0 %118, %v35
    %v120 = vpop.permute.xlu0 %119
    %v122 = vmul.f32 %v116, %v47
    %v123 = vmul.f32 %v116, %v48
    %v124 = vmul.f32 %v116, %v49
    %v125 = vmul.f32 %v120, %v47
    %v126 = vmul.f32 %v120, %v48
    %v127 = vmul.f32 %v120, %v49
    %134 = vrot.lane.b32.xlu0 %v122, 126
    %v135 = vpop.permute.xlu0 %134
    %136 = vrot.lane.b32.xlu0 %v123, 126
    %v137 = vpop.permute.xlu0 %136
    %138 = vrot.lane.b32.xlu0 %v124, 126
    %v139 = vpop.permute.xlu0 %138
    %140 = vrot.lane.b32.xlu0 %v125, 126
    %v141 = vpop.permute.xlu0 %140
    %142 = vrot.lane.b32.xlu0 %v126, 126
    %v143 = vpop.permute.xlu0 %142
    %144 = vrot.lane.b32.xlu0 %v127, 126
    %v145 = vpop.permute.xlu0 %144
    %vm146 = vcmask 1031168
    %v147 = vsel %vm146, %v135, %v137
    %v148 = vsel %vm146, %v137, %v139
    %v149 = vsel %vm146, %v141, %v143
    %v150 = vsel %vm146, %v143, %v145
    %v157 = vadd.f32 %v108, %v147
    %v158 = vadd.f32 %v109, %v148
    %v159 = vadd.f32 %v110, %v139
    %v160 = vadd.f32 %v111, %v149
    %v161 = vadd.f32 %v112, %v150
    %v162 = vadd.f32 %v113, %v145
    %163 = vset.pattern.permute.xlu0 3
    %164 = vperm.xlu0 %163, %v34
    %v165 = vpop.permute.xlu0 %164
    %167 = vset.pattern.permute.xlu0 3
    %168 = vperm.xlu0 %167, %v35
    %v169 = vpop.permute.xlu0 %168
    %v171 = vmul.f32 %v165, %v47
    %v172 = vmul.f32 %v165, %v48
    %v173 = vmul.f32 %v165, %v49
    %v174 = vmul.f32 %v169, %v47
    %v175 = vmul.f32 %v169, %v48
    %v176 = vmul.f32 %v169, %v49
    %183 = vrot.lane.b32.xlu0 %v171, 104
    %v184 = vpop.permute.xlu0 %183
    %185 = vrot.lane.b32.xlu0 %v172, 104
    %v186 = vpop.permute.xlu0 %185
    %187 = vrot.lane.b32.xlu0 %v173, 104
    %v188 = vpop.permute.xlu0 %187
    %189 = vrot.lane.b32.xlu0 %v174, 104
    %v190 = vpop.permute.xlu0 %189
    %191 = vrot.lane.b32.xlu0 %v175, 104
    %v192 = vpop.permute.xlu0 %191
    %193 = vrot.lane.b32.xlu0 %v176, 104
    %v194 = vpop.permute.xlu0 %193
    %vm195 = vcmask 850944
    %v196 = vsel %vm195, %v184, %v186
    %v197 = vsel %vm195, %v186, %v188
    %v198 = vsel %vm195, %v190, %v192
    %v199 = vsel %vm195, %v192, %v194
    %v206 = vadd.f32 %v157, %v196
    %v207 = vadd.f32 %v158, %v197
    %v208 = vadd.f32 %v159, %v188
    %v209 = vadd.f32 %v160, %v198
    %v210 = vadd.f32 %v161, %v199
    %v211 = vadd.f32 %v162, %v194
    %212 = vset.pattern.permute.xlu0 4
    %213 = vperm.xlu0 %212, %v34
    %v214 = vpop.permute.xlu0 %213
    %216 = vset.pattern.permute.xlu0 4
    %217 = vperm.xlu0 %216, %v35
    %v218 = vpop.permute.xlu0 %217
    %v220 = vmul.f32 %v214, %v47
    %v221 = vmul.f32 %v214, %v48
    %v222 = vmul.f32 %v214, %v49
    %v223 = vmul.f32 %v218, %v47
    %v224 = vmul.f32 %v218, %v48
    %v225 = vmul.f32 %v218, %v49
    %232 = vrot.lane.b32.xlu0 %v220, 103
    %v233 = vpop.permute.xlu0 %232
    %234 = vrot.lane.b32.xlu0 %v221, 103
    %v235 = vpop.permute.xlu0 %234
    %236 = vrot.lane.b32.xlu0 %v222, 103
    %v237 = vpop.permute.xlu0 %236
    %238 = vrot.lane.b32.xlu0 %v223, 103
    %v239 = vpop.permute.xlu0 %238
    %240 = vrot.lane.b32.xlu0 %v224, 103
    %v241 = vpop.permute.xlu0 %240
    %242 = vrot.lane.b32.xlu0 %v225, 103
    %v243 = vpop.permute.xlu0 %242
    %vm244 = vcmask 842752
    %v245 = vsel %vm244, %v233, %v235
    %v246 = vsel %vm244, %v235, %v237
    %v247 = vsel %vm244, %v239, %v241
    %v248 = vsel %vm244, %v241, %v243
    %v255 = vadd.f32 %v206, %v245
    %v256 = vadd.f32 %v207, %v246
    %v257 = vadd.f32 %v208, %v237
    %v258 = vadd.f32 %v209, %v247
    %v259 = vadd.f32 %v210, %v248
    %v260 = vadd.f32 %v211, %v243
    %261 = vset.pattern.permute.xlu0 5
    %262 = vperm.xlu0 %261, %v34
    %v263 = vpop.permute.xlu0 %262
    %265 = vset.pattern.permute.xlu0 5
    %266 = vperm.xlu0 %265, %v35
    %v267 = vpop.permute.xlu0 %266
    %v269 = vmul.f32 %v263, %v47
    %v270 = vmul.f32 %v263, %v48
    %v271 = vmul.f32 %v263, %v49
    %v272 = vmul.f32 %v267, %v47
    %v273 = vmul.f32 %v267, %v48
    %v274 = vmul.f32 %v267, %v49
    %281 = vrot.lane.b32.xlu0 %v269, 102
    %v282 = vpop.permute.xlu0 %281
    %283 = vrot.lane.b32.xlu0 %v270, 102
    %v284 = vpop.permute.xlu0 %283
    %285 = vrot.lane.b32.xlu0 %v271, 102
    %v286 = vpop.permute.xlu0 %285
    %287 = vrot.lane.b32.xlu0 %v272, 102
    %v288 = vpop.permute.xlu0 %287
    %289 = vrot.lane.b32.xlu0 %v273, 102
    %v290 = vpop.permute.xlu0 %289
    %291 = vrot.lane.b32.xlu0 %v274, 102
    %v292 = vpop.permute.xlu0 %291
    %vm293 = vcmask 834560
    %v294 = vsel %vm293, %v282, %v284
    %v295 = vsel %vm293, %v284, %v286
    %v296 = vsel %vm293, %v288, %v290
    %v297 = vsel %vm293, %v290, %v292
    %v304 = vadd.f32 %v255, %v294
    %v305 = vadd.f32 %v256, %v295
    %v306 = vadd.f32 %v257, %v286
    %v307 = vadd.f32 %v258, %v296
    %v308 = vadd.f32 %v259, %v297
    %v309 = vadd.f32 %v260, %v292
    %310 = vset.pattern.permute.xlu0 6
    %311 = vperm.xlu0 %310, %v34
    %v312 = vpop.permute.xlu0 %311
    %314 = vset.pattern.permute.xlu0 6
    %315 = vperm.xlu0 %314, %v35
    %v316 = vpop.permute.xlu0 %315
    %v318 = vmul.f32 %v312, %v47
    %v319 = vmul.f32 %v312, %v48
    %v320 = vmul.f32 %v312, %v49
    %v321 = vmul.f32 %v316, %v47
    %v322 = vmul.f32 %v316, %v48
    %v323 = vmul.f32 %v316, %v49
    %330 = vrot.lane.b32.xlu0 %v318, 80
    %v331 = vpop.permute.xlu0 %330
    %332 = vrot.lane.b32.xlu0 %v319, 80
    %v333 = vpop.permute.xlu0 %332
    %334 = vrot.lane.b32.xlu0 %v320, 80
    %v335 = vpop.permute.xlu0 %334
    %336 = vrot.lane.b32.xlu0 %v321, 80
    %v337 = vpop.permute.xlu0 %336
    %338 = vrot.lane.b32.xlu0 %v322, 80
    %v339 = vpop.permute.xlu0 %338
    %340 = vrot.lane.b32.xlu0 %v323, 80
    %v341 = vpop.permute.xlu0 %340
    %vm342 = vcmask 654336
    %v343 = vsel %vm342, %v331, %v333
    %v344 = vsel %vm342, %v333, %v335
    %v345 = vsel %vm342, %v337, %v339
    %v346 = vsel %vm342, %v339, %v341
    %v353 = vadd.f32 %v304, %v343
    %v354 = vadd.f32 %v305, %v344
    %v355 = vadd.f32 %v306, %v335
    %v356 = vadd.f32 %v307, %v345
    %v357 = vadd.f32 %v308, %v346
    %v358 = vadd.f32 %v309, %v341
    %359 = vset.pattern.permute.xlu0 7
    %360 = vperm.xlu0 %359, %v34
    %v361 = vpop.permute.xlu0 %360
    %363 = vset.pattern.permute.xlu0 7
    %364 = vperm.xlu0 %363, %v35
    %v365 = vpop.permute.xlu0 %364
    %v367 = vmul.f32 %v361, %v47
    %v368 = vmul.f32 %v361, %v48
    %v369 = vmul.f32 %v361, %v49
    %v370 = vmul.f32 %v365, %v47
    %v371 = vmul.f32 %v365, %v48
    %v372 = vmul.f32 %v365, %v49
    %379 = vrot.lane.b32.xlu0 %v367, 79
    %v380 = vpop.permute.xlu0 %379
    %381 = vrot.lane.b32.xlu0 %v368, 79
    %v382 = vpop.permute.xlu0 %381
    %383 = vrot.lane.b32.xlu0 %v369, 79
    %v384 = vpop.permute.xlu0 %383
    %385 = vrot.lane.b32.xlu0 %v370, 79
    %v386 = vpop.permute.xlu0 %385
    %387 = vrot.lane.b32.xlu0 %v371, 79
    %v388 = vpop.permute.xlu0 %387
    %389 = vrot.lane.b32.xlu0 %v372, 79
    %v390 = vpop.permute.xlu0 %389
    %vm391 = vcmask 646144
    %v392 = vsel %vm391, %v380, %v382
    %v393 = vsel %vm391, %v382, %v384
    %v394 = vsel %vm391, %v386, %v388
    %v395 = vsel %vm391, %v388, %v390
    %v402 = vadd.f32 %v353, %v392
    %v403 = vadd.f32 %v354, %v393
    %v404 = vadd.f32 %v355, %v384
    %v405 = vadd.f32 %v356, %v394
    %v406 = vadd.f32 %v357, %v395
    %v407 = vadd.f32 %v358, %v390
    %408 = vset.pattern.permute.xlu0 8
    %409 = vperm.xlu0 %408, %v34
    %v410 = vpop.permute.xlu0 %409
    %412 = vset.pattern.permute.xlu0 8
    %413 = vperm.xlu0 %412, %v35
    %v414 = vpop.permute.xlu0 %413
    %v416 = vmul.f32 %v410, %v47
    %v417 = vmul.f32 %v410, %v48
    %v418 = vmul.f32 %v410, %v49
    %v419 = vmul.f32 %v414, %v47
    %v420 = vmul.f32 %v414, %v48
    %v421 = vmul.f32 %v414, %v49
    %428 = vrot.lane.b32.xlu0 %v416, 78
    %v429 = vpop.permute.xlu0 %428
    %430 = vrot.lane.b32.xlu0 %v417, 78
    %v431 = vpop.permute.xlu0 %430
    %432 = vrot.lane.b32.xlu0 %v418, 78
    %v433 = vpop.permute.xlu0 %432
    %434 = vrot.lane.b32.xlu0 %v419, 78
    %v435 = vpop.permute.xlu0 %434
    %436 = vrot.lane.b32.xlu0 %v420, 78
    %v437 = vpop.permute.xlu0 %436
    %438 = vrot.lane.b32.xlu0 %v421, 78
    %v439 = vpop.permute.xlu0 %438
    %vm440 = vcmask 637952
    %v441 = vsel %vm440, %v429, %v431
    %v442 = vsel %vm440, %v431, %v433
    %v443 = vsel %vm440, %v435, %v437
    %v444 = vsel %vm440, %v437, %v439
    %v451 = vadd.f32 %v402, %v441
    %v452 = vadd.f32 %v403, %v442
    %v453 = vadd.f32 %v404, %v433
    %v454 = vadd.f32 %v405, %v443
    %v455 = vadd.f32 %v406, %v444
    %v456 = vadd.f32 %v407, %v439
    %v457 = vld [vmem:[%s2] sm:$0xff]
    %v458 = vld [vmem:[%s2 + $0x8] sm:$0xff]
    %460 = vset.pattern.permute.xlu0 0
    %461 = vperm.xlu0 %460, %v457
    %v462 = vpop.permute.xlu0 %461
    %465 = vset.pattern.permute.xlu0 0
    %466 = vperm.xlu0 %465, %v458
    %v467 = vpop.permute.xlu0 %466
    %v469 = vadd.f32 %v451, %v462
    %v470 = vadd.f32 %v452, %v462
    %v471 = vadd.f32 %v453, %v462
    %v472 = vadd.f32 %v454, %v467
    %v473 = vadd.f32 %v455, %v467
    %v474 = vadd.f32 %v456, %v467
    %v475 = vmax.f32 %v469, 0.0
    %v476 = vmax.f32 %v470, 0.0
    %v477 = vmax.f32 %v471, 0.0
    %v478 = vmax.f32 %v472, 0.0
    %v479 = vmax.f32 %v473, 0.0
    %v480 = vmax.f32 %v474, 0.0
    %481 = vst [vmem:[#allocation2] sm:$0xff] %v475
    %vm482 = vcmask 670720
    %483 = vst.msk [vmem:[#allocation2 + $0x8] sm:$0xff] %vm482, %v476
    %484 = vst [vmem:[#allocation2 + $0x10] sm:$0xff] %v478
    %485 = vst.msk [vmem:[#allocation2 + $0x18] sm:$0xff] %vm482, %v479
    %490 = vrot.lane.b32.xlu0 %v475, 127
    %v491 = vpop.permute.xlu0 %490
    %492 = vrot.lane.b32.xlu0 %v476, 127
    %v493 = vpop.permute.xlu0 %492
    %494 = vrot.lane.b32.xlu0 %v478, 127
    %v495 = vpop.permute.xlu0 %494
    %496 = vrot.lane.b32.xlu0 %v479, 127
    %v497 = vpop.permute.xlu0 %496
    %v498 = vsel %vm97, %v491, %v493
    %v499 = vsel %vm97, %v495, %v497
    %504 = vst [vmem:[#allocation2 + $0x20] sm:$0xff] %v498
    %505 = vst.msk [vmem:[#allocation2 + $0x28] sm:$0xff] %vm482, %v493
    %506 = vst [vmem:[#allocation2 + $0x30] sm:$0xff] %v499
    %507 = vst.msk [vmem:[#allocation2 + $0x38] sm:$0xff] %vm482, %v497
    %508 = vrot.lane.b32.xlu0 %v475, 126
    %v509 = vpop.permute.xlu0 %508
    %510 = vrot.lane.b32.xlu0 %v476, 126
    %v511 = vpop.permute.xlu0 %510
    %512 = vrot.lane.b32.xlu0 %v478, 126
    %v513 = vpop.permute.xlu0 %512
    %514 = vrot.lane.b32.xlu0 %v479, 126
    %v515 = vpop.permute.xlu0 %514
    %v516 = vsel %vm146, %v509, %v511
    %v517 = vsel %vm146, %v513, %v515
    %522 = vst [vmem:[#allocation2 + $0x40] sm:$0xff] %v516
    %523 = vst.msk [vmem:[#allocation2 + $0x48] sm:$0xff] %vm482, %v511
    %524 = vst [vmem:[#allocation2 + $0x50] sm:$0xff] %v517
    %525 = vst.msk [vmem:[#allocation2 + $0x58] sm:$0xff] %vm482, %v515
    %526 = vrot.lane.b32.xlu0 %v475, 125
    %v527 = vpop.permute.xlu0 %526
    %528 = vrot.lane.b32.xlu0 %v476, 125
    %v529 = vpop.permute.xlu0 %528
    %530 = vrot.lane.b32.xlu0 %v478, 125
    %v531 = vpop.permute.xlu0 %530
    %532 = vrot.lane.b32.xlu0 %v479, 125
    %v533 = vpop.permute.xlu0 %532
    %vm534 = vcmask 1022976
    %v535 = vsel %vm534, %v527, %v529
    %v536 = vsel %vm534, %v531, %v533
    %541 = vst [vmem:[#allocation2 + $0x60] sm:$0xff] %v535
    %542 = vst.msk [vmem:[#allocation2 + $0x68] sm:$0xff] %vm482, %v529
    %543 = vst [vmem:[#allocation2 + $0x70] sm:$0xff] %v536
    %544 = vst.msk [vmem:[#allocation2 + $0x78] sm:$0xff] %vm482, %v533
    %545 = vrot.lane.b32.xlu0 %v475, 124
    %v546 = vpop.permute.xlu0 %545
    %547 = vrot.lane.b32.xlu0 %v476, 124
    %v548 = vpop.permute.xlu0 %547
    %549 = vrot.lane.b32.xlu0 %v478, 124
    %v550 = vpop.permute.xlu0 %549
    %551 = vrot.lane.b32.xlu0 %v479, 124
    %v552 = vpop.permute.xlu0 %551
    %vm553 = vcmask 1014784
    %v554 = vsel %vm553, %v546, %v548
    %v555 = vsel %vm553, %v550, %v552
    %560 = vst [vmem:[#allocation2 + $0x80] sm:$0xff] %v554
    %561 = vst.msk [vmem:[#allocation2 + $0x88] sm:$0xff] %vm482, %v548
    %562 = vst [vmem:[#allocation2 + $0x90] sm:$0xff] %v555
    %563 = vst.msk [vmem:[#allocation2 + $0x98] sm:$0xff] %vm482, %v552
    %564 = vrot.lane.b32.xlu0 %v475, 104
    %v565 = vpop.permute.xlu0 %564
    %566 = vrot.lane.b32.xlu0 %v476, 104
    %v567 = vpop.permute.xlu0 %566
    %568 = vrot.lane.b32.xlu0 %v478, 104
    %v569 = vpop.permute.xlu0 %568
    %570 = vrot.lane.b32.xlu0 %v479, 104
    %v571 = vpop.permute.xlu0 %570
    %v572 = vsel %vm195, %v565, %v567
    %v573 = vsel %vm195, %v569, %v571
    %578 = vst [vmem:[#allocation2 + $0xa0] sm:$0xff] %v572
    %579 = vst.msk [vmem:[#allocation2 + $0xa8] sm:$0xff] %vm482, %v567
    %580 = vst [vmem:[#allocation2 + $0xb0] sm:$0xff] %v573
    %581 = vst.msk [vmem:[#allocation2 + $0xb8] sm:$0xff] %vm482, %v571
    %582 = vrot.lane.b32.xlu0 %v475, 103
    %v583 = vpop.permute.xlu0 %582
    %584 = vrot.lane.b32.xlu0 %v476, 103
    %v585 = vpop.permute.xlu0 %584
    %586 = vrot.lane.b32.xlu0 %v478, 103
    %v587 = vpop.permute.xlu0 %586
    %588 = vrot.lane.b32.xlu0 %v479, 103
    %v589 = vpop.permute.xlu0 %588
    %v590 = vsel %vm244, %v583, %v585
    %v591 = vsel %vm244, %v587, %v589
    %596 = vst [vmem:[#allocation2 + $0xc0] sm:$0xff] %v590
    %597 = vst.msk [vmem:[#allocation2 + $0xc8] sm:$0xff] %vm482, %v585
    %598 = vst [vmem:[#allocation2 + $0xd0] sm:$0xff] %v591
    %599 = vst.msk [vmem:[#allocation2 + $0xd8] sm:$0xff] %vm482, %v589
    %600 = vrot.lane.b32.xlu0 %v475, 102
    %v601 = vpop.permute.xlu0 %600
    %602 = vrot.lane.b32.xlu0 %v476, 102
    %v603 = vpop.permute.xlu0 %602
    %604 = vrot.lane.b32.xlu0 %v478, 102
    %v605 = vpop.permute.xlu0 %604
    %606 = vrot.lane.b32.xlu0 %v479, 102
    %v607 = vpop.permute.xlu0 %606
    %v608 = vsel %vm293, %v601, %v603
    %v609 = vsel %vm293, %v605, %v607
    %614 = vst [vmem:[#allocation2 + $0xe0] sm:$0xff] %v608
    %615 = vst.msk [vmem:[#allocation2 + $0xe8] sm:$0xff] %vm482, %v603
    %616 = vst [vmem:[#allocation2 + $0xf0] sm:$0xff] %v609
    %617 = vst.msk [vmem:[#allocation2 + $0xf8] sm:$0xff] %vm482, %v607
    %618 = vrot.lane.b32.xlu0 %v475, 101
    %v619 = vpop.permute.xlu0 %618
    %620 = vrot.lane.b32.xlu0 %v476, 101
    %v621 = vpop.permute.xlu0 %620
    %622 = vrot.lane.b32.xlu0 %v478, 101
    %v623 = vpop.permute.xlu0 %622
    %624 = vrot.lane.b32.xlu0 %v479, 101
    %v625 = vpop.permute.xlu0 %624
    %vm626 = vcmask 826368
    %v627 = vsel %vm626, %v619, %v621
    %v628 = vsel %vm626, %v623, %v625
    %633 = vst [vmem:[#allocation2 + $0x100] sm:$0xff] %v627
    %634 = vst.msk [vmem:[#allocation2 + $0x108] sm:$0xff] %vm482, %v621
    %635 = vst [vmem:[#allocation2 + $0x110] sm:$0xff] %v628
    %636 = vst.msk [vmem:[#allocation2 + $0x118] sm:$0xff] %vm482, %v625
    %637 = vrot.lane.b32.xlu0 %v475, 100
    %v638 = vpop.permute.xlu0 %637
    %639 = vrot.lane.b32.xlu0 %v476, 100
    %v640 = vpop.permute.xlu0 %639
    %641 = vrot.lane.b32.xlu0 %v478, 100
    %v642 = vpop.permute.xlu0 %641
    %643 = vrot.lane.b32.xlu0 %v479, 100
    %v644 = vpop.permute.xlu0 %643
    %vm645 = vcmask 818176
    %v646 = vsel %vm645, %v638, %v640
    %v647 = vsel %vm645, %v642, %v644
    %652 = vst [vmem:[#allocation2 + $0x120] sm:$0xff] %v646
    %653 = vst.msk [vmem:[#allocation2 + $0x128] sm:$0xff] %vm482, %v640
    %654 = vst [vmem:[#allocation2 + $0x130] sm:$0xff] %v647
    %655 = vst.msk [vmem:[#allocation2 + $0x138] sm:$0xff] %vm482, %v644
    %658 = vrot.lane.b32.xlu0 %v475, 80
    %v659 = vpop.permute.xlu0 %658
    %660 = vrot.lane.b32.xlu0 %v476, 80
    %v661 = vpop.permute.xlu0 %660
    %662 = vrot.lane.b32.xlu0 %v477, 80
    %v663 = vpop.permute.xlu0 %662
    %664 = vrot.lane.b32.xlu0 %v478, 80
    %v665 = vpop.permute.xlu0 %664
    %666 = vrot.lane.b32.xlu0 %v479, 80
    %v667 = vpop.permute.xlu0 %666
    %668 = vrot.lane.b32.xlu0 %v480, 80
    %v669 = vpop.permute.xlu0 %668
    %v670 = vsel %vm342, %v659, %v661
    %v671 = vsel %vm342, %v661, %v663
    %v672 = vsel %vm342, %v665, %v667
    %v673 = vsel %vm342, %v667, %v669
    %678 = vst [vmem:[#allocation2 + $0x140] sm:$0xff] %v670
    %679 = vst.msk [vmem:[#allocation2 + $0x148] sm:$0xff] %vm482, %v671
    %680 = vst [vmem:[#allocation2 + $0x150] sm:$0xff] %v672
    %681 = vst.msk [vmem:[#allocation2 + $0x158] sm:$0xff] %vm482, %v673
    %682 = vrot.lane.b32.xlu0 %v475, 79
    %v683 = vpop.permute.xlu0 %682
    %684 = vrot.lane.b32.xlu0 %v476, 79
    %v685 = vpop.permute.xlu0 %684
    %686 = vrot.lane.b32.xlu0 %v477, 79
    %v687 = vpop.permute.xlu0 %686
    %688 = vrot.lane.b32.xlu0 %v478, 79
    %v689 = vpop.permute.xlu0 %688
    %690 = vrot.lane.b32.xlu0 %v479, 79
    %v691 = vpop.permute.xlu0 %690
    %692 = vrot.lane.b32.xlu0 %v480, 79
    %v693 = vpop.permute.xlu0 %692
    %v694 = vsel %vm391, %v683, %v685
    %v695 = vsel %vm391, %v685, %v687
    %v696 = vsel %vm391, %v689, %v691
    %v697 = vsel %vm391, %v691, %v693
    %702 = vst [vmem:[#allocation2 + $0x160] sm:$0xff] %v694
    %703 = vst.msk [vmem:[#allocation2 + $0x168] sm:$0xff] %vm482, %v695
    %704 = vst [vmem:[#allocation2 + $0x170] sm:$0xff] %v696
    %705 = vst.msk [vmem:[#allocation2 + $0x178] sm:$0xff] %vm482, %v697
    %706 = vrot.lane.b32.xlu0 %v475, 78
    %v707 = vpop.permute.xlu0 %706
    %708 = vrot.lane.b32.xlu0 %v476, 78
    %v709 = vpop.permute.xlu0 %708
    %710 = vrot.lane.b32.xlu0 %v477, 78
    %v711 = vpop.permute.xlu0 %710
    %712 = vrot.lane.b32.xlu0 %v478, 78
    %v713 = vpop.permute.xlu0 %712
    %714 = vrot.lane.b32.xlu0 %v479, 78
    %v715 = vpop.permute.xlu0 %714
    %716 = vrot.lane.b32.xlu0 %v480, 78
    %v717 = vpop.permute.xlu0 %716
    %v718 = vsel %vm440, %v707, %v709
    %v719 = vsel %vm440, %v709, %v711
    %v720 = vsel %vm440, %v713, %v715
    %v721 = vsel %vm440, %v715, %v717
    %726 = vst [vmem:[#allocation2 + $0x180] sm:$0xff] %v718
    %727 = vst.msk [vmem:[#allocation2 + $0x188] sm:$0xff] %vm482, %v719
    %728 = vst [vmem:[#allocation2 + $0x190] sm:$0xff] %v720
    %729 = vst.msk [vmem:[#allocation2 + $0x198] sm:$0xff] %vm482, %v721
    %730 = vrot.lane.b32.xlu0 %v475, 77
    %v731 = vpop.permute.xlu0 %730
    %732 = vrot.lane.b32.xlu0 %v476, 77
    %v733 = vpop.permute.xlu0 %732
    %734 = vrot.lane.b32.xlu0 %v477, 77
    %v735 = vpop.permute.xlu0 %734
    %736 = vrot.lane.b32.xlu0 %v478, 77
    %v737 = vpop.permute.xlu0 %736
    %738 = vrot.lane.b32.xlu0 %v479, 77
    %v739 = vpop.permute.xlu0 %738
    %740 = vrot.lane.b32.xlu0 %v480, 77
    %v741 = vpop.permute.xlu0 %740
    %vm742 = vcmask 629760
    %v743 = vsel %vm742, %v731, %v733
    %v744 = vsel %vm742, %v733, %v735
    %v745 = vsel %vm742, %v737, %v739
    %v746 = vsel %vm742, %v739, %v741
    %751 = vst [vmem:[#allocation2 + $0x1a0] sm:$0xff] %v743
    %752 = vst.msk [vmem:[#allocation2 + $0x1a8] sm:$0xff] %vm482, %v744
    %753 = vst [vmem:[#allocation2 + $0x1b0] sm:$0xff] %v745
    %754 = vst.msk [vmem:[#allocation2 + $0x1b8] sm:$0xff] %vm482, %v746
    %755 = vrot.lane.b32.xlu0 %v475, 76
    %v756 = vpop.permute.xlu0 %755
    %757 = vrot.lane.b32.xlu0 %v476, 76
    %v758 = vpop.permute.xlu0 %757
    %759 = vrot.lane.b32.xlu0 %v477, 76
    %v760 = vpop.permute.xlu0 %759
    %761 = vrot.lane.b32.xlu0 %v478, 76
    %v762 = vpop.permute.xlu0 %761
    %763 = vrot.lane.b32.xlu0 %v479, 76
    %v764 = vpop.permute.xlu0 %763
    %765 = vrot.lane.b32.xlu0 %v480, 76
    %v766 = vpop.permute.xlu0 %765
    %vm767 = vcmask 621568
    %v768 = vsel %vm767, %v756, %v758
    %v769 = vsel %vm767, %v758, %v760
    %v770 = vsel %vm767, %v762, %v764
    %v771 = vsel %vm767, %v764, %v766
    %776 = vst [vmem:[#allocation2 + $0x1c0] sm:$0xff] %v768
    %777 = vst.msk [vmem:[#allocation2 + $0x1c8] sm:$0xff] %vm482, %v769
    %778 = vst [vmem:[#allocation2 + $0x1d0] sm:$0xff] %v770
    %779 = vst.msk [vmem:[#allocation2 + $0x1d8] sm:$0xff] %vm482, %v771
    %780 = vrot.lane.b32.xlu0 %v475, 56
    %v781 = vpop.permute.xlu0 %780
    %782 = vrot.lane.b32.xlu0 %v476, 56
    %v783 = vpop.permute.xlu0 %782
    %784 = vrot.lane.b32.xlu0 %v477, 56
    %v785 = vpop.permute.xlu0 %784
    %786 = vrot.lane.b32.xlu0 %v478, 56
    %v787 = vpop.permute.xlu0 %786
    %788 = vrot.lane.b32.xlu0 %v479, 56
    %v789 = vpop.permute.xlu0 %788
    %790 = vrot.lane.b32.xlu0 %v480, 56
    %v791 = vpop.permute.xlu0 %790
    %vm792 = vcmask 457728
    %v793 = vsel %vm792, %v781, %v783
    %v794 = vsel %vm792, %v783, %v785
    %v795 = vsel %vm792, %v787, %v789
    %v796 = vsel %vm792, %v789, %v791
    %801 = vst [vmem:[#allocation2 + $0x1e0] sm:$0xff] %v793
    %802 = vst.msk [vmem:[#allocation2 + $0x1e8] sm:$0xff] %vm482, %v794
    %803 = vst [vmem:[#allocation2 + $0x1f0] sm:$0xff] %v795
    %804 = vst.msk [vmem:[#allocation2 + $0x1f8] sm:$0xff] %vm482, %v796
    %805 = vrot.lane.b32.xlu0 %v475, 55
    %v806 = vpop.permute.xlu0 %805
    %807 = vrot.lane.b32.xlu0 %v476, 55
    %v808 = vpop.permute.xlu0 %807
    %809 = vrot.lane.b32.xlu0 %v477, 55
    %v810 = vpop.permute.xlu0 %809
    %811 = vrot.lane.b32.xlu0 %v478, 55
    %v812 = vpop.permute.xlu0 %811
    %813 = vrot.lane.b32.xlu0 %v479, 55
    %v814 = vpop.permute.xlu0 %813
    %815 = vrot.lane.b32.xlu0 %v480, 55
    %v816 = vpop.permute.xlu0 %815
    %vm817 = vcmask 449536
    %v818 = vsel %vm817, %v806, %v808
    %v819 = vsel %vm817, %v808, %v810
    %v820 = vsel %vm817, %v812, %v814
    %v821 = vsel %vm817, %v814, %v816
    %826 = vst [vmem:[#allocation2 + $0x200] sm:$0xff] %v818
    %827 = vst.msk [vmem:[#allocation2 + $0x208] sm:$0xff] %vm482, %v819
    %828 = vst [vmem:[#allocation2 + $0x210] sm:$0xff] %v820
    %829 = vst.msk [vmem:[#allocation2 + $0x218] sm:$0xff] %vm482, %v821
    %830 = vrot.lane.b32.xlu0 %v475, 54
    %v831 = vpop.permute.xlu0 %830
    %832 = vrot.lane.b32.xlu0 %v476, 54
    %v833 = vpop.permute.xlu0 %832
    %834 = vrot.lane.b32.xlu0 %v477, 54
    %v835 = vpop.permute.xlu0 %834
    %836 = vrot.lane.b32.xlu0 %v478, 54
    %v837 = vpop.permute.xlu0 %836
    %838 = vrot.lane.b32.xlu0 %v479, 54
    %v839 = vpop.permute.xlu0 %838
    %840 = vrot.lane.b32.xlu0 %v480, 54
    %v841 = vpop.permute.xlu0 %840
    %vm842 = vcmask 441344
    %v843 = vsel %vm842, %v831, %v833
    %v844 = vsel %vm842, %v833, %v835
    %v845 = vsel %vm842, %v837, %v839
    %v846 = vsel %vm842, %v839, %v841
    %851 = vst [vmem:[#allocation2 + $0x220] sm:$0xff] %v843
    %852 = vst.msk [vmem:[#allocation2 + $0x228] sm:$0xff] %vm482, %v844
    %853 = vst [vmem:[#allocation2 + $0x230] sm:$0xff] %v845
    %854 = vst.msk [vmem:[#allocation2 + $0x238] sm:$0xff] %vm482, %v846
    %855 = vrot.lane.b32.xlu0 %v475, 53
    %v856 = vpop.permute.xlu0 %855
    %857 = vrot.lane.b32.xlu0 %v476, 53
    %v858 = vpop.permute.xlu0 %857
    %859 = vrot.lane.b32.xlu0 %v477, 53
    %v860 = vpop.permute.xlu0 %859
    %861 = vrot.lane.b32.xlu0 %v478, 53
    %v862 = vpop.permute.xlu0 %861
    %863 = vrot.lane.b32.xlu0 %v479, 53
    %v864 = vpop.permute.xlu0 %863
    %865 = vrot.lane.b32.xlu0 %v480, 53
    %v866 = vpop.permute.xlu0 %865
    %vm867 = vcmask 433152
    %v868 = vsel %vm867, %v856, %v858
    %v869 = vsel %vm867, %v858, %v860
    %v870 = vsel %vm867, %v862, %v864
    %v871 = vsel %vm867, %v864, %v866
    %876 = vst [vmem:[#allocation2 + $0x240] sm:$0xff] %v868
    %877 = vst.msk [vmem:[#allocation2 + $0x248] sm:$0xff] %vm482, %v869
    %878 = vst [vmem:[#allocation2 + $0x250] sm:$0xff] %v870
    %879 = vst.msk [vmem:[#allocation2 + $0x258] sm:$0xff] %vm482, %v871
    %880 = vrot.lane.b32.xlu0 %v475, 52
    %v881 = vpop.permute.xlu0 %880
    %882 = vrot.lane.b32.xlu0 %v476, 52
    %v883 = vpop.permute.xlu0 %882
    %884 = vrot.lane.b32.xlu0 %v477, 52
    %v885 = vpop.permute.xlu0 %884
    %886 = vrot.lane.b32.xlu0 %v478, 52
    %v887 = vpop.permute.xlu0 %886
    %888 = vrot.lane.b32.xlu0 %v479, 52
    %v889 = vpop.permute.xlu0 %888
    %890 = vrot.lane.b32.xlu0 %v480, 52
    %v891 = vpop.permute.xlu0 %890
    %vm892 = vcmask 424960
    %v893 = vsel %vm892, %v881, %v883
    %v894 = vsel %vm892, %v883, %v885
    %v895 = vsel %vm892, %v887, %v889
    %v896 = vsel %vm892, %v889, %v891
    %901 = vst [vmem:[#allocation2 + $0x260] sm:$0xff] %v893
    %902 = vst.msk [vmem:[#allocation2 + $0x268] sm:$0xff] %vm482, %v894
    %903 = vst [vmem:[#allocation2 + $0x270] sm:$0xff] %v895
    %904 = vst.msk [vmem:[#allocation2 + $0x278] sm:$0xff] %vm482, %v896
    %905 = vrot.lane.b32.xlu0 %v475, 32
    %v906 = vpop.permute.xlu0 %905
    %907 = vrot.lane.b32.xlu0 %v476, 32
    %v908 = vpop.permute.xlu0 %907
    %909 = vrot.lane.b32.xlu0 %v477, 32
    %v910 = vpop.permute.xlu0 %909
    %911 = vrot.lane.b32.xlu0 %v478, 32
    %v912 = vpop.permute.xlu0 %911
    %913 = vrot.lane.b32.xlu0 %v479, 32
    %v914 = vpop.permute.xlu0 %913
    %915 = vrot.lane.b32.xlu0 %v480, 32
    %v916 = vpop.permute.xlu0 %915
    %vm917 = vcmask 261120
    %v918 = vsel %vm917, %v906, %v908
    %v919 = vsel %vm917, %v908, %v910
    %v920 = vsel %vm917, %v912, %v914
    %v921 = vsel %vm917, %v914, %v916
    %926 = vst [vmem:[#allocation2 + $0x280] sm:$0xff] %v918
    %927 = vst.msk [vmem:[#allocation2 + $0x288] sm:$0xff] %vm482, %v919
    %928 = vst [vmem:[#allocation2 + $0x290] sm:$0xff] %v920
    %929 = vst.msk [vmem:[#allocation2 + $0x298] sm:$0xff] %vm482, %v921
    %930 = vrot.lane.b32.xlu0 %v475, 31
    %v931 = vpop.permute.xlu0 %930
    %932 = vrot.lane.b32.xlu0 %v476, 31
    %v933 = vpop.permute.xlu0 %932
    %934 = vrot.lane.b32.xlu0 %v477, 31
    %v935 = vpop.permute.xlu0 %934
    %936 = vrot.lane.b32.xlu0 %v478, 31
    %v937 = vpop.permute.xlu0 %936
    %938 = vrot.lane.b32.xlu0 %v479, 31
    %v939 = vpop.permute.xlu0 %938
    %940 = vrot.lane.b32.xlu0 %v480, 31
    %v941 = vpop.permute.xlu0 %940
    %vm942 = vcmask 252928
    %v943 = vsel %vm942, %v931, %v933
    %v944 = vsel %vm942, %v933, %v935
    %v945 = vsel %vm942, %v937, %v939
    %v946 = vsel %vm942, %v939, %v941
    %951 = vst [vmem:[#allocation2 + $0x2a0] sm:$0xff] %v943
    %952 = vst.msk [vmem:[#allocation2 + $0x2a8] sm:$0xff] %vm482, %v944
    %953 = vst [vmem:[#allocation2 + $0x2b0] sm:$0xff] %v945
    %954 = vst.msk [vmem:[#allocation2 + $0x2b8] sm:$0xff] %vm482, %v946
    %955 = vrot.lane.b32.xlu0 %v475, 30
    %v956 = vpop.permute.xlu0 %955
    %957 = vrot.lane.b32.xlu0 %v476, 30
    %v958 = vpop.permute.xlu0 %957
    %959 = vrot.lane.b32.xlu0 %v477, 30
    %v960 = vpop.permute.xlu0 %959
    %961 = vrot.lane.b32.xlu0 %v478, 30
    %v962 = vpop.permute.xlu0 %961
    %963 = vrot.lane.b32.xlu0 %v479, 30
    %v964 = vpop.permute.xlu0 %963
    %965 = vrot.lane.b32.xlu0 %v480, 30
    %v966 = vpop.permute.xlu0 %965
    %vm967 = vcmask 244736
    %v968 = vsel %vm967, %v956, %v958
    %v969 = vsel %vm967, %v958, %v960
    %v970 = vsel %vm967, %v962, %v964
    %v971 = vsel %vm967, %v964, %v966
    %976 = vst [vmem:[#allocation2 + $0x2c0] sm:$0xff] %v968
    %977 = vst.msk [vmem:[#allocation2 + $0x2c8] sm:$0xff] %vm482, %v969
    %978 = vst [vmem:[#allocation2 + $0x2d0] sm:$0xff] %v970
    %979 = vst.msk [vmem:[#allocation2 + $0x2d8] sm:$0xff] %vm482, %v971
    %980 = vrot.lane.b32.xlu0 %v475, 29
    %v981 = vpop.permute.xlu0 %980
    %982 = vrot.lane.b32.xlu0 %v476, 29
    %v983 = vpop.permute.xlu0 %982
    %984 = vrot.lane.b32.xlu0 %v477, 29
    %v985 = vpop.permute.xlu0 %984
    %986 = vrot.lane.b32.xlu0 %v478, 29
    %v987 = vpop.permute.xlu0 %986
    %988 = vrot.lane.b32.xlu0 %v479, 29
    %v989 = vpop.permute.xlu0 %988
    %990 = vrot.lane.b32.xlu0 %v480, 29
    %v991 = vpop.permute.xlu0 %990
    %vm992 = vcmask 236544
    %v993 = vsel %vm992, %v981, %v983
    %v994 = vsel %vm992, %v983, %v985
    %v995 = vsel %vm992, %v987, %v989
    %v996 = vsel %vm992, %v989, %v991
    %1001 = vst [vmem:[#allocation2 + $0x2e0] sm:$0xff] %v993
    %1002 = vst.msk [vmem:[#allocation2 + $0x2e8] sm:$0xff] %vm482, %v994
    %1003 = vst [vmem:[#allocation2 + $0x2f0] sm:$0xff] %v995
    %1004 = vst.msk [vmem:[#allocation2 + $0x2f8] sm:$0xff] %vm482, %v996
    %1005 = vrot.lane.b32.xlu0 %v475, 28
    %v1006 = vpop.permute.xlu0 %1005
    %1007 = vrot.lane.b32.xlu0 %v476, 28
    %v1008 = vpop.permute.xlu0 %1007
    %1009 = vrot.lane.b32.xlu0 %v477, 28
    %v1010 = vpop.permute.xlu0 %1009
    %1011 = vrot.lane.b32.xlu0 %v478, 28
    %v1012 = vpop.permute.xlu0 %1011
    %1013 = vrot.lane.b32.xlu0 %v479, 28
    %v1014 = vpop.permute.xlu0 %1013
    %1015 = vrot.lane.b32.xlu0 %v480, 28
    %v1016 = vpop.permute.xlu0 %1015
    %vm1017 = vcmask 228352
    %v1018 = vsel %vm1017, %v1006, %v1008
    %v1019 = vsel %vm1017, %v1008, %v1010
    %v1020 = vsel %vm1017, %v1012, %v1014
    %v1021 = vsel %vm1017, %v1014, %v1016
    %1026 = vst [vmem:[#allocation2 + $0x300] sm:$0xff] %v1018
    %1027 = vst.msk [vmem:[#allocation2 + $0x308] sm:$0xff] %vm482, %v1019
    %1028 = vst [vmem:[#allocation2 + $0x310] sm:$0xff] %v1020
    %1029 = vst.msk [vmem:[#allocation2 + $0x318] sm:$0xff] %vm482, %v1021
    %v1030 = vld [vmem:[%s3] sm:$0xff]
    %v1031 = vld [vmem:[%s3 + $0x8] sm:$0xff]
    %v1032 = vld [vmem:[%s3 + $0x10] sm:$0xff]
    %v1033 = vld [vmem:[%s3 + $0x18] sm:$0xff]
    %v1034 = vld [vmem:[%s3 + $0x20] sm:$0xff]
    %v1035 = vld [vmem:[%s3 + $0x28] sm:$0xff]
    %v1036 = vld [vmem:[%s3 + $0x30] sm:$0xff]
    %v1037 = vld [vmem:[%s3 + $0x38] sm:$0xff]
    %v1038 = vld [vmem:[%s3 + $0x40] sm:$0xff]
    %v1039 = vld [vmem:[%s3 + $0x48] sm:$0xff]
    %v1040 = vld [vmem:[%s3 + $0x50] sm:$0xff]
    %v1041 = vld [vmem:[%s3 + $0x58] sm:$0xff]
    %v1042 = vld [vmem:[%s3 + $0x60] sm:$0xff]
    %v1043 = vld [vmem:[%s3 + $0x68] sm:$0xff]
    %v1044 = vld [vmem:[%s3 + $0x70] sm:$0xff]
    %v1045 = vld [vmem:[%s3 + $0x78] sm:$0xff]
    %v1046 = vld [vmem:[#allocation2] sm:$0xff]
    %v1047 = vld [vmem:[#allocation2 + $0x8] sm:$0xff]
    %v1048 = vld [vmem:[#allocation2 + $0x10] sm:$0xff]
    %v1049 = vld [vmem:[#allocation2 + $0x18] sm:$0xff]
    %v1050 = vld [vmem:[#allocation2 + $0x20] sm:$0xff]
    %v1051 = vld [vmem:[#allocation2 + $0x28] sm:$0xff]
    %v1052 = vld [vmem:[#allocation2 + $0x30] sm:$0xff]
    %v1053 = vld [vmem:[#allocation2 + $0x38] sm:$0xff]
    %v1054 = vld [vmem:[#allocation2 + $0x40] sm:$0xff]
    %v1055 = vld [vmem:[#allocation2 + $0x48] sm:$0xff]
    %v1056 = vld [vmem:[#allocation2 + $0x50] sm:$0xff]
    %v1057 = vld [vmem:[#allocation2 + $0x58] sm:$0xff]
    %v1058 = vld [vmem:[#allocation2 + $0x60] sm:$0xff]
    %v1059 = vld [vmem:[#allocation2 + $0x68] sm:$0xff]
    %v1060 = vld [vmem:[#allocation2 + $0x70] sm:$0xff]
    %v1061 = vld [vmem:[#allocation2 + $0x78] sm:$0xff]
    %v1062 = vld [vmem:[#allocation2 + $0x80] sm:$0xff]
    %v1063 = vld [vmem:[#allocation2 + $0x88] sm:$0xff]
    %v1064 = vld [vmem:[#allocation2 + $0x90] sm:$0xff]
    %v1065 = vld [vmem:[#allocation2 + $0x98] sm:$0xff]
    %v1066 = vld [vmem:[#allocation2 + $0xa0] sm:$0xff]
    %v1067 = vld [vmem:[#allocation2 + $0xa8] sm:$0xff]
    %v1068 = vld [vmem:[#allocation2 + $0xb0] sm:$0xff]
    %v1069 = vld [vmem:[#allocation2 + $0xb8] sm:$0xff]
    %v1070 = vld [vmem:[#allocation2 + $0xc0] sm:$0xff]
    %v1071 = vld [vmem:[#allocation2 + $0xc8] sm:$0xff]
    %v1072 = vld [vmem:[#allocation2 + $0xd0] sm:$0xff]
    %v1073 = vld [vmem:[#allocation2 + $0xd8] sm:$0xff]
    %v1074 = vld [vmem:[#allocation2 + $0xe0] sm:$0xff]
    %v1075 = vld [vmem:[#allocation2 + $0xe8] sm:$0xff]
    %v1076 = vld [vmem:[#allocation2 + $0xf0] sm:$0xff]
    %v1077 = vld [vmem:[#allocation2 + $0xf8] sm:$0xff]
    %v1078 = vld [vmem:[#allocation2 + $0x100] sm:$0xff]
    %v1079 = vld [vmem:[#allocation2 + $0x108] sm:$0xff]
    %v1080 = vld [vmem:[#allocation2 + $0x110] sm:$0xff]
    %v1081 = vld [vmem:[#allocation2 + $0x118] sm:$0xff]
    %v1082 = vld [vmem:[#allocation2 + $0x120] sm:$0xff]
    %v1083 = vld [vmem:[#allocation2 + $0x128] sm:$0xff]
    %v1084 = vld [vmem:[#allocation2 + $0x130] sm:$0xff]
    %v1085 = vld [vmem:[#allocation2 + $0x138] sm:$0xff]
    %v1086 = vld [vmem:[#allocation2 + $0x140] sm:$0xff]
    %v1087 = vld [vmem:[#allocation2 + $0x148] sm:$0xff]
    %v1088 = vld [vmem:[#allocation2 + $0x150] sm:$0xff]
    %v1089 = vld [vmem:[#allocation2 + $0x158] sm:$0xff]
    %v1090 = vld [vmem:[#allocation2 + $0x160] sm:$0xff]
    %v1091 = vld [vmem:[#allocation2 + $0x168] sm:$0xff]
    %v1092 = vld [vmem:[#allocation2 + $0x170] sm:$0xff]
    %v1093 = vld [vmem:[#allocation2 + $0x178] sm:$0xff]
    %v1094 = vld [vmem:[#allocation2 + $0x180] sm:$0xff]
    %v1095 = vld [vmem:[#allocation2 + $0x188] sm:$0xff]
    %v1096 = vld [vmem:[#allocation2 + $0x190] sm:$0xff]
    %v1097 = vld [vmem:[#allocation2 + $0x198] sm:$0xff]
    %v1098 = vld [vmem:[#allocation2 + $0x1a0] sm:$0xff]
    %v1099 = vld [vmem:[#allocation2 + $0x1a8] sm:$0xff]
    %v1100 = vld [vmem:[#allocation2 + $0x1b0] sm:$0xff]
    %v1101 = vld [vmem:[#allocation2 + $0x1b8] sm:$0xff]
    %v1102 = vld [vmem:[#allocation2 + $0x1c0] sm:$0xff]
    %v1103 = vld [vmem:[#allocation2 + $0x1c8] sm:$0xff]
    %v1104 = vld [vmem:[#allocation2 + $0x1d0] sm:$0xff]
    %v1105 = vld [vmem:[#allocation2 + $0x1d8] sm:$0xff]
    %v1106 = vld [vmem:[#allocation2 + $0x1e0] sm:$0xff]
    %v1107 = vld [vmem:[#allocation2 + $0x1e8] sm:$0xff]
    %v1108 = vld [vmem:[#allocation2 + $0x1f0] sm:$0xff]
    %v1109 = vld [vmem:[#allocation2 + $0x1f8] sm:$0xff]
    %v1110 = vld [vmem:[#allocation2 + $0x200] sm:$0xff]
    %v1111 = vld [vmem:[#allocation2 + $0x208] sm:$0xff]
    %v1112 = vld [vmem:[#allocation2 + $0x210] sm:$0xff]
    %v1113 = vld [vmem:[#allocation2 + $0x218] sm:$0xff]
    %v1114 = vld [vmem:[#allocation2 + $0x220] sm:$0xff]
    %v1115 = vld [vmem:[#allocation2 + $0x228] sm:$0xff]
    %v1116 = vld [vmem:[#allocation2 + $0x230] sm:$0xff]
    %v1117 = vld [vmem:[#allocation2 + $0x238] sm:$0xff]
    %v1118 = vld [vmem:[#allocation2 + $0x240] sm:$0xff]
    %v1119 = vld [vmem:[#allocation2 + $0x248] sm:$0xff]
    %v1120 = vld [vmem:[#allocation2 + $0x250] sm:$0xff]
    %v1121 = vld [vmem:[#allocation2 + $0x258] sm:$0xff]
    %v1122 = vld [vmem:[#allocation2 + $0x260] sm:$0xff]
    %v1123 = vld [vmem:[#allocation2 + $0x268] sm:$0xff]
    %v1124 = vld [vmem:[#allocation2 + $0x270] sm:$0xff]
    %v1125 = vld [vmem:[#allocation2 + $0x278] sm:$0xff]
    %v1126 = vld [vmem:[#allocation2 + $0x280] sm:$0xff]
    %v1127 = vld [vmem:[#allocation2 + $0x288] sm:$0xff]
    %v1128 = vld [vmem:[#allocation2 + $0x290] sm:$0xff]
    %v1129 = vld [vmem:[#allocation2 + $0x298] sm:$0xff]
    %v1130 = vld [vmem:[#allocation2 + $0x2a0] sm:$0xff]
    %v1131 = vld [vmem:[#allocation2 + $0x2a8] sm:$0xff]
    %v1132 = vld [vmem:[#allocation2 + $0x2b0] sm:$0xff]
    %v1133 = vld [vmem:[#allocation2 + $0x2b8] sm:$0xff]
    %v1134 = vld [vmem:[#allocation2 + $0x2c0] sm:$0xff]
    %v1135 = vld [vmem:[#allocation2 + $0x2c8] sm:$0xff]
    %v1136 = vld [vmem:[#allocation2 + $0x2d0] sm:$0xff]
    %v1137 = vld [vmem:[#allocation2 + $0x2d8] sm:$0xff]
    %v1138 = vld [vmem:[#allocation2 + $0x2e0] sm:$0xff]
    %v1139 = vld [vmem:[#allocation2 + $0x2e8] sm:$0xff]
    %v1140 = vld [vmem:[#allocation2 + $0x2f0] sm:$0xff]
    %v1141 = vld [vmem:[#allocation2 + $0x2f8] sm:$0xff]
    %v1142 = vld [vmem:[#allocation2 + $0x300] sm:$0xff]
    %v1143 = vld [vmem:[#allocation2 + $0x308] sm:$0xff]
    %v1144 = vld [vmem:[#allocation2 + $0x310] sm:$0xff]
    %v1145 = vld [vmem:[#allocation2 + $0x318] sm:$0xff]
    %v1146 = vld [vmem:[%s4] sm:$0xff]
    %v1147 = vld [vmem:[%s4 + $0x8] sm:$0xff]
    %v1148 = vld [vmem:[%s4 + $0x10] sm:$0xff]
    %v1149 = vld [vmem:[%s4 + $0x18] sm:$0xff]
    %1151 = vset.pattern.permute.xlu0 0
    %1152 = vperm.xlu0 %1151, %v1146
    %v1153 = vpop.permute.xlu0 %1152
    %1156 = vset.pattern.permute.xlu0 0
    %1157 = vperm.xlu0 %1156, %v1147
    %v1158 = vpop.permute.xlu0 %1157
    %1161 = vset.pattern.permute.xlu0 0
    %1162 = vperm.xlu0 %1161, %v1148
    %v1163 = vpop.permute.xlu0 %1162
    %1166 = vset.pattern.permute.xlu0 0
    %1167 = vperm.xlu0 %1166, %v1149
    %v1168 = vpop.permute.xlu0 %1167
    %vm1170 = vcmask 130048
    %v1172 = vsel %vm1170, %v1033, 0
    %v1175 = vsel %vm1170, %v1037, 0
    %v1178 = vsel %vm1170, %v1041, 0
    %v1181 = vsel %vm1170, %v1045, 0
    %1183 = vmatpush.msra.mxu0 %v1076
    %1184 = vmatpush.msra.mxu0 %v1074
    %1185 = vmatpush.msra.mxu0 %v1072
    %1186 = vmatpush.msra.mxu0 %v1070
    %1187 = vmatpush.msra.mxu0 %v1068
    %1188 = vmatpush.msra.mxu0 %v1066
    %1189 = vmatpush.msra.mxu0 %v1064
    %1190 = vmatpush.msra.mxu0 %v1062
    %1191 = vmatpush.msra.mxu0 %v1060
    %1192 = vmatpush.msra.mxu0 %v1058
    %1193 = vmatpush.msra.mxu0 %v1056
    %1194 = vmatpush.msra.mxu0 %v1054
    %1195 = vmatpush.msra.mxu0 %v1052
    %1196 = vmatpush.msra.mxu0 %v1050
    %1197 = vmatpush.msra.mxu0 %v1048
    %1198 = vmatpush.msra.mxu0 %v1046
    %1199 = vmatmul.f32.gmra.mxu0 %v1030
    %v1200 = vpop.f32.mrf.mxu0
    %v1201 = vadd.f32 %v1153, %v1200
    %1202 = vmatmul.f32.gmra.mxu0 %v1034
    %v1203 = vpop.f32.mrf.mxu0
    %v1204 = vadd.f32 %v1158, %v1203
    %1205 = vmatmul.f32.gmra.mxu0 %v1038
    %v1206 = vpop.f32.mrf.mxu0
    %v1207 = vadd.f32 %v1163, %v1206
    %1208 = vmatmul.f32.gmra.mxu0 %v1042
    %v1209 = vpop.f32.mrf.mxu0
    %v1210 = vadd.f32 %v1168, %v1209
    %1211 = vdwg.mxu0
    %1212 = vmatpush.msra.mxu0 %v1108
    %1213 = vmatpush.msra.mxu0 %v1106
    %1214 = vmatpush.msra.mxu0 %v1104
    %1215 = vmatpush.msra.mxu0 %v1102
    %1216 = vmatpush.msra.mxu0 %v1100
    %1217 = vmatpush.msra.mxu0 %v1098
    %1218 = vmatpush.msra.mxu0 %v1096
    %1219 = vmatpush.msra.mxu0 %v1094
    %1220 = vmatpush.msra.mxu0 %v1092
    %1221 = vmatpush.msra.mxu0 %v1090
    %1222 = vmatpush.msra.mxu0 %v1088
    %1223 = vmatpush.msra.mxu0 %v1086
    %1224 = vmatpush.msra.mxu0 %v1084
    %1225 = vmatpush.msra.mxu0 %v1082
    %1226 = vmatpush.msra.mxu0 %v1080
    %1227 = vmatpush.msra.mxu0 %v1078
    %1228 = vmatmul.f32.gmra.mxu0 %v1031
    %v1229 = vpop.f32.mrf.mxu0
    %v1230 = vadd.f32 %v1201, %v1229
    %1231 = vmatmul.f32.gmra.mxu0 %v1035
    %v1232 = vpop.f32.mrf.mxu0
    %v1233 = vadd.f32 %v1204, %v1232
    %1234 = vmatmul.f32.gmra.mxu0 %v1039
    %v1235 = vpop.f32.mrf.mxu0
    %v1236 = vadd.f32 %v1207, %v1235
    %1237 = vmatmul.f32.gmra.mxu0 %v1043
    %v1238 = vpop.f32.mrf.mxu0
    %v1239 = vadd.f32 %v1210, %v1238
    %1240 = vdwg.mxu0
    %1241 = vmatpush.msra.mxu0 %v1140
    %1242 = vmatpush.msra.mxu0 %v1138
    %1243 = vmatpush.msra.mxu0 %v1136
    %1244 = vmatpush.msra.mxu0 %v1134
    %1245 = vmatpush.msra.mxu0 %v1132
    %1246 = vmatpush.msra.mxu0 %v1130
    %1247 = vmatpush.msra.mxu0 %v1128
    %1248 = vmatpush.msra.mxu0 %v1126
    %1249 = vmatpush.msra.mxu0 %v1124
    %1250 = vmatpush.msra.mxu0 %v1122
    %1251 = vmatpush.msra.mxu0 %v1120
    %1252 = vmatpush.msra.mxu0 %v1118
    %1253 = vmatpush.msra.mxu0 %v1116
    %1254 = vmatpush.msra.mxu0 %v1114
    %1255 = vmatpush.msra.mxu0 %v1112
    %1256 = vmatpush.msra.mxu0 %v1110
    %1257 = vmatmul.f32.gmra.mxu0 %v1032
    %v1258 = vpop.f32.mrf.mxu0
    %v1259 = vadd.f32 %v1230, %v1258
    %1260 = vmatmul.f32.gmra.mxu0 %v1036
    %v1261 = vpop.f32.mrf.mxu0
    %v1262 = vadd.f32 %v1233, %v1261
    %1263 = vmatmul.f32.gmra.mxu0 %v1040
    %v1264 = vpop.f32.mrf.mxu0
    %v1265 = vadd.f32 %v1236, %v1264
    %1266 = vmatmul.f32.gmra.mxu0 %v1044
    %v1267 = vpop.f32.mrf.mxu0
    %v1268 = vadd.f32 %v1239, %v1267
    %1269 = vdwg.mxu0
    %1270 = vmatpush.msra.mxu0 0.0
    %1271 = vmatpush.msra.mxu0 0.0
    %1272 = vmatpush.msra.mxu0 0.0
    %1273 = vmatpush.msra.mxu0 0.0
    %1274 = vmatpush.msra.mxu0 0.0
    %1275 = vmatpush.msra.mxu0 0.0
    %1276 = vmatpush.msra.mxu0 0.0
    %1277 = vmatpush.msra.mxu0 0.0
    %1278 = vmatpush.msra.mxu0 0.0
    %1279 = vmatpush.msra.mxu0 0.0
    %1280 = vmatpush.msra.mxu0 0.0
    %1281 = vmatpush.msra.mxu0 0.0
    %1282 = vmatpush.msra.mxu0 0.0
    %1283 = vmatpush.msra.mxu0 0.0
    %1284 = vmatpush.msra.mxu0 %v1144
    %1285 = vmatpush.msra.mxu0 %v1142
    %1286 = vmatmul.f32.gmra.mxu0 %v1172
    %v1287 = vpop.f32.mrf.mxu0
    %v1288 = vadd.f32 %v1259, %v1287
    %1289 = vmatmul.f32.gmra.mxu0 %v1175
    %v1290 = vpop.f32.mrf.mxu0
    %v1291 = vadd.f32 %v1262, %v1290
    %1292 = vmatmul.f32.gmra.mxu0 %v1178
    %v1293 = vpop.f32.mrf.mxu0
    %v1294 = vadd.f32 %v1265, %v1293
    %1295 = vmatmul.f32.gmra.mxu0 %v1181
    %v1296 = vpop.f32.mrf.mxu0
    %v1297 = vadd.f32 %v1268, %v1296
    %1298 = vdwg.mxu0
    %1299 = vmatpush.msra.mxu0 %v1077
    %1300 = vmatpush.msra.mxu0 %v1075
    %1301 = vmatpush.msra.mxu0 %v1073
    %1302 = vmatpush.msra.mxu0 %v1071
    %1303 = vmatpush.msra.mxu0 %v1069
    %1304 = vmatpush.msra.mxu0 %v1067
    %1305 = vmatpush.msra.mxu0 %v1065
    %1306 = vmatpush.msra.mxu0 %v1063
    %1307 = vmatpush.msra.mxu0 %v1061
    %1308 = vmatpush.msra.mxu0 %v1059
    %1309 = vmatpush.msra.mxu0 %v1057
    %1310 = vmatpush.msra.mxu0 %v1055
    %1311 = vmatpush.msra.mxu0 %v1053
    %1312 = vmatpush.msra.mxu0 %v1051
    %1313 = vmatpush.msra.mxu0 %v1049
    %1314 = vmatpush.msra.mxu0 %v1047
    %1315 = vmatmul.f32.gmra.mxu0 %v1030
    %v1316 = vpop.f32.mrf.mxu0
    %v1317 = vadd.f32 %v1153, %v1316
    %1318 = vmatmul.f32.gmra.mxu0 %v1034
    %v1319 = vpop.f32.mrf.mxu0
    %v1320 = vadd.f32 %v1158, %v1319
    %1321 = vmatmul.f32.gmra.mxu0 %v1038
    %v1322 = vpop.f32.mrf.mxu0
    %v1323 = vadd.f32 %v1163, %v1322
    %1324 = vmatmul.f32.gmra.mxu0 %v1042
    %v1325 = vpop.f32.mrf.mxu0
    %v1326 = vadd.f32 %v1168, %v1325
    %1327 = vdwg.mxu0
    %1328 = vmatpush.msra.mxu0 %v1109
    %1329 = vmatpush.msra.mxu0 %v1107
    %1330 = vmatpush.msra.mxu0 %v1105
    %1331 = vmatpush.msra.mxu0 %v1103
    %1332 = vmatpush.msra.mxu0 %v1101
    %1333 = vmatpush.msra.mxu0 %v1099
    %1334 = vmatpush.msra.mxu0 %v1097
    %1335 = vmatpush.msra.mxu0 %v1095
    %1336 = vmatpush.msra.mxu0 %v1093
    %1337 = vmatpush.msra.mxu0 %v1091
    %1338 = vmatpush.msra.mxu0 %v1089
    %1339 = vmatpush.msra.mxu0 %v1087
    %1340 = vmatpush.msra.mxu0 %v1085
    %1341 = vmatpush.msra.mxu0 %v1083
    %1342 = vmatpush.msra.mxu0 %v1081
    %1343 = vmatpush.msra.mxu0 %v1079
    %1344 = vmatmul.f32.gmra.mxu0 %v1031
    %v1345 = vpop.f32.mrf.mxu0
    %v1346 = vadd.f32 %v1317, %v1345
    %1347 = vmatmul.f32.gmra.mxu0 %v1035
    %v1348 = vpop.f32.mrf.mxu0
    %v1349 = vadd.f32 %v1320, %v1348
    %1350 = vmatmul.f32.gmra.mxu0 %v1039
    %v1351 = vpop.f32.mrf.mxu0
    %v1352 = vadd.f32 %v1323, %v1351
    %1353 = vmatmul.f32.gmra.mxu0 %v1043
    %v1354 = vpop.f32.mrf.mxu0
    %v1355 = vadd.f32 %v1326, %v1354
    %1356 = vdwg.mxu0
    %1357 = vmatpush.msra.mxu0 %v1141
    %1358 = vmatpush.msra.mxu0 %v1139
    %1359 = vmatpush.msra.mxu0 %v1137
    %1360 = vmatpush.msra.mxu0 %v1135
    %1361 = vmatpush.msra.mxu0 %v1133
    %1362 = vmatpush.msra.mxu0 %v1131
    %1363 = vmatpush.msra.mxu0 %v1129
    %1364 = vmatpush.msra.mxu0 %v1127
    %1365 = vmatpush.msra.mxu0 %v1125
    %1366 = vmatpush.msra.mxu0 %v1123
    %1367 = vmatpush.msra.mxu0 %v1121
    %1368 = vmatpush.msra.mxu0 %v1119
    %1369 = vmatpush.msra.mxu0 %v1117
    %1370 = vmatpush.msra.mxu0 %v1115
    %1371 = vmatpush.msra.mxu0 %v1113
    %1372 = vmatpush.msra.mxu0 %v1111
    %1373 = vmatmul.f32.gmra.mxu0 %v1032
    %v1374 = vpop.f32.mrf.mxu0
    %v1375 = vadd.f32 %v1346, %v1374
    %1376 = vmatmul.f32.gmra.mxu0 %v1036
    %v1377 = vpop.f32.mrf.mxu0
    %v1378 = vadd.f32 %v1349, %v1377
    %1379 = vmatmul.f32.gmra.mxu0 %v1040
    %v1380 = vpop.f32.mrf.mxu0
    %v1381 = vadd.f32 %v1352, %v1380
    %1382 = vmatmul.f32.gmra.mxu0 %v1044
    %v1383 = vpop.f32.mrf.mxu0
    %v1384 = vadd.f32 %v1355, %v1383
    %1385 = vdwg.mxu0
    %1386 = vmatpush.msra.mxu0 0.0
    %1387 = vmatpush.msra.mxu0 0.0
    %1388 = vmatpush.msra.mxu0 0.0
    %1389 = vmatpush.msra.mxu0 0.0
    %1390 = vmatpush.msra.mxu0 0.0
    %1391 = vmatpush.msra.mxu0 0.0
    %1392 = vmatpush.msra.mxu0 0.0
    %1393 = vmatpush.msra.mxu0 0.0
    %1394 = vmatpush.msra.mxu0 0.0
    %1395 = vmatpush.msra.mxu0 0.0
    %1396 = vmatpush.msra.mxu0 0.0
    %1397 = vmatpush.msra.mxu0 0.0
    %1398 = vmatpush.msra.mxu0 0.0
    %1399 = vmatpush.msra.mxu0 0.0
    %1400 = vmatpush.msra.mxu0 %v1145
    %1401 = vmatpush.msra.mxu0 %v1143
    %1402 = vmatmul.f32.gmra.mxu0 %v1172
    %v1403 = vpop.f32.mrf.mxu0
    %v1404 = vadd.f32 %v1375, %v1403
    %1405 = vmatmul.f32.gmra.mxu0 %v1175
    %v1406 = vpop.f32.mrf.mxu0
    %v1407 = vadd.f32 %v1378, %v1406
    %1408 = vmatmul.f32.gmra.mxu0 %v1178
    %v1409 = vpop.f32.mrf.mxu0
    %v1410 = vadd.f32 %v1381, %v1409
    %1411 = vmatmul.f32.gmra.mxu0 %v1181
    %v1412 = vpop.f32.mrf.mxu0
    %v1413 = vadd.f32 %v1384, %v1412
    %1414 = vdwg.mxu0
    %v1415 = vmax.f32 %v1288, 0.0
    %v1416 = vmax.f32 %v1404, 0.0
    %v1417 = vmax.f32 %v1291, 0.0
    %v1418 = vmax.f32 %v1407, 0.0
    %v1419 = vmax.f32 %v1294, 0.0
    %v1420 = vmax.f32 %v1410, 0.0
    %v1421 = vmax.f32 %v1297, 0.0
    %v1422 = vmax.f32 %v1413, 0.0
    %v1425 = vrot.slane %v1416, 7
    %vm1426 = vcmask 1040384
    %v1427 = vsel %vm1426, %v1415, %v1425
    %v1429 = vlaneseq
    %vm1430 = vcmp.ge.s32.totalorder %v1429, 0
    %vm1431 = vcmp.lt.s32.totalorder %v1429, 210
    %vm1432 = vmand %vm1430, %vm1431
    %1433 = vst.msk [vmem:[#allocation3] sm:$0x3] %vm1432, %v1427
    %1434 = vst [vmem:[#allocation1] sm:$0xff] %v1415
    %1435 = vst [vmem:[#allocation1 + $0x9] sm:$0xff] %v1416
    %s1436 = scalar_lea.vmem [#allocation1], 1
    %v1437 = vld [vmem:[%s1436] ss:$9 sm:$0xff]
    %1438 = vrot.lane.b32.xlu0 %v1437, 82
    %v1439 = vpop.permute.xlu0 %1438
    %v1440 = vrot.slane %v1439, 7
    %v1441 = vsel %vm482, %v1440, %v1439
    %vm1443 = vcmp.ge.s32.totalorder %v1429, 82
    %vm1444 = vcmp.lt.s32.totalorder %v1429, 292
    %vm1445 = vmand %vm1443, %vm1444
    %1446 = vst.msk [vmem:[#allocation3 + $0x1] sm:$0x7] %vm1445, %v1441
    %1447 = vst [vmem:[#allocation1] sm:$0xff] %v1415
    %1448 = vst [vmem:[#allocation1 + $0x9] sm:$0xff] %v1416
    %s1449 = scalar_lea.vmem [#allocation1], 2
    %v1450 = vld [vmem:[%s1449] ss:$9 sm:$0xff]
    %1451 = vrot.lane.b32.xlu0 %v1450, 36
    %v1452 = vpop.permute.xlu0 %1451
    %v1453 = vrot.slane %v1452, 7
    %vm1454 = vcmask 293888
    %v1455 = vsel %vm1454, %v1453, %v1452
    %vm1457 = vcmp.ge.s32.totalorder %v1429, 36
    %vm1458 = vcmp.lt.s32.totalorder %v1429, 246
    %vm1459 = vmand %vm1457, %vm1458
    %1460 = vst.msk [vmem:[#allocation3 + $0x3] sm:$0x3] %vm1459, %v1455
    %1461 = vst [vmem:[#allocation1] sm:$0xff] %v1415
    %1462 = vst [vmem:[#allocation1 + $0x9] sm:$0xff] %v1416
    %s1463 = scalar_lea.vmem [#allocation1], 3
    %v1464 = vld [vmem:[%s1463] ss:$9 sm:$0xff]
    %1465 = vrot.lane.b32.xlu0 %v1464, 118
    %v1466 = vpop.permute.xlu0 %1465
    %v1467 = vrot.slane %v1466, 7
    %vm1468 = vcmask 965632
    %v1469 = vsel %vm1468, %v1467, %v1466
    %vm1471 = vcmp.ge.s32.totalorder %v1429, 118
    %vm1472 = vcmp.lt.s32.totalorder %v1429, 328
    %vm1473 = vmand %vm1471, %vm1472
    %1474 = vst.msk [vmem:[#allocation3 + $0x4] sm:$0x7] %vm1473, %v1469
    %1475 = vst [vmem:[#allocation1] sm:$0xff] %v1415
    %1476 = vst [vmem:[#allocation1 + $0x9] sm:$0xff] %v1416
    %s1477 = scalar_lea.vmem [#allocation1], 4
    %v1478 = vld [vmem:[%s1477] ss:$9 sm:$0xff]
    %1479 = vrot.lane.b32.xlu0 %v1478, 72
    %v1480 = vpop.permute.xlu0 %1479
    %v1481 = vrot.slane %v1480, 7
    %vm1482 = vcmask 588800
    %v1483 = vsel %vm1482, %v1481, %v1480
    %vm1485 = vcmp.ge.s32.totalorder %v1429, 72
    %vm1486 = vcmp.lt.s32.totalorder %v1429, 282
    %vm1487 = vmand %vm1485, %vm1486
    %1488 = vst.msk [vmem:[#allocation3 + $0x6] sm:$0x7] %vm1487, %v1483
    %1489 = vst [vmem:[#allocation1] sm:$0xff] %v1415
    %1490 = vst [vmem:[#allocation1 + $0x9] sm:$0xff] %v1416
    %s1491 = scalar_lea.vmem [#allocation1], 5
    %v1492 = vld [vmem:[%s1491] ss:$9 sm:$0xff]
    %1493 = vrot.lane.b32.xlu0 %v1492, 26
    %v1494 = vpop.permute.xlu0 %1493
    %v1495 = vrot.slane %v1494, 7
    %vm1496 = vcmask 211968
    %v1497 = vsel %vm1496, %v1495, %v1494
    %vm1499 = vcmp.ge.s32.totalorder %v1429, 26
    %vm1500 = vcmp.lt.s32.totalorder %v1429, 236
    %vm1501 = vmand %vm1499, %vm1500
    %1502 = vst.msk [vmem:[#allocation3 + $0x8] sm:$0x3] %vm1501, %v1497
    %1503 = vst [vmem:[#allocation1] sm:$0xff] %v1415
    %1504 = vst [vmem:[#allocation1 + $0x9] sm:$0xff] %v1416
    %s1505 = scalar_lea.vmem [#allocation1], 6
    %v1506 = vld [vmem:[%s1505] ss:$9 sm:$0xff]
    %1507 = vrot.lane.b32.xlu0 %v1506, 108
    %v1508 = vpop.permute.xlu0 %1507
    %v1509 = vrot.slane %v1508, 7
    %vm1510 = vcmask 883712
    %v1511 = vsel %vm1510, %v1509, %v1508
    %vm1513 = vcmp.ge.s32.totalorder %v1429, 108
    %vm1514 = vcmp.lt.s32.totalorder %v1429, 318
    %vm1515 = vmand %vm1513, %vm1514
    %1516 = vst.msk [vmem:[#allocation3 + $0x9] sm:$0x7] %vm1515, %v1511
    %1517 = vst [vmem:[#allocation1] sm:$0xff] %v1415
    %1518 = vst [vmem:[#allocation1 + $0x9] sm:$0xff] %v1416
    %s1519 = scalar_lea.vmem [#allocation1], 7
    %v1520 = vld [vmem:[%s1519] ss:$9 sm:$0xff]
    %1521 = vrot.lane.b32.xlu0 %v1520, 62
    %v1522 = vpop.permute.xlu0 %1521
    %v1523 = vrot.slane %v1522, 7
    %vm1524 = vcmask 506880
    %v1525 = vsel %vm1524, %v1523, %v1522
    %vm1527 = vcmp.ge.s32.totalorder %v1429, 62
    %vm1528 = vcmp.lt.s32.totalorder %v1429, 272
    %vm1529 = vmand %vm1527, %vm1528
    %1530 = vst.msk [vmem:[#allocation3 + $0xb] sm:$0x7] %vm1529, %v1525
    %v1533 = vrot.slane %v1418, 7
    %v1534 = vsel %vm1426, %v1417, %v1533
    %1535 = vrot.lane.b32.xlu0 %v1534, 16
    %v1536 = vpop.permute.xlu0 %1535
    %v1537 = vrot.slane %v1536, 7
    %v1538 = vsel %vm1170, %v1537, %v1536
    %vm1540 = vcmp.ge.s32.totalorder %v1429, 16
    %vm1541 = vcmp.lt.s32.totalorder %v1429, 226
    %vm1542 = vmand %vm1540, %vm1541
    %1543 = vst.msk [vmem:[#allocation3 + $0xd] sm:$0x3] %vm1542, %v1538
    %1544 = vst [vmem:[#allocation1] sm:$0xff] %v1417
    %1545 = vst [vmem:[#allocation1 + $0x9] sm:$0xff] %v1418
    %s1546 = scalar_lea.vmem [#allocation1], 1
    %v1547 = vld [vmem:[%s1546] ss:$9 sm:$0xff]
    %1548 = vrot.lane.b32.xlu0 %v1547, 98
    %v1549 = vpop.permute.xlu0 %1548
    %v1550 = vrot.slane %v1549, 7
    %vm1551 = vcmask 801792
    %v1552 = vsel %vm1551, %v1550, %v1549
    %vm1554 = vcmp.ge.s32.totalorder %v1429, 98
    %vm1555 = vcmp.lt.s32.totalorder %v1429, 308
    %vm1556 = vmand %vm1554, %vm1555
    %1557 = vst.msk [vmem:[#allocation3 + $0xe] sm:$0x7] %vm1556, %v1552
    %1558 = vst [vmem:[#allocation1] sm:$0xff] %v1417
    %1559 = vst [vmem:[#allocation1 + $0x9] sm:$0xff] %v1418
    %s1560 = scalar_lea.vmem [#allocation1], 2
    %v1561 = vld [vmem:[%s1560] ss:$9 sm:$0xff]
    %1562 = vrot.lane.b32.xlu0 %v1561, 52
    %v1563 = vpop.permute.xlu0 %1562
    %v1564 = vrot.slane %v1563, 7
    %v1565 = vsel %vm892, %v1564, %v1563
    %vm1567 = vcmp.ge.s32.totalorder %v1429, 52
    %vm1568 = vcmp.lt.s32.totalorder %v1429, 262
    %vm1569 = vmand %vm1567, %vm1568
    %1570 = vst.msk [vmem:[#allocation3 + $0x10] sm:$0x7] %vm1569, %v1565
    %1571 = vst [vmem:[#allocation1] sm:$0xff] %v1417
    %1572 = vst [vmem:[#allocation1 + $0x9] sm:$0xff] %v1418
    %s1573 = scalar_lea.vmem [#allocation1], 3
    %v1574 = vld [vmem:[%s1573] ss:$9 sm:$0xff]
    %1575 = vrot.lane.b32.xlu0 %v1574, 6
    %v1576 = vpop.permute.xlu0 %1575
    %v1577 = vrot.slane %v1576, 7
    %vm1578 = vcmask 48128
    %v1579 = vsel %vm1578, %v1577, %v1576
    %vm1581 = vcmp.ge.s32.totalorder %v1429, 6
    %vm1582 = vcmp.lt.s32.totalorder %v1429, 216
    %vm1583 = vmand %vm1581, %vm1582
    %1584 = vst.msk [vmem:[#allocation3 + $0x12] sm:$0x3] %vm1583, %v1579
    %1585 = vst [vmem:[#allocation1] sm:$0xff] %v1417
    %1586 = vst [vmem:[#allocation1 + $0x9] sm:$0xff] %v1418
    %s1587 = scalar_lea.vmem [#allocation1], 4
    %v1588 = vld [vmem:[%s1587] ss:$9 sm:$0xff]
    %1589 = vrot.lane.b32.xlu0 %v1588, 88
    %v1590 = vpop.permute.xlu0 %1589
    %v1591 = vrot.slane %v1590, 7
    %vm1592 = vcmask 719872
    %v1593 = vsel %vm1592, %v1591, %v1590
    %vm1595 = vcmp.ge.s32.totalorder %v1429, 88
    %vm1596 = vcmp.lt.s32.totalorder %v1429, 298
    %vm1597 = vmand %vm1595, %vm1596
    %1598 = vst.msk [vmem:[#allocation3 + $0x13] sm:$0x7] %vm1597, %v1593
    %1599 = vst [vmem:[#allocation1] sm:$0xff] %v1417
    %1600 = vst [vmem:[#allocation1 + $0x9] sm:$0xff] %v1418
    %s1601 = scalar_lea.vmem [#allocation1], 5
    %v1602 = vld [vmem:[%s1601] ss:$9 sm:$0xff]
    %1603 = vrot.lane.b32.xlu0 %v1602, 42
    %v1604 = vpop.permute.xlu0 %1603
    %v1605 = vrot.slane %v1604, 7
    %vm1606 = vcmask 343040
    %v1607 = vsel %vm1606, %v1605, %v1604
    %vm1609 = vcmp.ge.s32.totalorder %v1429, 42
    %vm1610 = vcmp.lt.s32.totalorder %v1429, 252
    %vm1611 = vmand %vm1609, %vm1610
    %1612 = vst.msk [vmem:[#allocation3 + $0x15] sm:$0x3] %vm1611, %v1607
    %1613 = vst [vmem:[#allocation1] sm:$0xff] %v1417
    %1614 = vst [vmem:[#allocation1 + $0x9] sm:$0xff] %v1418
    %s1615 = scalar_lea.vmem [#allocation1], 6
    %v1616 = vld [vmem:[%s1615] ss:$9 sm:$0xff]
    %1617 = vrot.lane.b32.xlu0 %v1616, 124
    %v1618 = vpop.permute.xlu0 %1617
    %v1619 = vrot.slane %v1618, 7
    %v1620 = vsel %vm553, %v1619, %v1618
    %vm1622 = vcmp.ge.s32.totalorder %v1429, 124
    %vm1623 = vcmp.lt.s32.totalorder %v1429, 334
    %vm1624 = vmand %vm1622, %vm1623
    %1625 = vst.msk [vmem:[#allocation3 + $0x16] sm:$0x7] %vm1624, %v1620
    %1626 = vst [vmem:[#allocation1] sm:$0xff] %v1417
    %1627 = vst [vmem:[#allocation1 + $0x9] sm:$0xff] %v1418
    %s1628 = scalar_lea.vmem [#allocation1], 7
    %v1629 = vld [vmem:[%s1628] ss:$9 sm:$0xff]
    %1630 = vrot.lane.b32.xlu0 %v1629, 78
    %v1631 = vpop.permute.xlu0 %1630
    %v1632 = vrot.slane %v1631, 7
    %v1633 = vsel %vm440, %v1632, %v1631
    %vm1635 = vcmp.ge.s32.totalorder %v1429, 78
    %vm1636 = vcmp.lt.s32.totalorder %v1429, 288
    %vm1637 = vmand %vm1635, %vm1636
    %1638 = vst.msk [vmem:[#allocation3 + $0x18] sm:$0x7] %vm1637, %v1633
    %v1641 = vrot.slane %v1420, 7
    %v1642 = vsel %vm1426, %v1419, %v1641
    %1643 = vrot.lane.b32.xlu0 %v1642, 32
    %v1644 = vpop.permute.xlu0 %1643
    %v1645 = vrot.slane %v1644, 7
    %v1646 = vsel %vm917, %v1645, %v1644
    %vm1648 = vcmp.ge.s32.totalorder %v1429, 32
    %vm1649 = vcmp.lt.s32.totalorder %v1429, 242
    %vm1650 = vmand %vm1648, %vm1649
    %1651 = vst.msk [vmem:[#allocation3 + $0x1a] sm:$0x3] %vm1650, %v1646
    %1652 = vst [vmem:[#allocation1] sm:$0xff] %v1419
    %1653 = vst [vmem:[#allocation1 + $0x9] sm:$0xff] %v1420
    %s1654 = scalar_lea.vmem [#allocation1], 1
    %v1655 = vld [vmem:[%s1654] ss:$9 sm:$0xff]
    %1656 = vrot.lane.b32.xlu0 %v1655, 114
    %v1657 = vpop.permute.xlu0 %1656
    %v1658 = vrot.slane %v1657, 7
    %vm1659 = vcmask 932864
    %v1660 = vsel %vm1659, %v1658, %v1657
    %vm1662 = vcmp.ge.s32.totalorder %v1429, 114
    %vm1663 = vcmp.lt.s32.totalorder %v1429, 324
    %vm1664 = vmand %vm1662, %vm1663
    %1665 = vst.msk [vmem:[#allocation3 + $0x1b] sm:$0x7] %vm1664, %v1660
    %1666 = vst [vmem:[#allocation1] sm:$0xff] %v1419
    %1667 = vst [vmem:[#allocation1 + $0x9] sm:$0xff] %v1420
    %s1668 = scalar_lea.vmem [#allocation1], 2
    %v1669 = vld [vmem:[%s1668] ss:$9 sm:$0xff]
    %1670 = vrot.lane.b32.xlu0 %v1669, 68
    %v1671 = vpop.permute.xlu0 %1670
    %v1672 = vrot.slane %v1671, 7
    %vm1673 = vcmask 556032
    %v1674 = vsel %vm1673, %v1672, %v1671
    %vm1676 = vcmp.ge.s32.totalorder %v1429, 68
    %vm1677 = vcmp.lt.s32.totalorder %v1429, 278
    %vm1678 = vmand %vm1676, %vm1677
    %1679 = vst.msk [vmem:[#allocation3 + $0x1d] sm:$0x7] %vm1678, %v1674
    %1680 = vst [vmem:[#allocation1] sm:$0xff] %v1419
    %1681 = vst [vmem:[#allocation1 + $0x9] sm:$0xff] %v1420
    %s1682 = scalar_lea.vmem [#allocation1], 3
    %v1683 = vld [vmem:[%s1682] ss:$9 sm:$0xff]
    %1684 = vrot.lane.b32.xlu0 %v1683, 22
    %v1685 = vpop.permute.xlu0 %1684
    %v1686 = vrot.slane %v1685, 7
    %vm1687 = vcmask 179200
    %v1688 = vsel %vm1687, %v1686, %v1685
    %vm1690 = vcmp.ge.s32.totalorder %v1429, 22
    %vm1691 = vcmp.lt.s32.totalorder %v1429, 232
    %vm1692 = vmand %vm1690, %vm1691
    %1693 = vst.msk [vmem:[#allocation3 + $0x1f] sm:$0x3] %vm1692, %v1688
    %1694 = vst [vmem:[#allocation1] sm:$0xff] %v1419
    %1695 = vst [vmem:[#allocation1 + $0x9] sm:$0xff] %v1420
    %s1696 = scalar_lea.vmem [#allocation1], 4
    %v1697 = vld [vmem:[%s1696] ss:$9 sm:$0xff]
    %1698 = vrot.lane.b32.xlu0 %v1697, 104
    %v1699 = vpop.permute.xlu0 %1698
    %v1700 = vrot.slane %v1699, 7
    %v1701 = vsel %vm195, %v1700, %v1699
    %vm1703 = vcmp.ge.s32.totalorder %v1429, 104
    %vm1704 = vcmp.lt.s32.totalorder %v1429, 314
    %vm1705 = vmand %vm1703, %vm1704
    %1706 = vst.msk [vmem:[#allocation3 + $0x20] sm:$0x7] %vm1705, %v1701
    %1707 = vst [vmem:[#allocation1] sm:$0xff] %v1419
    %1708 = vst [vmem:[#allocation1 + $0x9] sm:$0xff] %v1420
    %s1709 = scalar_lea.vmem [#allocation1], 5
    %v1710 = vld [vmem:[%s1709] ss:$9 sm:$0xff]
    %1711 = vrot.lane.b32.xlu0 %v1710, 58
    %v1712 = vpop.permute.xlu0 %1711
    %v1713 = vrot.slane %v1712, 7
    %vm1714 = vcmask 474112
    %v1715 = vsel %vm1714, %v1713, %v1712
    %vm1717 = vcmp.ge.s32.totalorder %v1429, 58
    %vm1718 = vcmp.lt.s32.totalorder %v1429, 268
    %vm1719 = vmand %vm1717, %vm1718
    %1720 = vst.msk [vmem:[#allocation3 + $0x22] sm:$0x7] %vm1719, %v1715
    %1721 = vst [vmem:[#allocation1] sm:$0xff] %v1419
    %1722 = vst [vmem:[#allocation1 + $0x9] sm:$0xff] %v1420
    %s1723 = scalar_lea.vmem [#allocation1], 6
    %v1724 = vld [vmem:[%s1723] ss:$9 sm:$0xff]
    %1725 = vrot.lane.b32.xlu0 %v1724, 12
    %v1726 = vpop.permute.xlu0 %1725
    %v1727 = vrot.slane %v1726, 7
    %vm1728 = vcmask 97280
    %v1729 = vsel %vm1728, %v1727, %v1726
    %vm1731 = vcmp.ge.s32.totalorder %v1429, 12
    %vm1732 = vcmp.lt.s32.totalorder %v1429, 222
    %vm1733 = vmand %vm1731, %vm1732
    %1734 = vst.msk [vmem:[#allocation3 + $0x24] sm:$0x3] %vm1733, %v1729
    %1735 = vst [vmem:[#allocation1] sm:$0xff] %v1419
    %1736 = vst [vmem:[#allocation1 + $0x9] sm:$0xff] %v1420
    %s1737 = scalar_lea.vmem [#allocation1], 7
    %v1738 = vld [vmem:[%s1737] ss:$9 sm:$0xff]
    %1739 = vrot.lane.b32.xlu0 %v1738, 94
    %v1740 = vpop.permute.xlu0 %1739
    %v1741 = vrot.slane %v1740, 7
    %vm1742 = vcmask 769024
    %v1743 = vsel %vm1742, %v1741, %v1740
    %vm1745 = vcmp.ge.s32.totalorder %v1429, 94
    %vm1746 = vcmp.lt.s32.totalorder %v1429, 304
    %vm1747 = vmand %vm1745, %vm1746
    %1748 = vst.msk [vmem:[#allocation3 + $0x25] sm:$0x7] %vm1747, %v1743
    %v1751 = vrot.slane %v1422, 7
    %v1752 = vsel %vm1426, %v1421, %v1751
    %1753 = vrot.lane.b32.xlu0 %v1752, 48
    %v1754 = vpop.permute.xlu0 %1753
    %v1755 = vrot.slane %v1754, 7
    %vm1756 = vcmask 392192
    %v1757 = vsel %vm1756, %v1755, %v1754
    %vm1759 = vcmp.ge.s32.totalorder %v1429, 48
    %vm1760 = vcmp.lt.s32.totalorder %v1429, 258
    %vm1761 = vmand %vm1759, %vm1760
    %1762 = vst.msk [vmem:[#allocation3 + $0x27] sm:$0x7] %vm1761, %v1757
    %1763 = vst [vmem:[#allocation1] sm:$0xff] %v1421
    %1764 = vst [vmem:[#allocation1 + $0x9] sm:$0xff] %v1422
    %s1765 = scalar_lea.vmem [#allocation1], 1
    %v1766 = vld [vmem:[%s1765] ss:$9 sm:$0xff]
    %1767 = vrot.lane.b32.xlu0 %v1766, 2
    %v1768 = vpop.permute.xlu0 %1767
    %v1769 = vrot.slane %v1768, 7
    %vm1770 = vcmask 15360
    %v1771 = vsel %vm1770, %v1769, %v1768
    %vm1773 = vcmp.ge.s32.totalorder %v1429, 2
    %vm1774 = vcmp.lt.s32.totalorder %v1429, 212
    %vm1775 = vmand %vm1773, %vm1774
    %1776 = vst.msk [vmem:[#allocation3 + $0x29] sm:$0x3] %vm1775, %v1771
    %1777 = vst [vmem:[#allocation1] sm:$0xff] %v1421
    %1778 = vst [vmem:[#allocation1 + $0x9] sm:$0xff] %v1422
    %s1779 = scalar_lea.vmem [#allocation1], 2
    %v1780 = vld [vmem:[%s1779] ss:$9 sm:$0xff]
    %1781 = vrot.lane.b32.xlu0 %v1780, 84
    %v1782 = vpop.permute.xlu0 %1781
    %v1783 = vrot.slane %v1782, 7
    %vm1784 = vcmask 687104
    %v1785 = vsel %vm1784, %v1783, %v1782
    %vm1787 = vcmp.ge.s32.totalorder %v1429, 84
    %vm1788 = vcmp.lt.s32.totalorder %v1429, 294
    %vm1789 = vmand %vm1787, %vm1788
    %1790 = vst.msk [vmem:[#allocation3 + $0x2a] sm:$0x7] %vm1789, %v1785
    %1791 = vst [vmem:[#allocation1] sm:$0xff] %v1421
    %1792 = vst [vmem:[#allocation1 + $0x9] sm:$0xff] %v1422
    %s1793 = scalar_lea.vmem [#allocation1], 3
    %v1794 = vld [vmem:[%s1793] ss:$9 sm:$0xff]
    %1795 = vrot.lane.b32.xlu0 %v1794, 38
    %v1796 = vpop.permute.xlu0 %1795
    %v1797 = vrot.slane %v1796, 7
    %vm1798 = vcmask 310272
    %v1799 = vsel %vm1798, %v1797, %v1796
    %vm1801 = vcmp.ge.s32.totalorder %v1429, 38
    %vm1802 = vcmp.lt.s32.totalorder %v1429, 248
    %vm1803 = vmand %vm1801, %vm1802
    %1804 = vst.msk [vmem:[#allocation3 + $0x2c] sm:$0x3] %vm1803, %v1799
    %1805 = vst [vmem:[#allocation1] sm:$0xff] %v1421
    %1806 = vst [vmem:[#allocation1 + $0x9] sm:$0xff] %v1422
    %s1807 = scalar_lea.vmem [#allocation1], 4
    %v1808 = vld [vmem:[%s1807] ss:$9 sm:$0xff]
    %1809 = vrot.lane.b32.xlu0 %v1808, 120
    %v1810 = vpop.permute.xlu0 %1809
    %v1811 = vrot.slane %v1810, 7
    %vm1812 = vcmask 982016
    %v1813 = vsel %vm1812, %v1811, %v1810
    %vm1815 = vcmp.ge.s32.totalorder %v1429, 120
    %vm1816 = vcmp.lt.s32.totalorder %v1429, 330
    %vm1817 = vmand %vm1815, %vm1816
    %1818 = vst.msk [vmem:[#allocation3 + $0x2d] sm:$0x7] %vm1817, %v1813
    %1819 = vst [vmem:[#allocation1] sm:$0xff] %v1421
    %1820 = vst [vmem:[#allocation1 + $0x9] sm:$0xff] %v1422
    %s1821 = scalar_lea.vmem [#allocation1], 5
    %v1822 = vld [vmem:[%s1821] ss:$9 sm:$0xff]
    %1823 = vrot.lane.b32.xlu0 %v1822, 74
    %v1824 = vpop.permute.xlu0 %1823
    %v1825 = vrot.slane %v1824, 7
    %vm1826 = vcmask 605184
    %v1827 = vsel %vm1826, %v1825, %v1824
    %vm1829 = vcmp.ge.s32.totalorder %v1429, 74
    %vm1830 = vcmp.lt.s32.totalorder %v1429, 284
    %vm1831 = vmand %vm1829, %vm1830
    %1832 = vst.msk [vmem:[#allocation3 + $0x2f] sm:$0x7] %vm1831, %v1827
    %1833 = vst [vmem:[#allocation1] sm:$0xff] %v1421
    %1834 = vst [vmem:[#allocation1 + $0x9] sm:$0xff] %v1422
    %s1835 = scalar_lea.vmem [#allocation1], 6
    %v1836 = vld [vmem:[%s1835] ss:$9 sm:$0xff]
    %1837 = vrot.lane.b32.xlu0 %v1836, 28
    %v1838 = vpop.permute.xlu0 %1837
    %v1839 = vrot.slane %v1838, 7
    %v1840 = vsel %vm1017, %v1839, %v1838
    %vm1842 = vcmp.ge.s32.totalorder %v1429, 28
    %vm1843 = vcmp.lt.s32.totalorder %v1429, 238
    %vm1844 = vmand %vm1842, %vm1843
    %1845 = vst.msk [vmem:[#allocation3 + $0x31] sm:$0x3] %vm1844, %v1840
    %1846 = vst [vmem:[#allocation1] sm:$0xff] %v1421
    %1847 = vst [vmem:[#allocation1 + $0x9] sm:$0xff] %v1422
    %s1848 = scalar_lea.vmem [#allocation1], 7
    %v1849 = vld [vmem:[%s1848] ss:$9 sm:$0xff]
    %1850 = vrot.lane.b32.xlu0 %v1849, 110
    %v1851 = vpop.permute.xlu0 %1850
    %v1852 = vrot.slane %v1851, 7
    %vm1853 = vcmask 900096
    %v1854 = vsel %vm1853, %v1852, %v1851
    %vm1856 = vcmp.ge.s32.totalorder %v1429, 110
    %vm1857 = vcmp.lt.s32.totalorder %v1429, 320
    %vm1858 = vmand %vm1856, %vm1857
    %1859 = vst.msk [vmem:[#allocation3 + $0x32] sm:$0x7] %vm1858, %v1854
    %v1860 = vld [vmem:[#allocation3] sm:$0xff]
    %v1861 = vld [vmem:[#allocation3 + $0x8] sm:$0xff]
    %v1862 = vld [vmem:[#allocation3 + $0x10] sm:$0xff]
    %v1863 = vld [vmem:[#allocation3 + $0x18] sm:$0xff]
    %v1864 = vld [vmem:[#allocation3 + $0x20] sm:$0xff]
    %v1865 = vld [vmem:[#allocation3 + $0x28] sm:$0xff]
    %v1866 = vld [vmem:[#allocation3 + $0x30] sm:$0x1f]
    %v1867 = vld [vmem:[%s5] sm:$0xff]
    %v1868 = vld [vmem:[%s5 + $0x8] sm:$0xff]
    %v1869 = vld [vmem:[%s5 + $0x10] sm:$0xff]
    %v1870 = vld [vmem:[%s5 + $0x18] sm:$0xff]
    %v1871 = vld [vmem:[%s5 + $0x20] sm:$0xff]
    %v1872 = vld [vmem:[%s5 + $0x28] sm:$0xff]
    %v1873 = vld [vmem:[%s5 + $0x30] sm:$0xff]
    %v1874 = vld [vmem:[%s5 + $0x38] sm:$0xff]
    %v1875 = vld [vmem:[%s5 + $0x40] sm:$0xff]
    %v1876 = vld [vmem:[%s5 + $0x48] sm:$0xff]
    %v1877 = vld [vmem:[%s5 + $0x50] sm:$0xff]
    %v1878 = vld [vmem:[%s5 + $0x58] sm:$0xff]
    %v1879 = vld [vmem:[%s5 + $0x60] sm:$0xff]
    %v1880 = vld [vmem:[%s5 + $0x68] sm:$0xff]
    %v1881 = vld [vmem:[%s5 + $0x70] sm:$0xff]
    %v1882 = vld [vmem:[%s5 + $0x78] sm:$0xff]
    %v1883 = vld [vmem:[%s5 + $0x80] sm:$0xff]
    %v1884 = vld [vmem:[%s5 + $0x88] sm:$0xff]
    %v1885 = vld [vmem:[%s5 + $0x90] sm:$0xff]
    %v1886 = vld [vmem:[%s5 + $0x98] sm:$0xff]
    %v1887 = vld [vmem:[%s5 + $0xa0] sm:$0xff]
    %v1888 = vld [vmem:[%s5 + $0xa8] sm:$0xff]
    %v1889 = vld [vmem:[%s5 + $0xb0] sm:$0xff]
    %v1890 = vld [vmem:[%s5 + $0xb8] sm:$0xff]
    %v1891 = vld [vmem:[%s5 + $0xc0] sm:$0xff]
    %v1892 = vld [vmem:[%s5 + $0xc8] sm:$0xff]
    %v1893 = vld [vmem:[%s5 + $0xd0] sm:$0xff]
    %v1894 = vld [vmem:[%s5 + $0xd8] sm:$0xff]
    %v1895 = vld [vmem:[%s5 + $0xe0] sm:$0xff]
    %v1896 = vld [vmem:[%s5 + $0xe8] sm:$0xff]
    %v1897 = vld [vmem:[%s5 + $0xf0] sm:$0xff]
    %v1898 = vld [vmem:[%s5 + $0xf8] sm:$0xff]
    %v1899 = vld [vmem:[%s5 + $0x100] sm:$0xff]
    %v1900 = vld [vmem:[%s5 + $0x108] sm:$0xff]
    %v1901 = vld [vmem:[%s5 + $0x110] sm:$0xff]
    %v1902 = vld [vmem:[%s5 + $0x118] sm:$0xff]
    %v1903 = vld [vmem:[%s5 + $0x120] sm:$0xff]
    %v1904 = vld [vmem:[%s5 + $0x128] sm:$0xff]
    %v1905 = vld [vmem:[%s5 + $0x130] sm:$0xff]
    %v1906 = vld [vmem:[%s5 + $0x138] sm:$0xff]
    %v1907 = vld [vmem:[%s5 + $0x140] sm:$0xff]
    %v1908 = vld [vmem:[%s5 + $0x148] sm:$0xff]
    %v1909 = vld [vmem:[%s5 + $0x150] sm:$0xff]
    %v1910 = vld [vmem:[%s5 + $0x158] sm:$0xff]
    %v1911 = vld [vmem:[%s5 + $0x160] sm:$0xff]
    %v1912 = vld [vmem:[%s5 + $0x168] sm:$0xff]
    %v1913 = vld [vmem:[%s5 + $0x170] sm:$0xff]
    %v1914 = vld [vmem:[%s5 + $0x178] sm:$0xff]
    %v1915 = vld [vmem:[%s5 + $0x180] sm:$0xff]
    %v1916 = vld [vmem:[%s5 + $0x188] sm:$0xff]
    %v1917 = vld [vmem:[%s5 + $0x190] sm:$0xff]
    %v1918 = vld [vmem:[%s5 + $0x198] sm:$0xff]
    %v1919 = vld [vmem:[%s5 + $0x1a0] sm:$0xff]
    %v1920 = vld [vmem:[%s5 + $0x1a8] sm:$0xff]
    %v1921 = vld [vmem:[%s5 + $0x1b0] sm:$0xff]
    %v1922 = vld [vmem:[%s5 + $0x1b8] sm:$0xff]
    %v1923 = vld [vmem:[%s5 + $0x1c0] sm:$0xff]
    %v1924 = vld [vmem:[%s5 + $0x1c8] sm:$0xff]
    %v1925 = vld [vmem:[%s5 + $0x1d0] sm:$0xff]
    %v1926 = vld [vmem:[%s5 + $0x1d8] sm:$0xff]
    %v1927 = vld [vmem:[%s5 + $0x1e0] sm:$0xff]
    %v1928 = vld [vmem:[%s5 + $0x1e8] sm:$0xff]
    %v1929 = vld [vmem:[%s5 + $0x1f0] sm:$0xff]
    %v1930 = vld [vmem:[%s5 + $0x1f8] sm:$0xff]
    %v1931 = vld [vmem:[%s5 + $0x200] sm:$0xff]
    %v1932 = vld [vmem:[%s5 + $0x208] sm:$0xff]
    %v1933 = vld [vmem:[%s5 + $0x210] sm:$0xff]
    %v1934 = vld [vmem:[%s5 + $0x218] sm:$0xff]
    %v1935 = vld [vmem:[%s5 + $0x220] sm:$0xff]
    %v1936 = vld [vmem:[%s5 + $0x228] sm:$0xff]
    %v1937 = vld [vmem:[%s5 + $0x230] sm:$0xff]
    %v1938 = vld [vmem:[%s5 + $0x238] sm:$0xff]
    %v1939 = vld [vmem:[%s5 + $0x240] sm:$0xff]
    %v1940 = vld [vmem:[%s5 + $0x248] sm:$0xff]
    %v1941 = vld [vmem:[%s5 + $0x250] sm:$0xff]
    %v1942 = vld [vmem:[%s5 + $0x258] sm:$0xff]
    %v1943 = vld [vmem:[%s5 + $0x260] sm:$0xff]
    %v1944 = vld [vmem:[%s5 + $0x268] sm:$0xff]
    %v1945 = vld [vmem:[%s5 + $0x270] sm:$0xff]
    %v1946 = vld [vmem:[%s5 + $0x278] sm:$0xff]
    %v1947 = vld [vmem:[%s5 + $0x280] sm:$0xff]
    %v1948 = vld [vmem:[%s5 + $0x288] sm:$0xff]
    %v1949 = vld [vmem:[%s5 + $0x290] sm:$0xff]
    %v1950 = vld [vmem:[%s5 + $0x298] sm:$0xff]
    %v1951 = vld [vmem:[%s5 + $0x2a0] sm:$0xff]
    %v1952 = vld [vmem:[%s5 + $0x2a8] sm:$0xff]
    %v1953 = vld [vmem:[%s5 + $0x2b0] sm:$0xff]
    %v1954 = vld [vmem:[%s5 + $0x2b8] sm:$0xff]
    %v1955 = vld [vmem:[%s5 + $0x2c0] sm:$0xff]
    %v1956 = vld [vmem:[%s5 + $0x2c8] sm:$0xff]
    %v1957 = vld [vmem:[%s5 + $0x2d0] sm:$0xff]
    %v1958 = vld [vmem:[%s5 + $0x2d8] sm:$0xff]
    %v1959 = vld [vmem:[%s5 + $0x2e0] sm:$0xff]
    %v1960 = vld [vmem:[%s5 + $0x2e8] sm:$0xff]
    %v1961 = vld [vmem:[%s5 + $0x2f0] sm:$0xff]
    %v1962 = vld [vmem:[%s5 + $0x2f8] sm:$0xff]
    %v1963 = vld [vmem:[%s5 + $0x300] sm:$0xff]
    %v1964 = vld [vmem:[%s5 + $0x308] sm:$0xff]
    %v1965 = vld [vmem:[%s5 + $0x310] sm:$0xff]
    %v1966 = vld [vmem:[%s5 + $0x318] sm:$0xff]
    %v1967 = vld [vmem:[%s5 + $0x320] sm:$0xff]
    %v1968 = vld [vmem:[%s5 + $0x328] sm:$0xff]
    %v1969 = vld [vmem:[%s5 + $0x330] sm:$0xff]
    %v1970 = vld [vmem:[%s5 + $0x338] sm:$0xff]
    %v1971 = vld [vmem:[%s5 + $0x340] sm:$0xff]
    %v1972 = vld [vmem:[%s5 + $0x348] sm:$0xff]
    %v1973 = vld [vmem:[%s5 + $0x350] sm:$0xff]
    %v1974 = vld [vmem:[%s5 + $0x358] sm:$0xff]
    %v1975 = vld [vmem:[%s5 + $0x360] sm:$0xff]
    %v1976 = vld [vmem:[%s5 + $0x368] sm:$0xff]
    %v1977 = vld [vmem:[%s5 + $0x370] sm:$0xff]
    %v1978 = vld [vmem:[%s5 + $0x378] sm:$0xff]
    %v1979 = vld [vmem:[%s5 + $0x380] sm:$0xff]
    %v1980 = vld [vmem:[%s5 + $0x388] sm:$0xff]
    %v1981 = vld [vmem:[%s5 + $0x390] sm:$0xff]
    %v1982 = vld [vmem:[%s5 + $0x398] sm:$0xff]
    %v1983 = vld [vmem:[%s5 + $0x3a0] sm:$0xff]
    %v1984 = vld [vmem:[%s5 + $0x3a8] sm:$0xff]
    %v1985 = vld [vmem:[%s5 + $0x3b0] sm:$0xff]
    %v1986 = vld [vmem:[%s5 + $0x3b8] sm:$0xff]
    %v1987 = vld [vmem:[%s5 + $0x3c0] sm:$0xff]
    %v1988 = vld [vmem:[%s5 + $0x3c8] sm:$0xff]
    %v1989 = vld [vmem:[%s5 + $0x3d0] sm:$0xff]
    %v1990 = vld [vmem:[%s5 + $0x3d8] sm:$0xff]
    %v1991 = vld [vmem:[%s5 + $0x3e0] sm:$0xff]
    %v1992 = vld [vmem:[%s5 + $0x3e8] sm:$0xff]
    %v1993 = vld [vmem:[%s5 + $0x3f0] sm:$0xff]
    %v1994 = vld [vmem:[%s5 + $0x3f8] sm:$0xff]
    %v1995 = vld [vmem:[%s5 + $0x400] sm:$0xff]
    %v1996 = vld [vmem:[%s5 + $0x408] sm:$0xff]
    %v1997 = vld [vmem:[%s5 + $0x410] sm:$0xff]
    %v1998 = vld [vmem:[%s5 + $0x418] sm:$0xff]
    %v1999 = vld [vmem:[%s5 + $0x420] sm:$0xff]
    %v2000 = vld [vmem:[%s5 + $0x428] sm:$0xff]
    %v2001 = vld [vmem:[%s5 + $0x430] sm:$0xff]
    %v2002 = vld [vmem:[%s5 + $0x438] sm:$0xff]
    %v2003 = vld [vmem:[%s5 + $0x440] sm:$0xff]
    %v2004 = vld [vmem:[%s5 + $0x448] sm:$0xff]
    %v2005 = vld [vmem:[%s5 + $0x450] sm:$0xff]
    %v2006 = vld [vmem:[%s5 + $0x458] sm:$0xff]
    %v2007 = vld [vmem:[%s5 + $0x460] sm:$0xff]
    %v2008 = vld [vmem:[%s5 + $0x468] sm:$0xff]
    %v2009 = vld [vmem:[%s5 + $0x470] sm:$0xff]
    %v2010 = vld [vmem:[%s5 + $0x478] sm:$0xff]
    %v2011 = vld [vmem:[%s5 + $0x480] sm:$0xff]
    %v2012 = vld [vmem:[%s5 + $0x488] sm:$0xff]
    %v2013 = vld [vmem:[%s5 + $0x490] sm:$0xff]
    %v2014 = vld [vmem:[%s5 + $0x498] sm:$0xff]
    %v2015 = vld [vmem:[%s5 + $0x4a0] sm:$0xff]
    %v2016 = vld [vmem:[%s5 + $0x4a8] sm:$0xff]
    %v2017 = vld [vmem:[%s5 + $0x4b0] sm:$0xff]
    %v2018 = vld [vmem:[%s5 + $0x4b8] sm:$0xff]
    %v2019 = vld [vmem:[%s5 + $0x4c0] sm:$0xff]
    %v2020 = vld [vmem:[%s5 + $0x4c8] sm:$0xff]
    %v2021 = vld [vmem:[%s5 + $0x4d0] sm:$0xff]
    %v2022 = vld [vmem:[%s5 + $0x4d8] sm:$0xff]
    %v2023 = vld [vmem:[%s5 + $0x4e0] sm:$0xff]
    %v2024 = vld [vmem:[%s5 + $0x4e8] sm:$0xff]
    %v2025 = vld [vmem:[%s5 + $0x4f0] sm:$0xff]
    %v2026 = vld [vmem:[%s5 + $0x4f8] sm:$0xff]
    %v2027 = vld [vmem:[%s5 + $0x500] sm:$0xff]
    %v2028 = vld [vmem:[%s5 + $0x508] sm:$0xff]
    %v2029 = vld [vmem:[%s5 + $0x510] sm:$0xff]
    %v2030 = vld [vmem:[%s5 + $0x518] sm:$0xff]
    %v2031 = vld [vmem:[%s5 + $0x520] sm:$0xff]
    %v2032 = vld [vmem:[%s5 + $0x528] sm:$0xff]
    %v2033 = vld [vmem:[%s5 + $0x530] sm:$0xff]
    %v2034 = vld [vmem:[%s5 + $0x538] sm:$0xff]
    %v2035 = vld [vmem:[%s5 + $0x540] sm:$0xff]
    %v2036 = vld [vmem:[%s5 + $0x548] sm:$0xff]
    %v2037 = vld [vmem:[%s5 + $0x550] sm:$0xff]
    %v2038 = vld [vmem:[%s5 + $0x558] sm:$0xff]
    %v2039 = vld [vmem:[%s5 + $0x560] sm:$0xff]
    %v2040 = vld [vmem:[%s5 + $0x568] sm:$0xff]
    %v2041 = vld [vmem:[%s5 + $0x570] sm:$0xff]
    %v2042 = vld [vmem:[%s5 + $0x578] sm:$0xff]
    %v2043 = vld [vmem:[%s5 + $0x580] sm:$0xff]
    %v2044 = vld [vmem:[%s5 + $0x588] sm:$0xff]
    %v2045 = vld [vmem:[%s5 + $0x590] sm:$0xff]
    %v2046 = vld [vmem:[%s5 + $0x598] sm:$0xff]
    %v2047 = vld [vmem:[%s5 + $0x5a0] sm:$0xff]
    %v2048 = vld [vmem:[%s5 + $0x5a8] sm:$0xff]
    %v2049 = vld [vmem:[%s5 + $0x5b0] sm:$0xff]
    %v2050 = vld [vmem:[%s5 + $0x5b8] sm:$0xff]
    %v2051 = vld [vmem:[%s5 + $0x5c0] sm:$0xff]
    %v2052 = vld [vmem:[%s5 + $0x5c8] sm:$0xff]
    %v2053 = vld [vmem:[%s5 + $0x5d0] sm:$0xff]
    %v2054 = vld [vmem:[%s5 + $0x5d8] sm:$0xff]
    %v2055 = vld [vmem:[%s5 + $0x5e0] sm:$0xff]
    %v2056 = vld [vmem:[%s5 + $0x5e8] sm:$0xff]
    %v2057 = vld [vmem:[%s5 + $0x5f0] sm:$0xff]
    %v2058 = vld [vmem:[%s5 + $0x5f8] sm:$0xff]
    %v2059 = vld [vmem:[%s5 + $0x600] sm:$0xff]
    %v2060 = vld [vmem:[%s5 + $0x608] sm:$0xff]
    %v2061 = vld [vmem:[%s5 + $0x610] sm:$0xff]
    %v2062 = vld [vmem:[%s5 + $0x618] sm:$0xff]
    %v2063 = vld [vmem:[%s5 + $0x620] sm:$0xff]
    %v2064 = vld [vmem:[%s5 + $0x628] sm:$0xff]
    %v2065 = vld [vmem:[%s5 + $0x630] sm:$0xff]
    %v2066 = vld [vmem:[%s5 + $0x638] sm:$0xff]
    %v2067 = vld [vmem:[%s5 + $0x640] sm:$0xff]
    %v2068 = vld [vmem:[%s5 + $0x648] sm:$0xff]
    %v2069 = vld [vmem:[%s5 + $0x650] sm:$0xff]
    %v2070 = vld [vmem:[%s5 + $0x658] sm:$0xff]
    %v2071 = vld [vmem:[%s5 + $0x660] sm:$0xff]
    %v2072 = vld [vmem:[%s5 + $0x668] sm:$0xff]
    %v2073 = vld [vmem:[%s5 + $0x670] sm:$0xff]
    %v2074 = vld [vmem:[%s5 + $0x678] sm:$0xff]
    %v2075 = vld [vmem:[%s5 + $0x680] sm:$0xff]
    %v2076 = vld [vmem:[%s5 + $0x688] sm:$0xff]
    %v2077 = vld [vmem:[%s5 + $0x690] sm:$0xff]
    %v2078 = vld [vmem:[%s5 + $0x698] sm:$0xff]
    %v2079 = vld [vmem:[%s5 + $0x6a0] sm:$0xff]
    %v2080 = vld [vmem:[%s5 + $0x6a8] sm:$0xff]
    %v2081 = vld [vmem:[%s5 + $0x6b0] sm:$0xff]
    %v2082 = vld [vmem:[%s5 + $0x6b8] sm:$0xff]
    %v2083 = vld [vmem:[%s5 + $0x6c0] sm:$0xff]
    %v2084 = vld [vmem:[%s5 + $0x6c8] sm:$0xff]
    %v2085 = vld [vmem:[%s5 + $0x6d0] sm:$0xff]
    %v2086 = vld [vmem:[%s5 + $0x6d8] sm:$0xff]
    %v2087 = vld [vmem:[%s5 + $0x6e0] sm:$0xff]
    %v2088 = vld [vmem:[%s5 + $0x6e8] sm:$0xff]
    %v2089 = vld [vmem:[%s5 + $0x6f0] sm:$0xff]
    %v2090 = vld [vmem:[%s5 + $0x6f8] sm:$0xff]
    %v2091 = vld [vmem:[%s5 + $0x700] sm:$0xff]
    %v2092 = vld [vmem:[%s5 + $0x708] sm:$0xff]
    %v2093 = vld [vmem:[%s5 + $0x710] sm:$0xff]
    %v2094 = vld [vmem:[%s5 + $0x718] sm:$0xff]
    %v2095 = vld [vmem:[%s5 + $0x720] sm:$0xff]
    %v2096 = vld [vmem:[%s5 + $0x728] sm:$0xff]
    %v2097 = vld [vmem:[%s5 + $0x730] sm:$0xff]
    %v2098 = vld [vmem:[%s5 + $0x738] sm:$0xff]
    %v2099 = vld [vmem:[%s5 + $0x740] sm:$0xff]
    %v2100 = vld [vmem:[%s5 + $0x748] sm:$0xff]
    %v2101 = vld [vmem:[%s5 + $0x750] sm:$0xff]
    %v2102 = vld [vmem:[%s5 + $0x758] sm:$0xff]
    %v2103 = vld [vmem:[%s5 + $0x760] sm:$0xff]
    %v2104 = vld [vmem:[%s5 + $0x768] sm:$0xff]
    %v2105 = vld [vmem:[%s5 + $0x770] sm:$0xff]
    %v2106 = vld [vmem:[%s5 + $0x778] sm:$0xff]
    %v2107 = vld [vmem:[%s5 + $0x780] sm:$0xff]
    %v2108 = vld [vmem:[%s5 + $0x788] sm:$0xff]
    %v2109 = vld [vmem:[%s5 + $0x790] sm:$0xff]
    %v2110 = vld [vmem:[%s5 + $0x798] sm:$0xff]
    %v2111 = vld [vmem:[%s5 + $0x7a0] sm:$0xff]
    %v2112 = vld [vmem:[%s5 + $0x7a8] sm:$0xff]
    %v2113 = vld [vmem:[%s5 + $0x7b0] sm:$0xff]
    %v2114 = vld [vmem:[%s5 + $0x7b8] sm:$0xff]
    %v2115 = vld [vmem:[%s5 + $0x7c0] sm:$0xff]
    %v2116 = vld [vmem:[%s5 + $0x7c8] sm:$0xff]
    %v2117 = vld [vmem:[%s5 + $0x7d0] sm:$0xff]
    %v2118 = vld [vmem:[%s5 + $0x7d8] sm:$0xff]
    %v2119 = vld [vmem:[%s5 + $0x7e0] sm:$0xff]
    %v2120 = vld [vmem:[%s5 + $0x7e8] sm:$0xff]
    %v2121 = vld [vmem:[%s5 + $0x7f0] sm:$0xff]
    %v2122 = vld [vmem:[%s5 + $0x7f8] sm:$0xff]
    %v2123 = vld [vmem:[%s5 + $0x800] sm:$0xff]
    %v2124 = vld [vmem:[%s5 + $0x808] sm:$0xff]
    %v2125 = vld [vmem:[%s5 + $0x810] sm:$0xff]
    %v2126 = vld [vmem:[%s5 + $0x818] sm:$0xff]
    %v2127 = vld [vmem:[%s5 + $0x820] sm:$0xff]
    %v2128 = vld [vmem:[%s5 + $0x828] sm:$0xff]
    %v2129 = vld [vmem:[%s5 + $0x830] sm:$0xff]
    %v2130 = vld [vmem:[%s5 + $0x838] sm:$0xff]
    %v2131 = vld [vmem:[%s5 + $0x840] sm:$0xff]
    %v2132 = vld [vmem:[%s5 + $0x848] sm:$0xff]
    %v2133 = vld [vmem:[%s5 + $0x850] sm:$0xff]
    %v2134 = vld [vmem:[%s5 + $0x858] sm:$0xff]
    %v2135 = vld [vmem:[%s5 + $0x860] sm:$0xff]
    %v2136 = vld [vmem:[%s5 + $0x868] sm:$0xff]
    %v2137 = vld [vmem:[%s5 + $0x870] sm:$0xff]
    %v2138 = vld [vmem:[%s5 + $0x878] sm:$0xff]
    %v2139 = vld [vmem:[%s5 + $0x880] sm:$0xff]
    %v2140 = vld [vmem:[%s5 + $0x888] sm:$0xff]
    %v2141 = vld [vmem:[%s5 + $0x890] sm:$0xff]
    %v2142 = vld [vmem:[%s5 + $0x898] sm:$0xff]
    %v2143 = vld [vmem:[%s5 + $0x8a0] sm:$0xff]
    %v2144 = vld [vmem:[%s5 + $0x8a8] sm:$0xff]
    %v2145 = vld [vmem:[%s5 + $0x8b0] sm:$0xff]
    %v2146 = vld [vmem:[%s5 + $0x8b8] sm:$0xff]
    %v2147 = vld [vmem:[%s5 + $0x8c0] sm:$0xff]
    %v2148 = vld [vmem:[%s5 + $0x8c8] sm:$0xff]
    %v2149 = vld [vmem:[%s5 + $0x8d0] sm:$0xff]
    %v2150 = vld [vmem:[%s5 + $0x8d8] sm:$0xff]
    %v2151 = vld [vmem:[%s5 + $0x8e0] sm:$0xff]
    %v2152 = vld [vmem:[%s5 + $0x8e8] sm:$0xff]
    %v2153 = vld [vmem:[%s5 + $0x8f0] sm:$0xff]
    %v2154 = vld [vmem:[%s5 + $0x8f8] sm:$0xff]
    %v2155 = vld [vmem:[%s5 + $0x900] sm:$0xff]
    %v2156 = vld [vmem:[%s5 + $0x908] sm:$0xff]
    %v2157 = vld [vmem:[%s5 + $0x910] sm:$0xff]
    %v2158 = vld [vmem:[%s5 + $0x918] sm:$0xff]
    %v2159 = vld [vmem:[%s5 + $0x920] sm:$0xff]
    %v2160 = vld [vmem:[%s5 + $0x928] sm:$0xff]
    %v2161 = vld [vmem:[%s5 + $0x930] sm:$0xff]
    %v2162 = vld [vmem:[%s5 + $0x938] sm:$0xff]
    %v2163 = vld [vmem:[%s5 + $0x940] sm:$0xff]
    %v2164 = vld [vmem:[%s5 + $0x948] sm:$0xff]
    %v2165 = vld [vmem:[%s5 + $0x950] sm:$0xff]
    %v2166 = vld [vmem:[%s5 + $0x958] sm:$0xff]
    %v2167 = vld [vmem:[%s5 + $0x960] sm:$0xff]
    %v2168 = vld [vmem:[%s5 + $0x968] sm:$0xff]
    %v2169 = vld [vmem:[%s5 + $0x970] sm:$0xff]
    %v2170 = vld [vmem:[%s5 + $0x978] sm:$0xff]
    %v2171 = vld [vmem:[%s5 + $0x980] sm:$0xff]
    %v2172 = vld [vmem:[%s5 + $0x988] sm:$0xff]
    %v2173 = vld [vmem:[%s5 + $0x990] sm:$0xff]
    %v2174 = vld [vmem:[%s5 + $0x998] sm:$0xff]
    %v2175 = vld [vmem:[%s5 + $0x9a0] sm:$0xff]
    %v2176 = vld [vmem:[%s5 + $0x9a8] sm:$0xff]
    %v2177 = vld [vmem:[%s5 + $0x9b0] sm:$0xff]
    %v2178 = vld [vmem:[%s5 + $0x9b8] sm:$0xff]
    %v2179 = vld [vmem:[%s5 + $0x9c0] sm:$0xff]
    %v2180 = vld [vmem:[%s5 + $0x9c8] sm:$0xff]
    %v2181 = vld [vmem:[%s5 + $0x9d0] sm:$0xff]
    %v2182 = vld [vmem:[%s5 + $0x9d8] sm:$0xff]
    %v2183 = vld [vmem:[%s5 + $0x9e0] sm:$0xff]
    %v2184 = vld [vmem:[%s5 + $0x9e8] sm:$0xff]
    %v2185 = vld [vmem:[%s5 + $0x9f0] sm:$0xff]
    %v2186 = vld [vmem:[%s5 + $0x9f8] sm:$0xff]
    %v2187 = vld [vmem:[%s5 + $0xa00] sm:$0xff]
    %v2188 = vld [vmem:[%s5 + $0xa08] sm:$0xff]
    %v2189 = vld [vmem:[%s5 + $0xa10] sm:$0xff]
    %v2190 = vld [vmem:[%s5 + $0xa18] sm:$0xff]
    %v2191 = vld [vmem:[%s5 + $0xa20] sm:$0xff]
    %v2192 = vld [vmem:[%s5 + $0xa28] sm:$0xff]
    %v2193 = vld [vmem:[%s5 + $0xa30] sm:$0xff]
    %v2194 = vld [vmem:[%s5 + $0xa38] sm:$0xff]
    %v2195 = vld [vmem:[%s5 + $0xa40] sm:$0xff]
    %v2196 = vld [vmem:[%s5 + $0xa48] sm:$0xff]
    %v2197 = vld [vmem:[%s5 + $0xa50] sm:$0xff]
    %v2198 = vld [vmem:[%s5 + $0xa58] sm:$0xff]
    %v2199 = vld [vmem:[%s5 + $0xa60] sm:$0xff]
    %v2200 = vld [vmem:[%s5 + $0xa68] sm:$0xff]
    %v2201 = vld [vmem:[%s5 + $0xa70] sm:$0xff]
    %v2202 = vld [vmem:[%s5 + $0xa78] sm:$0xff]
    %v2203 = vld [vmem:[%s5 + $0xa80] sm:$0xff]
    %v2204 = vld [vmem:[%s5 + $0xa88] sm:$0xff]
    %v2205 = vld [vmem:[%s5 + $0xa90] sm:$0xff]
    %v2206 = vld [vmem:[%s5 + $0xa98] sm:$0xff]
    %v2207 = vld [vmem:[%s5 + $0xaa0] sm:$0xff]
    %v2208 = vld [vmem:[%s5 + $0xaa8] sm:$0xff]
    %v2209 = vld [vmem:[%s5 + $0xab0] sm:$0xff]
    %v2210 = vld [vmem:[%s5 + $0xab8] sm:$0xff]
    %v2211 = vld [vmem:[%s5 + $0xac0] sm:$0xff]
    %v2212 = vld [vmem:[%s5 + $0xac8] sm:$0xff]
    %v2213 = vld [vmem:[%s5 + $0xad0] sm:$0xff]
    %v2214 = vld [vmem:[%s5 + $0xad8] sm:$0xff]
    %v2215 = vld [vmem:[%s5 + $0xae0] sm:$0xff]
    %v2216 = vld [vmem:[%s5 + $0xae8] sm:$0xff]
    %v2217 = vld [vmem:[%s5 + $0xaf0] sm:$0xff]
    %v2218 = vld [vmem:[%s5 + $0xaf8] sm:$0xff]
    %v2219 = vld [vmem:[%s5 + $0xb00] sm:$0xff]
    %v2220 = vld [vmem:[%s5 + $0xb08] sm:$0xff]
    %v2221 = vld [vmem:[%s5 + $0xb10] sm:$0xff]
    %v2222 = vld [vmem:[%s5 + $0xb18] sm:$0xff]
    %v2223 = vld [vmem:[%s5 + $0xb20] sm:$0xff]
    %v2224 = vld [vmem:[%s5 + $0xb28] sm:$0xff]
    %v2225 = vld [vmem:[%s5 + $0xb30] sm:$0xff]
    %v2226 = vld [vmem:[%s5 + $0xb38] sm:$0xff]
    %v2227 = vld [vmem:[%s5 + $0xb40] sm:$0xff]
    %v2228 = vld [vmem:[%s5 + $0xb48] sm:$0xff]
    %v2229 = vld [vmem:[%s5 + $0xb50] sm:$0xff]
    %v2230 = vld [vmem:[%s5 + $0xb58] sm:$0xff]
    %v2231 = vld [vmem:[%s5 + $0xb60] sm:$0xff]
    %v2232 = vld [vmem:[%s5 + $0xb68] sm:$0xff]
    %v2233 = vld [vmem:[%s5 + $0xb70] sm:$0xff]
    %v2234 = vld [vmem:[%s5 + $0xb78] sm:$0xff]
    %v2235 = vld [vmem:[%s5 + $0xb80] sm:$0xff]
    %v2236 = vld [vmem:[%s5 + $0xb88] sm:$0xff]
    %v2237 = vld [vmem:[%s5 + $0xb90] sm:$0xff]
    %v2238 = vld [vmem:[%s5 + $0xb98] sm:$0xff]
    %v2239 = vld [vmem:[%s5 + $0xba0] sm:$0xff]
    %v2240 = vld [vmem:[%s5 + $0xba8] sm:$0xff]
    %v2241 = vld [vmem:[%s5 + $0xbb0] sm:$0xff]
    %v2242 = vld [vmem:[%s5 + $0xbb8] sm:$0xff]
    %v2243 = vld [vmem:[%s5 + $0xbc0] sm:$0xff]
    %v2244 = vld [vmem:[%s5 + $0xbc8] sm:$0xff]
    %v2245 = vld [vmem:[%s5 + $0xbd0] sm:$0xff]
    %v2246 = vld [vmem:[%s5 + $0xbd8] sm:$0xff]
    %v2247 = vld [vmem:[%s5 + $0xbe0] sm:$0xff]
    %v2248 = vld [vmem:[%s5 + $0xbe8] sm:$0xff]
    %v2249 = vld [vmem:[%s5 + $0xbf0] sm:$0xff]
    %v2250 = vld [vmem:[%s5 + $0xbf8] sm:$0xff]
    %v2251 = vld [vmem:[%s5 + $0xc00] sm:$0xff]
    %v2252 = vld [vmem:[%s5 + $0xc08] sm:$0xff]
    %v2253 = vld [vmem:[%s5 + $0xc10] sm:$0xff]
    %v2254 = vld [vmem:[%s5 + $0xc18] sm:$0xff]
    %v2255 = vld [vmem:[%s5 + $0xc20] sm:$0xff]
    %v2256 = vld [vmem:[%s5 + $0xc28] sm:$0xff]
    %v2257 = vld [vmem:[%s5 + $0xc30] sm:$0xff]
    %v2258 = vld [vmem:[%s5 + $0xc38] sm:$0xff]
    %v2259 = vld [vmem:[%s5 + $0xc40] sm:$0xff]
    %v2260 = vld [vmem:[%s5 + $0xc48] sm:$0xff]
    %v2261 = vld [vmem:[%s5 + $0xc50] sm:$0xff]
    %v2262 = vld [vmem:[%s5 + $0xc58] sm:$0xff]
    %v2263 = vld [vmem:[%s5 + $0xc60] sm:$0xff]
    %v2264 = vld [vmem:[%s5 + $0xc68] sm:$0xff]
    %v2265 = vld [vmem:[%s5 + $0xc70] sm:$0xff]
    %v2266 = vld [vmem:[%s5 + $0xc78] sm:$0xff]
    %v2267 = vld [vmem:[%s5 + $0xc80] sm:$0xff]
    %v2268 = vld [vmem:[%s5 + $0xc88] sm:$0xff]
    %v2269 = vld [vmem:[%s5 + $0xc90] sm:$0xff]
    %v2270 = vld [vmem:[%s5 + $0xc98] sm:$0xff]
    %v2271 = vld [vmem:[%s5 + $0xca0] sm:$0xff]
    %v2272 = vld [vmem:[%s5 + $0xca8] sm:$0xff]
    %v2273 = vld [vmem:[%s5 + $0xcb0] sm:$0xff]
    %v2274 = vld [vmem:[%s5 + $0xcb8] sm:$0xff]
    %v2275 = vld [vmem:[%s5 + $0xcc0] sm:$0xff]
    %v2276 = vld [vmem:[%s5 + $0xcc8] sm:$0xff]
    %v2277 = vld [vmem:[%s5 + $0xcd0] sm:$0xff]
    %v2278 = vld [vmem:[%s5 + $0xcd8] sm:$0xff]
    %v2279 = vld [vmem:[%s5 + $0xce0] sm:$0xff]
    %v2280 = vld [vmem:[%s5 + $0xce8] sm:$0xff]
    %v2281 = vld [vmem:[%s5 + $0xcf0] sm:$0xff]
    %v2282 = vld [vmem:[%s5 + $0xcf8] sm:$0xff]
    %v2283 = vld [vmem:[%s5 + $0xd00] sm:$0xff]
    %v2284 = vld [vmem:[%s5 + $0xd08] sm:$0xff]
    %v2285 = vld [vmem:[%s5 + $0xd10] sm:$0xff]
    %v2286 = vld [vmem:[%s5 + $0xd18] sm:$0xff]
    %v2287 = vld [vmem:[%s5 + $0xd20] sm:$0xff]
    %v2288 = vld [vmem:[%s5 + $0xd28] sm:$0xff]
    %v2289 = vld [vmem:[%s5 + $0xd30] sm:$0xff]
    %v2290 = vld [vmem:[%s5 + $0xd38] sm:$0xff]
    %v2291 = vld [vmem:[%s5 + $0xd40] sm:$0xff]
    %v2292 = vld [vmem:[%s5 + $0xd48] sm:$0xff]
    %v2293 = vld [vmem:[%s5 + $0xd50] sm:$0xff]
    %v2294 = vld [vmem:[%s5 + $0xd58] sm:$0xff]
    %v2295 = vld [vmem:[%s5 + $0xd60] sm:$0xff]
    %v2296 = vld [vmem:[%s5 + $0xd68] sm:$0xff]
    %v2297 = vld [vmem:[%s5 + $0xd70] sm:$0xff]
    %v2298 = vld [vmem:[%s5 + $0xd78] sm:$0xff]
    %v2299 = vld [vmem:[%s5 + $0xd80] sm:$0xff]
    %v2300 = vld [vmem:[%s5 + $0xd88] sm:$0xff]
    %v2301 = vld [vmem:[%s5 + $0xd90] sm:$0xff]
    %v2302 = vld [vmem:[%s5 + $0xd98] sm:$0xff]
    %v2303 = vld [vmem:[%s5 + $0xda0] sm:$0xff]
    %v2304 = vld [vmem:[%s5 + $0xda8] sm:$0xff]
    %v2305 = vld [vmem:[%s5 + $0xdb0] sm:$0xff]
    %v2306 = vld [vmem:[%s5 + $0xdb8] sm:$0xff]
    %v2307 = vld [vmem:[%s5 + $0xdc0] sm:$0xff]
    %v2308 = vld [vmem:[%s5 + $0xdc8] sm:$0xff]
    %v2309 = vld [vmem:[%s5 + $0xdd0] sm:$0xff]
    %v2310 = vld [vmem:[%s5 + $0xdd8] sm:$0xff]
    %v2311 = vld [vmem:[%s5 + $0xde0] sm:$0xff]
    %v2312 = vld [vmem:[%s5 + $0xde8] sm:$0xff]
    %v2313 = vld [vmem:[%s5 + $0xdf0] sm:$0xff]
    %v2314 = vld [vmem:[%s5 + $0xdf8] sm:$0xff]
    %v2315 = vld [vmem:[%s5 + $0xe00] sm:$0xff]
    %v2316 = vld [vmem:[%s5 + $0xe08] sm:$0xff]
    %v2317 = vld [vmem:[%s5 + $0xe10] sm:$0xff]
    %v2318 = vld [vmem:[%s5 + $0xe18] sm:$0xff]
    %v2319 = vld [vmem:[%s5 + $0xe20] sm:$0xff]
    %v2320 = vld [vmem:[%s5 + $0xe28] sm:$0xff]
    %v2321 = vld [vmem:[%s5 + $0xe30] sm:$0xff]
    %v2322 = vld [vmem:[%s5 + $0xe38] sm:$0xff]
    %v2323 = vld [vmem:[%s5 + $0xe40] sm:$0xff]
    %v2324 = vld [vmem:[%s5 + $0xe48] sm:$0xff]
    %v2325 = vld [vmem:[%s5 + $0xe50] sm:$0xff]
    %v2326 = vld [vmem:[%s5 + $0xe58] sm:$0xff]
    %v2327 = vld [vmem:[%s5 + $0xe60] sm:$0xff]
    %v2328 = vld [vmem:[%s5 + $0xe68] sm:$0xff]
    %v2329 = vld [vmem:[%s5 + $0xe70] sm:$0xff]
    %v2330 = vld [vmem:[%s5 + $0xe78] sm:$0xff]
    %v2331 = vld [vmem:[%s5 + $0xe80] sm:$0xff]
    %v2332 = vld [vmem:[%s5 + $0xe88] sm:$0xff]
    %v2333 = vld [vmem:[%s5 + $0xe90] sm:$0xff]
    %v2334 = vld [vmem:[%s5 + $0xe98] sm:$0xff]
    %v2335 = vld [vmem:[%s5 + $0xea0] sm:$0xff]
    %v2336 = vld [vmem:[%s5 + $0xea8] sm:$0xff]
    %v2337 = vld [vmem:[%s5 + $0xeb0] sm:$0xff]
    %v2338 = vld [vmem:[%s5 + $0xeb8] sm:$0xff]
    %v2339 = vld [vmem:[%s5 + $0xec0] sm:$0xff]
    %v2340 = vld [vmem:[%s5 + $0xec8] sm:$0xff]
    %v2341 = vld [vmem:[%s5 + $0xed0] sm:$0xff]
    %v2342 = vld [vmem:[%s5 + $0xed8] sm:$0xff]
    %v2343 = vld [vmem:[%s5 + $0xee0] sm:$0xff]
    %v2344 = vld [vmem:[%s5 + $0xee8] sm:$0xff]
    %v2345 = vld [vmem:[%s5 + $0xef0] sm:$0xff]
    %v2346 = vld [vmem:[%s5 + $0xef8] sm:$0xff]
    %v2347 = vld [vmem:[%s5 + $0xf00] sm:$0xff]
    %v2348 = vld [vmem:[%s5 + $0xf08] sm:$0xff]
    %v2349 = vld [vmem:[%s5 + $0xf10] sm:$0xff]
    %v2350 = vld [vmem:[%s5 + $0xf18] sm:$0xff]
    %v2351 = vld [vmem:[%s5 + $0xf20] sm:$0xff]
    %v2352 = vld [vmem:[%s5 + $0xf28] sm:$0xff]
    %v2353 = vld [vmem:[%s5 + $0xf30] sm:$0xff]
    %v2354 = vld [vmem:[%s5 + $0xf38] sm:$0xff]
    %v2355 = vld [vmem:[%s5 + $0xf40] sm:$0xff]
    %v2356 = vld [vmem:[%s5 + $0xf48] sm:$0xff]
    %v2357 = vld [vmem:[%s5 + $0xf50] sm:$0xff]
    %v2358 = vld [vmem:[%s5 + $0xf58] sm:$0xff]
    %v2359 = vld [vmem:[%s5 + $0xf60] sm:$0xff]
    %v2360 = vld [vmem:[%s5 + $0xf68] sm:$0xff]
    %v2361 = vld [vmem:[%s5 + $0xf70] sm:$0xff]
    %v2362 = vld [vmem:[%s5 + $0xf78] sm:$0xff]
    %v2363 = vld [vmem:[%s5 + $0xf80] sm:$0xff]
    %v2364 = vld [vmem:[%s5 + $0xf88] sm:$0xff]
    %v2365 = vld [vmem:[%s5 + $0xf90] sm:$0xff]
    %v2366 = vld [vmem:[%s5 + $0xf98] sm:$0xff]
    %v2367 = vld [vmem:[%s5 + $0xfa0] sm:$0xff]
    %v2368 = vld [vmem:[%s5 + $0xfa8] sm:$0xff]
    %v2369 = vld [vmem:[%s5 + $0xfb0] sm:$0xff]
    %v2370 = vld [vmem:[%s5 + $0xfb8] sm:$0xff]
    %v2371 = vld [vmem:[%s5 + $0xfc0] sm:$0xff]
    %v2372 = vld [vmem:[%s5 + $0xfc8] sm:$0xff]
    %v2373 = vld [vmem:[%s5 + $0xfd0] sm:$0xff]
    %v2374 = vld [vmem:[%s5 + $0xfd8] sm:$0xff]
    %v2375 = vld [vmem:[%s5 + $0xfe0] sm:$0xff]
    %v2376 = vld [vmem:[%s5 + $0xfe8] sm:$0xff]
    %v2377 = vld [vmem:[%s5 + $0xff0] sm:$0xff]
    %v2378 = vld [vmem:[%s5 + $0xff8] sm:$0xff]
    %v2379 = vld [vmem:[%s5 + $0x1000] sm:$0xff]
    %v2380 = vld [vmem:[%s5 + $0x1008] sm:$0xff]
    %v2381 = vld [vmem:[%s5 + $0x1010] sm:$0xff]
    %v2382 = vld [vmem:[%s5 + $0x1018] sm:$0xff]
    %v2383 = vld [vmem:[%s5 + $0x1020] sm:$0xff]
    %v2384 = vld [vmem:[%s5 + $0x1028] sm:$0xff]
    %v2385 = vld [vmem:[%s5 + $0x1030] sm:$0xff]
    %v2386 = vld [vmem:[%s5 + $0x1038] sm:$0xff]
    %v2387 = vld [vmem:[%s5 + $0x1040] sm:$0xff]
    %v2388 = vld [vmem:[%s5 + $0x1048] sm:$0xff]
    %v2389 = vld [vmem:[%s5 + $0x1050] sm:$0xff]
    %v2390 = vld [vmem:[%s5 + $0x1058] sm:$0xff]
    %v2391 = vld [vmem:[%s5 + $0x1060] sm:$0xff]
    %v2392 = vld [vmem:[%s5 + $0x1068] sm:$0xff]
    %v2393 = vld [vmem:[%s5 + $0x1070] sm:$0xff]
    %v2394 = vld [vmem:[%s5 + $0x1078] sm:$0xff]
    %v2395 = vld [vmem:[%s5 + $0x1080] sm:$0xff]
    %v2396 = vld [vmem:[%s5 + $0x1088] sm:$0xff]
    %v2397 = vld [vmem:[%s5 + $0x1090] sm:$0xff]
    %v2398 = vld [vmem:[%s5 + $0x1098] sm:$0xff]
    %v2399 = vld [vmem:[%s5 + $0x10a0] sm:$0xff]
    %v2400 = vld [vmem:[%s5 + $0x10a8] sm:$0xff]
    %v2401 = vld [vmem:[%s5 + $0x10b0] sm:$0xff]
    %v2402 = vld [vmem:[%s5 + $0x10b8] sm:$0xff]
    %v2403 = vld [vmem:[%s5 + $0x10c0] sm:$0xff]
    %v2404 = vld [vmem:[%s5 + $0x10c8] sm:$0xff]
    %v2405 = vld [vmem:[%s5 + $0x10d0] sm:$0xff]
    %v2406 = vld [vmem:[%s5 + $0x10d8] sm:$0xff]
    %v2407 = vld [vmem:[%s5 + $0x10e0] sm:$0xff]
    %v2408 = vld [vmem:[%s5 + $0x10e8] sm:$0xff]
    %v2409 = vld [vmem:[%s5 + $0x10f0] sm:$0xff]
    %v2410 = vld [vmem:[%s5 + $0x10f8] sm:$0xff]
    %v2411 = vld [vmem:[%s5 + $0x1100] sm:$0xff]
    %v2412 = vld [vmem:[%s5 + $0x1108] sm:$0xff]
    %v2413 = vld [vmem:[%s5 + $0x1110] sm:$0xff]
    %v2414 = vld [vmem:[%s5 + $0x1118] sm:$0xff]
    %v2415 = vld [vmem:[%s5 + $0x1120] sm:$0xff]
    %v2416 = vld [vmem:[%s5 + $0x1128] sm:$0xff]
    %v2417 = vld [vmem:[%s5 + $0x1130] sm:$0xff]
    %v2418 = vld [vmem:[%s5 + $0x1138] sm:$0xff]
    %v2419 = vld [vmem:[%s5 + $0x1140] sm:$0xff]
    %v2420 = vld [vmem:[%s5 + $0x1148] sm:$0xff]
    %v2421 = vld [vmem:[%s5 + $0x1150] sm:$0xff]
    %v2422 = vld [vmem:[%s5 + $0x1158] sm:$0xff]
    %v2423 = vld [vmem:[%s5 + $0x1160] sm:$0xff]
    %v2424 = vld [vmem:[%s5 + $0x1168] sm:$0xff]
    %v2425 = vld [vmem:[%s5 + $0x1170] sm:$0xff]
    %v2426 = vld [vmem:[%s5 + $0x1178] sm:$0xff]
    %v2427 = vld [vmem:[%s5 + $0x1180] sm:$0xff]
    %v2428 = vld [vmem:[%s5 + $0x1188] sm:$0xff]
    %v2429 = vld [vmem:[%s5 + $0x1190] sm:$0xff]
    %v2430 = vld [vmem:[%s5 + $0x1198] sm:$0xff]
    %v2431 = vld [vmem:[%s5 + $0x11a0] sm:$0xff]
    %v2432 = vld [vmem:[%s5 + $0x11a8] sm:$0xff]
    %v2433 = vld [vmem:[%s5 + $0x11b0] sm:$0xff]
    %v2434 = vld [vmem:[%s5 + $0x11b8] sm:$0xff]
    %v2435 = vld [vmem:[%s5 + $0x11c0] sm:$0xff]
    %v2436 = vld [vmem:[%s5 + $0x11c8] sm:$0xff]
    %v2437 = vld [vmem:[%s5 + $0x11d0] sm:$0xff]
    %v2438 = vld [vmem:[%s5 + $0x11d8] sm:$0xff]
    %v2439 = vld [vmem:[%s5 + $0x11e0] sm:$0xff]
    %v2440 = vld [vmem:[%s5 + $0x11e8] sm:$0xff]
    %v2441 = vld [vmem:[%s5 + $0x11f0] sm:$0xff]
    %v2442 = vld [vmem:[%s5 + $0x11f8] sm:$0xff]
    %v2443 = vld [vmem:[%s5 + $0x1200] sm:$0xff]
    %v2444 = vld [vmem:[%s5 + $0x1208] sm:$0xff]
    %v2445 = vld [vmem:[%s5 + $0x1210] sm:$0xff]
    %v2446 = vld [vmem:[%s5 + $0x1218] sm:$0xff]
    %v2447 = vld [vmem:[%s5 + $0x1220] sm:$0xff]
    %v2448 = vld [vmem:[%s5 + $0x1228] sm:$0xff]
    %v2449 = vld [vmem:[%s5 + $0x1230] sm:$0xff]
    %v2450 = vld [vmem:[%s5 + $0x1238] sm:$0xff]
    %v2451 = vld [vmem:[%s5 + $0x1240] sm:$0xff]
    %v2452 = vld [vmem:[%s5 + $0x1248] sm:$0xff]
    %v2453 = vld [vmem:[%s5 + $0x1250] sm:$0xff]
    %v2454 = vld [vmem:[%s5 + $0x1258] sm:$0xff]
    %v2455 = vld [vmem:[%s5 + $0x1260] sm:$0xff]
    %v2456 = vld [vmem:[%s5 + $0x1268] sm:$0xff]
    %v2457 = vld [vmem:[%s5 + $0x1270] sm:$0xff]
    %v2458 = vld [vmem:[%s5 + $0x1278] sm:$0xff]
    %v2459 = vld [vmem:[%s5 + $0x1280] sm:$0xff]
    %v2460 = vld [vmem:[%s5 + $0x1288] sm:$0xff]
    %v2461 = vld [vmem:[%s5 + $0x1290] sm:$0xff]
    %v2462 = vld [vmem:[%s5 + $0x1298] sm:$0xff]
    %v2463 = vld [vmem:[%s5 + $0x12a0] sm:$0xff]
    %v2464 = vld [vmem:[%s5 + $0x12a8] sm:$0xff]
    %v2465 = vld [vmem:[%s5 + $0x12b0] sm:$0xff]
    %v2466 = vld [vmem:[%s5 + $0x12b8] sm:$0xff]
    %v2467 = vld [vmem:[%s5 + $0x12c0] sm:$0xff]
    %v2468 = vld [vmem:[%s5 + $0x12c8] sm:$0xff]
    %v2469 = vld [vmem:[%s5 + $0x12d0] sm:$0xff]
    %v2470 = vld [vmem:[%s5 + $0x12d8] sm:$0xff]
    %v2471 = vld [vmem:[%s5 + $0x12e0] sm:$0xff]
    %v2472 = vld [vmem:[%s5 + $0x12e8] sm:$0xff]
    %v2473 = vld [vmem:[%s5 + $0x12f0] sm:$0xff]
    %v2474 = vld [vmem:[%s5 + $0x12f8] sm:$0xff]
    %v2475 = vld [vmem:[%s5 + $0x1300] sm:$0xff]
    %v2476 = vld [vmem:[%s5 + $0x1308] sm:$0xff]
    %v2477 = vld [vmem:[%s5 + $0x1310] sm:$0xff]
    %v2478 = vld [vmem:[%s5 + $0x1318] sm:$0xff]
    %v2479 = vld [vmem:[%s5 + $0x1320] sm:$0xff]
    %v2480 = vld [vmem:[%s5 + $0x1328] sm:$0xff]
    %v2481 = vld [vmem:[%s5 + $0x1330] sm:$0xff]
    %v2482 = vld [vmem:[%s5 + $0x1338] sm:$0xff]
    %v2483 = vld [vmem:[%s5 + $0x1340] sm:$0xff]
    %v2484 = vld [vmem:[%s5 + $0x1348] sm:$0xff]
    %v2485 = vld [vmem:[%s5 + $0x1350] sm:$0xff]
    %v2486 = vld [vmem:[%s5 + $0x1358] sm:$0xff]
    %v2487 = vld [vmem:[%s5 + $0x1360] sm:$0xff]
    %v2488 = vld [vmem:[%s5 + $0x1368] sm:$0xff]
    %v2489 = vld [vmem:[%s5 + $0x1370] sm:$0xff]
    %v2490 = vld [vmem:[%s5 + $0x1378] sm:$0xff]
    %v2491 = vld [vmem:[%s5 + $0x1380] sm:$0xff]
    %v2492 = vld [vmem:[%s5 + $0x1388] sm:$0xff]
    %v2493 = vld [vmem:[%s5 + $0x1390] sm:$0xff]
    %v2494 = vld [vmem:[%s5 + $0x1398] sm:$0xff]
    %v2495 = vld [vmem:[%s5 + $0x13a0] sm:$0xff]
    %v2496 = vld [vmem:[%s5 + $0x13a8] sm:$0xff]
    %v2497 = vld [vmem:[%s5 + $0x13b0] sm:$0xff]
    %v2498 = vld [vmem:[%s5 + $0x13b8] sm:$0xff]
    %v2499 = vld [vmem:[%s5 + $0x13c0] sm:$0xff]
    %v2500 = vld [vmem:[%s5 + $0x13c8] sm:$0xff]
    %v2501 = vld [vmem:[%s5 + $0x13d0] sm:$0xff]
    %v2502 = vld [vmem:[%s5 + $0x13d8] sm:$0xff]
    %v2503 = vld [vmem:[%s5 + $0x13e0] sm:$0xff]
    %v2504 = vld [vmem:[%s5 + $0x13e8] sm:$0xff]
    %v2505 = vld [vmem:[%s5 + $0x13f0] sm:$0xff]
    %v2506 = vld [vmem:[%s5 + $0x13f8] sm:$0xff]
    %v2507 = vld [vmem:[%s5 + $0x1400] sm:$0xff]
    %v2508 = vld [vmem:[%s5 + $0x1408] sm:$0xff]
    %v2509 = vld [vmem:[%s5 + $0x1410] sm:$0xff]
    %v2510 = vld [vmem:[%s5 + $0x1418] sm:$0xff]
    %v2511 = vld [vmem:[%s5 + $0x1420] sm:$0xff]
    %v2512 = vld [vmem:[%s5 + $0x1428] sm:$0xff]
    %v2513 = vld [vmem:[%s5 + $0x1430] sm:$0xff]
    %v2514 = vld [vmem:[%s5 + $0x1438] sm:$0xff]
    %v2515 = vld [vmem:[%s5 + $0x1440] sm:$0xff]
    %v2516 = vld [vmem:[%s5 + $0x1448] sm:$0xff]
    %v2517 = vld [vmem:[%s5 + $0x1450] sm:$0xff]
    %v2518 = vld [vmem:[%s5 + $0x1458] sm:$0xff]
    %v2519 = vld [vmem:[%s5 + $0x1460] sm:$0xff]
    %v2520 = vld [vmem:[%s5 + $0x1468] sm:$0xff]
    %v2521 = vld [vmem:[%s5 + $0x1470] sm:$0xff]
    %v2522 = vld [vmem:[%s5 + $0x1478] sm:$0xff]
    %v2523 = vld [vmem:[%s5 + $0x1480] sm:$0xff]
    %v2524 = vld [vmem:[%s5 + $0x1488] sm:$0xff]
    %v2525 = vld [vmem:[%s5 + $0x1490] sm:$0xff]
    %v2526 = vld [vmem:[%s5 + $0x1498] sm:$0xff]
    %v2527 = vld [vmem:[%s5 + $0x14a0] sm:$0xff]
    %v2528 = vld [vmem:[%s5 + $0x14a8] sm:$0xff]
    %v2529 = vld [vmem:[%s5 + $0x14b0] sm:$0xff]
    %v2530 = vld [vmem:[%s5 + $0x14b8] sm:$0xff]
    %v2531 = vld [vmem:[%s5 + $0x14c0] sm:$0xff]
    %v2532 = vld [vmem:[%s5 + $0x14c8] sm:$0xff]
    %v2533 = vld [vmem:[%s5 + $0x14d0] sm:$0xff]
    %v2534 = vld [vmem:[%s5 + $0x14d8] sm:$0xff]
    %v2535 = vld [vmem:[%s5 + $0x14e0] sm:$0xff]
    %v2536 = vld [vmem:[%s5 + $0x14e8] sm:$0xff]
    %v2537 = vld [vmem:[%s5 + $0x14f0] sm:$0xff]
    %v2538 = vld [vmem:[%s5 + $0x14f8] sm:$0xff]
    %v2539 = vld [vmem:[%s5 + $0x1500] sm:$0xff]
    %v2540 = vld [vmem:[%s5 + $0x1508] sm:$0xff]
    %v2541 = vld [vmem:[%s5 + $0x1510] sm:$0xff]
    %v2542 = vld [vmem:[%s5 + $0x1518] sm:$0xff]
    %v2543 = vld [vmem:[%s5 + $0x1520] sm:$0xff]
    %v2544 = vld [vmem:[%s5 + $0x1528] sm:$0xff]
    %v2545 = vld [vmem:[%s5 + $0x1530] sm:$0xff]
    %v2546 = vld [vmem:[%s5 + $0x1538] sm:$0xff]
    %v2547 = vld [vmem:[%s5 + $0x1540] sm:$0xff]
    %v2548 = vld [vmem:[%s5 + $0x1548] sm:$0xff]
    %v2549 = vld [vmem:[%s5 + $0x1550] sm:$0xff]
    %v2550 = vld [vmem:[%s5 + $0x1558] sm:$0xff]
    %v2551 = vld [vmem:[%s5 + $0x1560] sm:$0xff]
    %v2552 = vld [vmem:[%s5 + $0x1568] sm:$0xff]
    %v2553 = vld [vmem:[%s5 + $0x1570] sm:$0xff]
    %v2554 = vld [vmem:[%s5 + $0x1578] sm:$0xff]
    %v2555 = vld [vmem:[%s5 + $0x1580] sm:$0xff]
    %v2556 = vld [vmem:[%s5 + $0x1588] sm:$0xff]
    %v2557 = vld [vmem:[%s5 + $0x1590] sm:$0xff]
    %v2558 = vld [vmem:[%s5 + $0x1598] sm:$0xff]
    %v2559 = vld [vmem:[%s5 + $0x15a0] sm:$0xff]
    %v2560 = vld [vmem:[%s5 + $0x15a8] sm:$0xff]
    %v2561 = vld [vmem:[%s5 + $0x15b0] sm:$0xff]
    %v2562 = vld [vmem:[%s5 + $0x15b8] sm:$0xff]
    %v2563 = vld [vmem:[%s5 + $0x15c0] sm:$0xff]
    %v2564 = vld [vmem:[%s5 + $0x15c8] sm:$0xff]
    %v2565 = vld [vmem:[%s5 + $0x15d0] sm:$0xff]
    %v2566 = vld [vmem:[%s5 + $0x15d8] sm:$0xff]
    %v2567 = vld [vmem:[%s5 + $0x15e0] sm:$0xff]
    %v2568 = vld [vmem:[%s5 + $0x15e8] sm:$0xff]
    %v2569 = vld [vmem:[%s5 + $0x15f0] sm:$0xff]
    %v2570 = vld [vmem:[%s5 + $0x15f8] sm:$0xff]
    %v2571 = vld [vmem:[%s5 + $0x1600] sm:$0xff]
    %v2572 = vld [vmem:[%s5 + $0x1608] sm:$0xff]
    %v2573 = vld [vmem:[%s5 + $0x1610] sm:$0xff]
    %v2574 = vld [vmem:[%s5 + $0x1618] sm:$0xff]
    %v2575 = vld [vmem:[%s5 + $0x1620] sm:$0xff]
    %v2576 = vld [vmem:[%s5 + $0x1628] sm:$0xff]
    %v2577 = vld [vmem:[%s5 + $0x1630] sm:$0xff]
    %v2578 = vld [vmem:[%s5 + $0x1638] sm:$0xff]
    %v2579 = vld [vmem:[%s5 + $0x1640] sm:$0xff]
    %v2580 = vld [vmem:[%s5 + $0x1648] sm:$0xff]
    %v2581 = vld [vmem:[%s5 + $0x1650] sm:$0xff]
    %v2582 = vld [vmem:[%s5 + $0x1658] sm:$0xff]
    %v2583 = vld [vmem:[%s5 + $0x1660] sm:$0xff]
    %v2584 = vld [vmem:[%s5 + $0x1668] sm:$0xff]
    %v2585 = vld [vmem:[%s5 + $0x1670] sm:$0xff]
    %v2586 = vld [vmem:[%s5 + $0x1678] sm:$0xff]
    %v2587 = vld [vmem:[%s5 + $0x1680] sm:$0xff]
    %v2588 = vld [vmem:[%s5 + $0x1688] sm:$0xff]
    %v2589 = vld [vmem:[%s5 + $0x1690] sm:$0xff]
    %v2590 = vld [vmem:[%s5 + $0x1698] sm:$0xff]
    %v2591 = vld [vmem:[%s5 + $0x16a0] sm:$0xff]
    %v2592 = vld [vmem:[%s5 + $0x16a8] sm:$0xff]
    %v2593 = vld [vmem:[%s5 + $0x16b0] sm:$0xff]
    %v2594 = vld [vmem:[%s5 + $0x16b8] sm:$0xff]
    %v2595 = vld [vmem:[%s5 + $0x16c0] sm:$0xff]
    %v2596 = vld [vmem:[%s5 + $0x16c8] sm:$0xff]
    %v2597 = vld [vmem:[%s5 + $0x16d0] sm:$0xff]
    %v2598 = vld [vmem:[%s5 + $0x16d8] sm:$0xff]
    %v2599 = vld [vmem:[%s5 + $0x16e0] sm:$0xff]
    %v2600 = vld [vmem:[%s5 + $0x16e8] sm:$0xff]
    %v2601 = vld [vmem:[%s5 + $0x16f0] sm:$0xff]
    %v2602 = vld [vmem:[%s5 + $0x16f8] sm:$0xff]
    %v2603 = vld [vmem:[%s5 + $0x1700] sm:$0xff]
    %v2604 = vld [vmem:[%s5 + $0x1708] sm:$0xff]
    %v2605 = vld [vmem:[%s5 + $0x1710] sm:$0xff]
    %v2606 = vld [vmem:[%s5 + $0x1718] sm:$0xff]
    %v2607 = vld [vmem:[%s5 + $0x1720] sm:$0xff]
    %v2608 = vld [vmem:[%s5 + $0x1728] sm:$0xff]
    %v2609 = vld [vmem:[%s5 + $0x1730] sm:$0xff]
    %v2610 = vld [vmem:[%s5 + $0x1738] sm:$0xff]
    %v2611 = vld [vmem:[%s5 + $0x1740] sm:$0xff]
    %v2612 = vld [vmem:[%s5 + $0x1748] sm:$0xff]
    %v2613 = vld [vmem:[%s5 + $0x1750] sm:$0xff]
    %v2614 = vld [vmem:[%s5 + $0x1758] sm:$0xff]
    %v2615 = vld [vmem:[%s5 + $0x1760] sm:$0xff]
    %v2616 = vld [vmem:[%s5 + $0x1768] sm:$0xff]
    %v2617 = vld [vmem:[%s5 + $0x1770] sm:$0xff]
    %v2618 = vld [vmem:[%s5 + $0x1778] sm:$0xff]
    %v2619 = vld [vmem:[%s5 + $0x1780] sm:$0xff]
    %v2620 = vld [vmem:[%s5 + $0x1788] sm:$0xff]
    %v2621 = vld [vmem:[%s5 + $0x1790] sm:$0xff]
    %v2622 = vld [vmem:[%s5 + $0x1798] sm:$0xff]
    %v2623 = vld [vmem:[%s5 + $0x17a0] sm:$0xff]
    %v2624 = vld [vmem:[%s5 + $0x17a8] sm:$0xff]
    %v2625 = vld [vmem:[%s5 + $0x17b0] sm:$0xff]
    %v2626 = vld [vmem:[%s5 + $0x17b8] sm:$0xff]
    %v2627 = vld [vmem:[%s5 + $0x17c0] sm:$0xff]
    %v2628 = vld [vmem:[%s5 + $0x17c8] sm:$0xff]
    %v2629 = vld [vmem:[%s5 + $0x17d0] sm:$0xff]
    %v2630 = vld [vmem:[%s5 + $0x17d8] sm:$0xff]
    %v2631 = vld [vmem:[%s5 + $0x17e0] sm:$0xff]
    %v2632 = vld [vmem:[%s5 + $0x17e8] sm:$0xff]
    %v2633 = vld [vmem:[%s5 + $0x17f0] sm:$0xff]
    %v2634 = vld [vmem:[%s5 + $0x17f8] sm:$0xff]
    %v2635 = vld [vmem:[%s5 + $0x1800] sm:$0xff]
    %v2636 = vld [vmem:[%s5 + $0x1808] sm:$0xff]
    %v2637 = vld [vmem:[%s5 + $0x1810] sm:$0xff]
    %v2638 = vld [vmem:[%s5 + $0x1818] sm:$0xff]
    %v2639 = vld [vmem:[%s5 + $0x1820] sm:$0xff]
    %v2640 = vld [vmem:[%s5 + $0x1828] sm:$0xff]
    %v2641 = vld [vmem:[%s5 + $0x1830] sm:$0xff]
    %v2642 = vld [vmem:[%s5 + $0x1838] sm:$0xff]
    %v2643 = vld [vmem:[%s5 + $0x1840] sm:$0xff]
    %v2644 = vld [vmem:[%s5 + $0x1848] sm:$0xff]
    %v2645 = vld [vmem:[%s5 + $0x1850] sm:$0xff]
    %v2646 = vld [vmem:[%s5 + $0x1858] sm:$0xff]
    %v2647 = vld [vmem:[%s5 + $0x1860] sm:$0xff]
    %v2648 = vld [vmem:[%s5 + $0x1868] sm:$0xff]
    %v2649 = vld [vmem:[%s5 + $0x1870] sm:$0xff]
    %v2650 = vld [vmem:[%s5 + $0x1878] sm:$0xff]
    %v2651 = vld [vmem:[%s5 + $0x1880] sm:$0xff]
    %v2652 = vld [vmem:[%s5 + $0x1888] sm:$0xff]
    %v2653 = vld [vmem:[%s5 + $0x1890] sm:$0xff]
    %v2654 = vld [vmem:[%s5 + $0x1898] sm:$0xff]
    %v2655 = vld [vmem:[%s5 + $0x18a0] sm:$0xff]
    %v2656 = vld [vmem:[%s5 + $0x18a8] sm:$0xff]
    %v2657 = vld [vmem:[%s5 + $0x18b0] sm:$0xff]
    %v2658 = vld [vmem:[%s5 + $0x18b8] sm:$0xff]
    %v2659 = vld [vmem:[%s5 + $0x18c0] sm:$0xff]
    %v2660 = vld [vmem:[%s5 + $0x18c8] sm:$0xff]
    %v2661 = vld [vmem:[%s5 + $0x18d0] sm:$0xff]
    %v2662 = vld [vmem:[%s5 + $0x18d8] sm:$0xff]
    %v2663 = vld [vmem:[%s5 + $0x18e0] sm:$0xff]
    %v2664 = vld [vmem:[%s5 + $0x18e8] sm:$0xff]
    %v2665 = vld [vmem:[%s5 + $0x18f0] sm:$0xff]
    %v2666 = vld [vmem:[%s5 + $0x18f8] sm:$0xff]
    %v2667 = vld [vmem:[%s5 + $0x1900] sm:$0xff]
    %v2668 = vld [vmem:[%s5 + $0x1908] sm:$0xff]
    %v2669 = vld [vmem:[%s5 + $0x1910] sm:$0xff]
    %v2670 = vld [vmem:[%s5 + $0x1918] sm:$0xff]
    %v2671 = vld [vmem:[%s5 + $0x1920] sm:$0xff]
    %v2672 = vld [vmem:[%s5 + $0x1928] sm:$0xff]
    %v2673 = vld [vmem:[%s5 + $0x1930] sm:$0xff]
    %v2674 = vld [vmem:[%s5 + $0x1938] sm:$0xff]
    %v2675 = vld [vmem:[%s5 + $0x1940] sm:$0xff]
    %v2676 = vld [vmem:[%s5 + $0x1948] sm:$0xff]
    %v2677 = vld [vmem:[%s5 + $0x1950] sm:$0xff]
    %v2678 = vld [vmem:[%s5 + $0x1958] sm:$0xff]
    %v2679 = vld [vmem:[%s5 + $0x1960] sm:$0xff]
    %v2680 = vld [vmem:[%s5 + $0x1968] sm:$0xff]
    %v2681 = vld [vmem:[%s5 + $0x1970] sm:$0xff]
    %v2682 = vld [vmem:[%s5 + $0x1978] sm:$0xff]
    %v2683 = vld [vmem:[%s5 + $0x1980] sm:$0xff]
    %v2684 = vld [vmem:[%s5 + $0x1988] sm:$0xff]
    %v2685 = vld [vmem:[%s5 + $0x1990] sm:$0xff]
    %v2686 = vld [vmem:[%s5 + $0x1998] sm:$0xff]
    %v2687 = vld [vmem:[%s5 + $0x19a0] sm:$0xff]
    %v2688 = vld [vmem:[%s5 + $0x19a8] sm:$0xff]
    %v2689 = vld [vmem:[%s5 + $0x19b0] sm:$0xff]
    %v2690 = vld [vmem:[%s5 + $0x19b8] sm:$0xff]
    %v2691 = vld [vmem:[%s5 + $0x19c0] sm:$0xff]
    %v2692 = vld [vmem:[%s5 + $0x19c8] sm:$0xff]
    %v2693 = vld [vmem:[%s5 + $0x19d0] sm:$0xff]
    %v2694 = vld [vmem:[%s5 + $0x19d8] sm:$0xff]
    %v2695 = vld [vmem:[%s5 + $0x19e0] sm:$0xff]
    %v2696 = vld [vmem:[%s5 + $0x19e8] sm:$0xff]
    %v2697 = vld [vmem:[%s5 + $0x19f0] sm:$0xff]
    %v2698 = vld [vmem:[%s5 + $0x19f8] sm:$0xff]
    %v2699 = vld [vmem:[%s5 + $0x1a00] sm:$0xff]
    %v2700 = vld [vmem:[%s5 + $0x1a08] sm:$0xff]
    %v2701 = vld [vmem:[%s5 + $0x1a10] sm:$0xff]
    %v2702 = vld [vmem:[%s5 + $0x1a18] sm:$0xff]
    %v2703 = vld [vmem:[%s5 + $0x1a20] sm:$0xff]
    %v2704 = vld [vmem:[%s5 + $0x1a28] sm:$0xff]
    %v2705 = vld [vmem:[%s5 + $0x1a30] sm:$0xff]
    %v2706 = vld [vmem:[%s5 + $0x1a38] sm:$0xff]
    %v2707 = vld [vmem:[%s6] sm:$0x1]
    %v2715 = vperm.slane %v1860, 0
    %v2716 = vperm.slane %v1860, 1
    %v2717 = vperm.slane %v1860, 2
    %v2718 = vperm.slane %v1860, 3
    %v2719 = vperm.slane %v1860, 4
    %v2720 = vperm.slane %v1860, 5
    %v2721 = vperm.slane %v1860, 6
    %v2722 = vperm.slane %v1860, 7
    %v2723 = vperm.slane %v1861, 0
    %v2724 = vperm.slane %v1861, 1
    %v2725 = vperm.slane %v1861, 2
    %v2726 = vperm.slane %v1861, 3
    %v2727 = vperm.slane %v1861, 4
    %v2728 = vperm.slane %v1861, 5
    %v2729 = vperm.slane %v1861, 6
    %v2730 = vperm.slane %v1861, 7
    %v2731 = vperm.slane %v1862, 0
    %v2732 = vperm.slane %v1862, 1
    %v2733 = vperm.slane %v1862, 2
    %v2734 = vperm.slane %v1862, 3
    %v2735 = vperm.slane %v1862, 4
    %v2736 = vperm.slane %v1862, 5
    %v2737 = vperm.slane %v1862, 6
    %v2738 = vperm.slane %v1862, 7
    %v2739 = vperm.slane %v1863, 0
    %v2740 = vperm.slane %v1863, 1
    %v2741 = vperm.slane %v1863, 2
    %v2742 = vperm.slane %v1863, 3
    %v2743 = vperm.slane %v1863, 4
    %v2744 = vperm.slane %v1863, 5
    %v2745 = vperm.slane %v1863, 6
    %v2746 = vperm.slane %v1863, 7
    %v2747 = vperm.slane %v1864, 0
    %v2748 = vperm.slane %v1864, 1
    %v2749 = vperm.slane %v1864, 2
    %v2750 = vperm.slane %v1864, 3
    %v2751 = vperm.slane %v1864, 4
    %v2752 = vperm.slane %v1864, 5
    %v2753 = vperm.slane %v1864, 6
    %v2754 = vperm.slane %v1864, 7
    %v2755 = vperm.slane %v1865, 0
    %v2756 = vperm.slane %v1865, 1
    %v2757 = vperm.slane %v1865, 2
    %v2758 = vperm.slane %v1865, 3
    %v2759 = vperm.slane %v1865, 4
    %v2760 = vperm.slane %v1865, 5
    %v2761 = vperm.slane %v1865, 6
    %v2762 = vperm.slane %v1865, 7
    %v2763 = vperm.slane %v1866, 0
    %v2764 = vperm.slane %v1866, 1
    %v2765 = vperm.slane %v1866, 2
    %v2766 = vperm.slane %v1866, 3
    %v2767 = vperm.slane %v1866, 4
    %vm2820 = vcmask 523264
    %v2821 = vsel %vm2820, %v2767, 0
    %2823 = vmatpush.msra.mxu0 %v1882
    %2824 = vmatpush.msra.mxu0 %v1881
    %2825 = vmatpush.msra.mxu0 %v1880
    %2826 = vmatpush.msra.mxu0 %v1879
    %2827 = vmatpush.msra.mxu0 %v1878
    %2828 = vmatpush.msra.mxu0 %v1877
    %2829 = vmatpush.msra.mxu0 %v1876
    %2830 = vmatpush.msra.mxu0 %v1875
    %2831 = vmatpush.msra.mxu0 %v1874
    %2832 = vmatpush.msra.mxu0 %v1873
    %2833 = vmatpush.msra.mxu0 %v1872
    %2834 = vmatpush.msra.mxu0 %v1871
    %2835 = vmatpush.msra.mxu0 %v1870
    %2836 = vmatpush.msra.mxu0 %v1869
    %2837 = vmatpush.msra.mxu0 %v1868
    %2838 = vmatpush.msra.mxu0 %v1867
    %2839 = vmatmul.f32.gmra.mxu0 %v2715
    %v2840 = vpop.f32.mrf.mxu0
    %v2841 = vadd.f32 %v2707, %v2840
    %2842 = vdwg.mxu0
    %2843 = vmatpush.msra.mxu0 %v1898
    %2844 = vmatpush.msra.mxu0 %v1897
    %2845 = vmatpush.msra.mxu0 %v1896
    %2846 = vmatpush.msra.mxu0 %v1895
    %2847 = vmatpush.msra.mxu0 %v1894
    %2848 = vmatpush.msra.mxu0 %v1893
    %2849 = vmatpush.msra.mxu0 %v1892
    %2850 = vmatpush.msra.mxu0 %v1891
    %2851 = vmatpush.msra.mxu0 %v1890
    %2852 = vmatpush.msra.mxu0 %v1889
    %2853 = vmatpush.msra.mxu0 %v1888
    %2854 = vmatpush.msra.mxu0 %v1887
    %2855 = vmatpush.msra.mxu0 %v1886
    %2856 = vmatpush.msra.mxu0 %v1885
    %2857 = vmatpush.msra.mxu0 %v1884
    %2858 = vmatpush.msra.mxu0 %v1883
    %2859 = vmatmul.f32.gmra.mxu0 %v2716
    %v2860 = vpop.f32.mrf.mxu0
    %v2861 = vadd.f32 %v2841, %v2860
    %2862 = vdwg.mxu0
    %2863 = vmatpush.msra.mxu0 %v1914
    %2864 = vmatpush.msra.mxu0 %v1913
    %2865 = vmatpush.msra.mxu0 %v1912
    %2866 = vmatpush.msra.mxu0 %v1911
    %2867 = vmatpush.msra.mxu0 %v1910
    %2868 = vmatpush.msra.mxu0 %v1909
    %2869 = vmatpush.msra.mxu0 %v1908
    %2870 = vmatpush.msra.mxu0 %v1907
    %2871 = vmatpush.msra.mxu0 %v1906
    %2872 = vmatpush.msra.mxu0 %v1905
    %2873 = vmatpush.msra.mxu0 %v1904
    %2874 = vmatpush.msra.mxu0 %v1903
    %2875 = vmatpush.msra.mxu0 %v1902
    %2876 = vmatpush.msra.mxu0 %v1901
    %2877 = vmatpush.msra.mxu0 %v1900
    %2878 = vmatpush.msra.mxu0 %v1899
    %2879 = vmatmul.f32.gmra.mxu0 %v2717
    %v2880 = vpop.f32.mrf.mxu0
    %v2881 = vadd.f32 %v2861, %v2880
    %2882 = vdwg.mxu0
    %2883 = vmatpush.msra.mxu0 %v1930
    %2884 = vmatpush.msra.mxu0 %v1929
    %2885 = vmatpush.msra.mxu0 %v1928
    %2886 = vmatpush.msra.mxu0 %v1927
    %2887 = vmatpush.msra.mxu0 %v1926
    %2888 = vmatpush.msra.mxu0 %v1925
    %2889 = vmatpush.msra.mxu0 %v1924
    %2890 = vmatpush.msra.mxu0 %v1923
    %2891 = vmatpush.msra.mxu0 %v1922
    %2892 = vmatpush.msra.mxu0 %v1921
    %2893 = vmatpush.msra.mxu0 %v1920
    %2894 = vmatpush.msra.mxu0 %v1919
    %2895 = vmatpush.msra.mxu0 %v1918
    %2896 = vmatpush.msra.mxu0 %v1917
    %2897 = vmatpush.msra.mxu0 %v1916
    %2898 = vmatpush.msra.mxu0 %v1915
    %2899 = vmatmul.f32.gmra.mxu0 %v2718
    %v2900 = vpop.f32.mrf.mxu0
    %v2901 = vadd.f32 %v2881, %v2900
    %2902 = vdwg.mxu0
    %2903 = vmatpush.msra.mxu0 %v1946
    %2904 = vmatpush.msra.mxu0 %v1945
    %2905 = vmatpush.msra.mxu0 %v1944
    %2906 = vmatpush.msra.mxu0 %v1943
    %2907 = vmatpush.msra.mxu0 %v1942
    %2908 = vmatpush.msra.mxu0 %v1941
    %2909 = vmatpush.msra.mxu0 %v1940
    %2910 = vmatpush.msra.mxu0 %v1939
    %2911 = vmatpush.msra.mxu0 %v1938
    %2912 = vmatpush.msra.mxu0 %v1937
    %2913 = vmatpush.msra.mxu0 %v1936
    %2914 = vmatpush.msra.mxu0 %v1935
    %2915 = vmatpush.msra.mxu0 %v1934
    %2916 = vmatpush.msra.mxu0 %v1933
    %2917 = vmatpush.msra.mxu0 %v1932
    %2918 = vmatpush.msra.mxu0 %v1931
    %2919 = vmatmul.f32.gmra.mxu0 %v2719
    %v2920 = vpop.f32.mrf.mxu0
    %v2921 = vadd.f32 %v2901, %v2920
    %2922 = vdwg.mxu0
    %2923 = vmatpush.msra.mxu0 %v1962
    %2924 = vmatpush.msra.mxu0 %v1961
    %2925 = vmatpush.msra.mxu0 %v1960
    %2926 = vmatpush.msra.mxu0 %v1959
    %2927 = vmatpush.msra.mxu0 %v1958
    %2928 = vmatpush.msra.mxu0 %v1957
    %2929 = vmatpush.msra.mxu0 %v1956
    %2930 = vmatpush.msra.mxu0 %v1955
    %2931 = vmatpush.msra.mxu0 %v1954
    %2932 = vmatpush.msra.mxu0 %v1953
    %2933 = vmatpush.msra.mxu0 %v1952
    %2934 = vmatpush.msra.mxu0 %v1951
    %2935 = vmatpush.msra.mxu0 %v1950
    %2936 = vmatpush.msra.mxu0 %v1949
    %2937 = vmatpush.msra.mxu0 %v1948
    %2938 = vmatpush.msra.mxu0 %v1947
    %2939 = vmatmul.f32.gmra.mxu0 %v2720
    %v2940 = vpop.f32.mrf.mxu0
    %v2941 = vadd.f32 %v2921, %v2940
    %2942 = vdwg.mxu0
    %2943 = vmatpush.msra.mxu0 %v1978
    %2944 = vmatpush.msra.mxu0 %v1977
    %2945 = vmatpush.msra.mxu0 %v1976
    %2946 = vmatpush.msra.mxu0 %v1975
    %2947 = vmatpush.msra.mxu0 %v1974
    %2948 = vmatpush.msra.mxu0 %v1973
    %2949 = vmatpush.msra.mxu0 %v1972
    %2950 = vmatpush.msra.mxu0 %v1971
    %2951 = vmatpush.msra.mxu0 %v1970
    %2952 = vmatpush.msra.mxu0 %v1969
    %2953 = vmatpush.msra.mxu0 %v1968
    %2954 = vmatpush.msra.mxu0 %v1967
    %2955 = vmatpush.msra.mxu0 %v1966
    %2956 = vmatpush.msra.mxu0 %v1965
    %2957 = vmatpush.msra.mxu0 %v1964
    %2958 = vmatpush.msra.mxu0 %v1963
    %2959 = vmatmul.f32.gmra.mxu0 %v2721
    %v2960 = vpop.f32.mrf.mxu0
    %v2961 = vadd.f32 %v2941, %v2960
    %2962 = vdwg.mxu0
    %2963 = vmatpush.msra.mxu0 %v1994
    %2964 = vmatpush.msra.mxu0 %v1993
    %2965 = vmatpush.msra.mxu0 %v1992
    %2966 = vmatpush.msra.mxu0 %v1991
    %2967 = vmatpush.msra.mxu0 %v1990
    %2968 = vmatpush.msra.mxu0 %v1989
    %2969 = vmatpush.msra.mxu0 %v1988
    %2970 = vmatpush.msra.mxu0 %v1987
    %2971 = vmatpush.msra.mxu0 %v1986
    %2972 = vmatpush.msra.mxu0 %v1985
    %2973 = vmatpush.msra.mxu0 %v1984
    %2974 = vmatpush.msra.mxu0 %v1983
    %2975 = vmatpush.msra.mxu0 %v1982
    %2976 = vmatpush.msra.mxu0 %v1981
    %2977 = vmatpush.msra.mxu0 %v1980
    %2978 = vmatpush.msra.mxu0 %v1979
    %2979 = vmatmul.f32.gmra.mxu0 %v2722
    %v2980 = vpop.f32.mrf.mxu0
    %v2981 = vadd.f32 %v2961, %v2980
    %2982 = vdwg.mxu0
    %2983 = vmatpush.msra.mxu0 %v2010
    %2984 = vmatpush.msra.mxu0 %v2009
    %2985 = vmatpush.msra.mxu0 %v2008
    %2986 = vmatpush.msra.mxu0 %v2007
    %2987 = vmatpush.msra.mxu0 %v2006
    %2988 = vmatpush.msra.mxu0 %v2005
    %2989 = vmatpush.msra.mxu0 %v2004
    %2990 = vmatpush.msra.mxu0 %v2003
    %2991 = vmatpush.msra.mxu0 %v2002
    %2992 = vmatpush.msra.mxu0 %v2001
    %2993 = vmatpush.msra.mxu0 %v2000
    %2994 = vmatpush.msra.mxu0 %v1999
    %2995 = vmatpush.msra.mxu0 %v1998
    %2996 = vmatpush.msra.mxu0 %v1997
    %2997 = vmatpush.msra.mxu0 %v1996
    %2998 = vmatpush.msra.mxu0 %v1995
    %2999 = vmatmul.f32.gmra.mxu0 %v2723
    %v3000 = vpop.f32.mrf.mxu0
    %v3001 = vadd.f32 %v2981, %v3000
    %3002 = vdwg.mxu0
    %3003 = vmatpush.msra.mxu0 %v2026
    %3004 = vmatpush.msra.mxu0 %v2025
    %3005 = vmatpush.msra.mxu0 %v2024
    %3006 = vmatpush.msra.mxu0 %v2023
    %3007 = vmatpush.msra.mxu0 %v2022
    %3008 = vmatpush.msra.mxu0 %v2021
    %3009 = vmatpush.msra.mxu0 %v2020
    %3010 = vmatpush.msra.mxu0 %v2019
    %3011 = vmatpush.msra.mxu0 %v2018
    %3012 = vmatpush.msra.mxu0 %v2017
    %3013 = vmatpush.msra.mxu0 %v2016
    %3014 = vmatpush.msra.mxu0 %v2015
    %3015 = vmatpush.msra.mxu0 %v2014
    %3016 = vmatpush.msra.mxu0 %v2013
    %3017 = vmatpush.msra.mxu0 %v2012
    %3018 = vmatpush.msra.mxu0 %v2011
    %3019 = vmatmul.f32.gmra.mxu0 %v2724
    %v3020 = vpop.f32.mrf.mxu0
    %v3021 = vadd.f32 %v3001, %v3020
    %3022 = vdwg.mxu0
    %3023 = vmatpush.msra.mxu0 %v2042
    %3024 = vmatpush.msra.mxu0 %v2041
    %3025 = vmatpush.msra.mxu0 %v2040
    %3026 = vmatpush.msra.mxu0 %v2039
    %3027 = vmatpush.msra.mxu0 %v2038
    %3028 = vmatpush.msra.mxu0 %v2037
    %3029 = vmatpush.msra.mxu0 %v2036
    %3030 = vmatpush.msra.mxu0 %v2035
    %3031 = vmatpush.msra.mxu0 %v2034
    %3032 = vmatpush.msra.mxu0 %v2033
    %3033 = vmatpush.msra.mxu0 %v2032
    %3034 = vmatpush.msra.mxu0 %v2031
    %3035 = vmatpush.msra.mxu0 %v2030
    %3036 = vmatpush.msra.mxu0 %v2029
    %3037 = vmatpush.msra.mxu0 %v2028
    %3038 = vmatpush.msra.mxu0 %v2027
    %3039 = vmatmul.f32.gmra.mxu0 %v2725
    %v3040 = vpop.f32.mrf.mxu0
    %v3041 = vadd.f32 %v3021, %v3040
    %3042 = vdwg.mxu0
    %3043 = vmatpush.msra.mxu0 %v2058
    %3044 = vmatpush.msra.mxu0 %v2057
    %3045 = vmatpush.msra.mxu0 %v2056
    %3046 = vmatpush.msra.mxu0 %v2055
    %3047 = vmatpush.msra.mxu0 %v2054
    %3048 = vmatpush.msra.mxu0 %v2053
    %3049 = vmatpush.msra.mxu0 %v2052
    %3050 = vmatpush.msra.mxu0 %v2051
    %3051 = vmatpush.msra.mxu0 %v2050
    %3052 = vmatpush.msra.mxu0 %v2049
    %3053 = vmatpush.msra.mxu0 %v2048
    %3054 = vmatpush.msra.mxu0 %v2047
    %3055 = vmatpush.msra.mxu0 %v2046
    %3056 = vmatpush.msra.mxu0 %v2045
    %3057 = vmatpush.msra.mxu0 %v2044
    %3058 = vmatpush.msra.mxu0 %v2043
    %3059 = vmatmul.f32.gmra.mxu0 %v2726
    %v3060 = vpop.f32.mrf.mxu0
    %v3061 = vadd.f32 %v3041, %v3060
    %3062 = vdwg.mxu0
    %3063 = vmatpush.msra.mxu0 %v2074
    %3064 = vmatpush.msra.mxu0 %v2073
    %3065 = vmatpush.msra.mxu0 %v2072
    %3066 = vmatpush.msra.mxu0 %v2071
    %3067 = vmatpush.msra.mxu0 %v2070
    %3068 = vmatpush.msra.mxu0 %v2069
    %3069 = vmatpush.msra.mxu0 %v2068
    %3070 = vmatpush.msra.mxu0 %v2067
    %3071 = vmatpush.msra.mxu0 %v2066
    %3072 = vmatpush.msra.mxu0 %v2065
    %3073 = vmatpush.msra.mxu0 %v2064
    %3074 = vmatpush.msra.mxu0 %v2063
    %3075 = vmatpush.msra.mxu0 %v2062
    %3076 = vmatpush.msra.mxu0 %v2061
    %3077 = vmatpush.msra.mxu0 %v2060
    %3078 = vmatpush.msra.mxu0 %v2059
    %3079 = vmatmul.f32.gmra.mxu0 %v2727
    %v3080 = vpop.f32.mrf.mxu0
    %v3081 = vadd.f32 %v3061, %v3080
    %3082 = vdwg.mxu0
    %3083 = vmatpush.msra.mxu0 %v2090
    %3084 = vmatpush.msra.mxu0 %v2089
    %3085 = vmatpush.msra.mxu0 %v2088
    %3086 = vmatpush.msra.mxu0 %v2087
    %3087 = vmatpush.msra.mxu0 %v2086
    %3088 = vmatpush.msra.mxu0 %v2085
    %3089 = vmatpush.msra.mxu0 %v2084
    %3090 = vmatpush.msra.mxu0 %v2083
    %3091 = vmatpush.msra.mxu0 %v2082
    %3092 = vmatpush.msra.mxu0 %v2081
    %3093 = vmatpush.msra.mxu0 %v2080
    %3094 = vmatpush.msra.mxu0 %v2079
    %3095 = vmatpush.msra.mxu0 %v2078
    %3096 = vmatpush.msra.mxu0 %v2077
    %3097 = vmatpush.msra.mxu0 %v2076
    %3098 = vmatpush.msra.mxu0 %v2075
    %3099 = vmatmul.f32.gmra.mxu0 %v2728
    %v3100 = vpop.f32.mrf.mxu0
    %v3101 = vadd.f32 %v3081, %v3100
    %3102 = vdwg.mxu0
    %3103 = vmatpush.msra.mxu0 %v2106
    %3104 = vmatpush.msra.mxu0 %v2105
    %3105 = vmatpush.msra.mxu0 %v2104
    %3106 = vmatpush.msra.mxu0 %v2103
    %3107 = vmatpush.msra.mxu0 %v2102
    %3108 = vmatpush.msra.mxu0 %v2101
    %3109 = vmatpush.msra.mxu0 %v2100
    %3110 = vmatpush.msra.mxu0 %v2099
    %3111 = vmatpush.msra.mxu0 %v2098
    %3112 = vmatpush.msra.mxu0 %v2097
    %3113 = vmatpush.msra.mxu0 %v2096
    %3114 = vmatpush.msra.mxu0 %v2095
    %3115 = vmatpush.msra.mxu0 %v2094
    %3116 = vmatpush.msra.mxu0 %v2093
    %3117 = vmatpush.msra.mxu0 %v2092
    %3118 = vmatpush.msra.mxu0 %v2091
    %3119 = vmatmul.f32.gmra.mxu0 %v2729
    %v3120 = vpop.f32.mrf.mxu0
    %v3121 = vadd.f32 %v3101, %v3120
    %3122 = vdwg.mxu0
    %3123 = vmatpush.msra.mxu0 %v2122
    %3124 = vmatpush.msra.mxu0 %v2121
    %3125 = vmatpush.msra.mxu0 %v2120
    %3126 = vmatpush.msra.mxu0 %v2119
    %3127 = vmatpush.msra.mxu0 %v2118
    %3128 = vmatpush.msra.mxu0 %v2117
    %3129 = vmatpush.msra.mxu0 %v2116
    %3130 = vmatpush.msra.mxu0 %v2115
    %3131 = vmatpush.msra.mxu0 %v2114
    %3132 = vmatpush.msra.mxu0 %v2113
    %3133 = vmatpush.msra.mxu0 %v2112
    %3134 = vmatpush.msra.mxu0 %v2111
    %3135 = vmatpush.msra.mxu0 %v2110
    %3136 = vmatpush.msra.mxu0 %v2109
    %3137 = vmatpush.msra.mxu0 %v2108
    %3138 = vmatpush.msra.mxu0 %v2107
    %3139 = vmatmul.f32.gmra.mxu0 %v2730
    %v3140 = vpop.f32.mrf.mxu0
    %v3141 = vadd.f32 %v3121, %v3140
    %3142 = vdwg.mxu0
    %3143 = vmatpush.msra.mxu0 %v2138
    %3144 = vmatpush.msra.mxu0 %v2137
    %3145 = vmatpush.msra.mxu0 %v2136
    %3146 = vmatpush.msra.mxu0 %v2135
    %3147 = vmatpush.msra.mxu0 %v2134
    %3148 = vmatpush.msra.mxu0 %v2133
    %3149 = vmatpush.msra.mxu0 %v2132
    %3150 = vmatpush.msra.mxu0 %v2131
    %3151 = vmatpush.msra.mxu0 %v2130
    %3152 = vmatpush.msra.mxu0 %v2129
    %3153 = vmatpush.msra.mxu0 %v2128
    %3154 = vmatpush.msra.mxu0 %v2127
    %3155 = vmatpush.msra.mxu0 %v2126
    %3156 = vmatpush.msra.mxu0 %v2125
    %3157 = vmatpush.msra.mxu0 %v2124
    %3158 = vmatpush.msra.mxu0 %v2123
    %3159 = vmatmul.f32.gmra.mxu0 %v2731
    %v3160 = vpop.f32.mrf.mxu0
    %v3161 = vadd.f32 %v3141, %v3160
    %3162 = vdwg.mxu0
    %3163 = vmatpush.msra.mxu0 %v2154
    %3164 = vmatpush.msra.mxu0 %v2153
    %3165 = vmatpush.msra.mxu0 %v2152
    %3166 = vmatpush.msra.mxu0 %v2151
    %3167 = vmatpush.msra.mxu0 %v2150
    %3168 = vmatpush.msra.mxu0 %v2149
    %3169 = vmatpush.msra.mxu0 %v2148
    %3170 = vmatpush.msra.mxu0 %v2147
    %3171 = vmatpush.msra.mxu0 %v2146
    %3172 = vmatpush.msra.mxu0 %v2145
    %3173 = vmatpush.msra.mxu0 %v2144
    %3174 = vmatpush.msra.mxu0 %v2143
    %3175 = vmatpush.msra.mxu0 %v2142
    %3176 = vmatpush.msra.mxu0 %v2141
    %3177 = vmatpush.msra.mxu0 %v2140
    %3178 = vmatpush.msra.mxu0 %v2139
    %3179 = vmatmul.f32.gmra.mxu0 %v2732
    %v3180 = vpop.f32.mrf.mxu0
    %v3181 = vadd.f32 %v3161, %v3180
    %3182 = vdwg.mxu0
    %3183 = vmatpush.msra.mxu0 %v2170
    %3184 = vmatpush.msra.mxu0 %v2169
    %3185 = vmatpush.msra.mxu0 %v2168
    %3186 = vmatpush.msra.mxu0 %v2167
    %3187 = vmatpush.msra.mxu0 %v2166
    %3188 = vmatpush.msra.mxu0 %v2165
    %3189 = vmatpush.msra.mxu0 %v2164
    %3190 = vmatpush.msra.mxu0 %v2163
    %3191 = vmatpush.msra.mxu0 %v2162
    %3192 = vmatpush.msra.mxu0 %v2161
    %3193 = vmatpush.msra.mxu0 %v2160
    %3194 = vmatpush.msra.mxu0 %v2159
    %3195 = vmatpush.msra.mxu0 %v2158
    %3196 = vmatpush.msra.mxu0 %v2157
    %3197 = vmatpush.msra.mxu0 %v2156
    %3198 = vmatpush.msra.mxu0 %v2155
    %3199 = vmatmul.f32.gmra.mxu0 %v2733
    %v3200 = vpop.f32.mrf.mxu0
    %v3201 = vadd.f32 %v3181, %v3200
    %3202 = vdwg.mxu0
    %3203 = vmatpush.msra.mxu0 %v2186
    %3204 = vmatpush.msra.mxu0 %v2185
    %3205 = vmatpush.msra.mxu0 %v2184
    %3206 = vmatpush.msra.mxu0 %v2183
    %3207 = vmatpush.msra.mxu0 %v2182
    %3208 = vmatpush.msra.mxu0 %v2181
    %3209 = vmatpush.msra.mxu0 %v2180
    %3210 = vmatpush.msra.mxu0 %v2179
    %3211 = vmatpush.msra.mxu0 %v2178
    %3212 = vmatpush.msra.mxu0 %v2177
    %3213 = vmatpush.msra.mxu0 %v2176
    %3214 = vmatpush.msra.mxu0 %v2175
    %3215 = vmatpush.msra.mxu0 %v2174
    %3216 = vmatpush.msra.mxu0 %v2173
    %3217 = vmatpush.msra.mxu0 %v2172
    %3218 = vmatpush.msra.mxu0 %v2171
    %3219 = vmatmul.f32.gmra.mxu0 %v2734
    %v3220 = vpop.f32.mrf.mxu0
    %v3221 = vadd.f32 %v3201, %v3220
    %3222 = vdwg.mxu0
    %3223 = vmatpush.msra.mxu0 %v2202
    %3224 = vmatpush.msra.mxu0 %v2201
    %3225 = vmatpush.msra.mxu0 %v2200
    %3226 = vmatpush.msra.mxu0 %v2199
    %3227 = vmatpush.msra.mxu0 %v2198
    %3228 = vmatpush.msra.mxu0 %v2197
    %3229 = vmatpush.msra.mxu0 %v2196
    %3230 = vmatpush.msra.mxu0 %v2195
    %3231 = vmatpush.msra.mxu0 %v2194
    %3232 = vmatpush.msra.mxu0 %v2193
    %3233 = vmatpush.msra.mxu0 %v2192
    %3234 = vmatpush.msra.mxu0 %v2191
    %3235 = vmatpush.msra.mxu0 %v2190
    %3236 = vmatpush.msra.mxu0 %v2189
    %3237 = vmatpush.msra.mxu0 %v2188
    %3238 = vmatpush.msra.mxu0 %v2187
    %3239 = vmatmul.f32.gmra.mxu0 %v2735
    %v3240 = vpop.f32.mrf.mxu0
    %v3241 = vadd.f32 %v3221, %v3240
    %3242 = vdwg.mxu0
    %3243 = vmatpush.msra.mxu0 %v2218
    %3244 = vmatpush.msra.mxu0 %v2217
    %3245 = vmatpush.msra.mxu0 %v2216
    %3246 = vmatpush.msra.mxu0 %v2215
    %3247 = vmatpush.msra.mxu0 %v2214
    %3248 = vmatpush.msra.mxu0 %v2213
    %3249 = vmatpush.msra.mxu0 %v2212
    %3250 = vmatpush.msra.mxu0 %v2211
    %3251 = vmatpush.msra.mxu0 %v2210
    %3252 = vmatpush.msra.mxu0 %v2209
    %3253 = vmatpush.msra.mxu0 %v2208
    %3254 = vmatpush.msra.mxu0 %v2207
    %3255 = vmatpush.msra.mxu0 %v2206
    %3256 = vmatpush.msra.mxu0 %v2205
    %3257 = vmatpush.msra.mxu0 %v2204
    %3258 = vmatpush.msra.mxu0 %v2203
    %3259 = vmatmul.f32.gmra.mxu0 %v2736
    %v3260 = vpop.f32.mrf.mxu0
    %v3261 = vadd.f32 %v3241, %v3260
    %3262 = vdwg.mxu0
    %3263 = vmatpush.msra.mxu0 %v2234
    %3264 = vmatpush.msra.mxu0 %v2233
    %3265 = vmatpush.msra.mxu0 %v2232
    %3266 = vmatpush.msra.mxu0 %v2231
    %3267 = vmatpush.msra.mxu0 %v2230
    %3268 = vmatpush.msra.mxu0 %v2229
    %3269 = vmatpush.msra.mxu0 %v2228
    %3270 = vmatpush.msra.mxu0 %v2227
    %3271 = vmatpush.msra.mxu0 %v2226
    %3272 = vmatpush.msra.mxu0 %v2225
    %3273 = vmatpush.msra.mxu0 %v2224
    %3274 = vmatpush.msra.mxu0 %v2223
    %3275 = vmatpush.msra.mxu0 %v2222
    %3276 = vmatpush.msra.mxu0 %v2221
    %3277 = vmatpush.msra.mxu0 %v2220
    %3278 = vmatpush.msra.mxu0 %v2219
    %3279 = vmatmul.f32.gmra.mxu0 %v2737
    %v3280 = vpop.f32.mrf.mxu0
    %v3281 = vadd.f32 %v3261, %v3280
    %3282 = vdwg.mxu0
    %3283 = vmatpush.msra.mxu0 %v2250
    %3284 = vmatpush.msra.mxu0 %v2249
    %3285 = vmatpush.msra.mxu0 %v2248
    %3286 = vmatpush.msra.mxu0 %v2247
    %3287 = vmatpush.msra.mxu0 %v2246
    %3288 = vmatpush.msra.mxu0 %v2245
    %3289 = vmatpush.msra.mxu0 %v2244
    %3290 = vmatpush.msra.mxu0 %v2243
    %3291 = vmatpush.msra.mxu0 %v2242
    %3292 = vmatpush.msra.mxu0 %v2241
    %3293 = vmatpush.msra.mxu0 %v2240
    %3294 = vmatpush.msra.mxu0 %v2239
    %3295 = vmatpush.msra.mxu0 %v2238
    %3296 = vmatpush.msra.mxu0 %v2237
    %3297 = vmatpush.msra.mxu0 %v2236
    %3298 = vmatpush.msra.mxu0 %v2235
    %3299 = vmatmul.f32.gmra.mxu0 %v2738
    %v3300 = vpop.f32.mrf.mxu0
    %v3301 = vadd.f32 %v3281, %v3300
    %3302 = vdwg.mxu0
    %3303 = vmatpush.msra.mxu0 %v2266
    %3304 = vmatpush.msra.mxu0 %v2265
    %3305 = vmatpush.msra.mxu0 %v2264
    %3306 = vmatpush.msra.mxu0 %v2263
    %3307 = vmatpush.msra.mxu0 %v2262
    %3308 = vmatpush.msra.mxu0 %v2261
    %3309 = vmatpush.msra.mxu0 %v2260
    %3310 = vmatpush.msra.mxu0 %v2259
    %3311 = vmatpush.msra.mxu0 %v2258
    %3312 = vmatpush.msra.mxu0 %v2257
    %3313 = vmatpush.msra.mxu0 %v2256
    %3314 = vmatpush.msra.mxu0 %v2255
    %3315 = vmatpush.msra.mxu0 %v2254
    %3316 = vmatpush.msra.mxu0 %v2253
    %3317 = vmatpush.msra.mxu0 %v2252
    %3318 = vmatpush.msra.mxu0 %v2251
    %3319 = vmatmul.f32.gmra.mxu0 %v2739
    %v3320 = vpop.f32.mrf.mxu0
    %v3321 = vadd.f32 %v3301, %v3320
    %3322 = vdwg.mxu0
    %3323 = vmatpush.msra.mxu0 %v2282
    %3324 = vmatpush.msra.mxu0 %v2281
    %3325 = vmatpush.msra.mxu0 %v2280
    %3326 = vmatpush.msra.mxu0 %v2279
    %3327 = vmatpush.msra.mxu0 %v2278
    %3328 = vmatpush.msra.mxu0 %v2277
    %3329 = vmatpush.msra.mxu0 %v2276
    %3330 = vmatpush.msra.mxu0 %v2275
    %3331 = vmatpush.msra.mxu0 %v2274
    %3332 = vmatpush.msra.mxu0 %v2273
    %3333 = vmatpush.msra.mxu0 %v2272
    %3334 = vmatpush.msra.mxu0 %v2271
    %3335 = vmatpush.msra.mxu0 %v2270
    %3336 = vmatpush.msra.mxu0 %v2269
    %3337 = vmatpush.msra.mxu0 %v2268
    %3338 = vmatpush.msra.mxu0 %v2267
    %3339 = vmatmul.f32.gmra.mxu0 %v2740
    %v3340 = vpop.f32.mrf.mxu0
    %v3341 = vadd.f32 %v3321, %v3340
    %3342 = vdwg.mxu0
    %3343 = vmatpush.msra.mxu0 %v2298
    %3344 = vmatpush.msra.mxu0 %v2297
    %3345 = vmatpush.msra.mxu0 %v2296
    %3346 = vmatpush.msra.mxu0 %v2295
    %3347 = vmatpush.msra.mxu0 %v2294
    %3348 = vmatpush.msra.mxu0 %v2293
    %3349 = vmatpush.msra.mxu0 %v2292
    %3350 = vmatpush.msra.mxu0 %v2291
    %3351 = vmatpush.msra.mxu0 %v2290
    %3352 = vmatpush.msra.mxu0 %v2289
    %3353 = vmatpush.msra.mxu0 %v2288
    %3354 = vmatpush.msra.mxu0 %v2287
    %3355 = vmatpush.msra.mxu0 %v2286
    %3356 = vmatpush.msra.mxu0 %v2285
    %3357 = vmatpush.msra.mxu0 %v2284
    %3358 = vmatpush.msra.mxu0 %v2283
    %3359 = vmatmul.f32.gmra.mxu0 %v2741
    %v3360 = vpop.f32.mrf.mxu0
    %v3361 = vadd.f32 %v3341, %v3360
    %3362 = vdwg.mxu0
    %3363 = vmatpush.msra.mxu0 %v2314
    %3364 = vmatpush.msra.mxu0 %v2313
    %3365 = vmatpush.msra.mxu0 %v2312
    %3366 = vmatpush.msra.mxu0 %v2311
    %3367 = vmatpush.msra.mxu0 %v2310
    %3368 = vmatpush.msra.mxu0 %v2309
    %3369 = vmatpush.msra.mxu0 %v2308
    %3370 = vmatpush.msra.mxu0 %v2307
    %3371 = vmatpush.msra.mxu0 %v2306
    %3372 = vmatpush.msra.mxu0 %v2305
    %3373 = vmatpush.msra.mxu0 %v2304
    %3374 = vmatpush.msra.mxu0 %v2303
    %3375 = vmatpush.msra.mxu0 %v2302
    %3376 = vmatpush.msra.mxu0 %v2301
    %3377 = vmatpush.msra.mxu0 %v2300
    %3378 = vmatpush.msra.mxu0 %v2299
    %3379 = vmatmul.f32.gmra.mxu0 %v2742
    %v3380 = vpop.f32.mrf.mxu0
    %v3381 = vadd.f32 %v3361, %v3380
    %3382 = vdwg.mxu0
    %3383 = vmatpush.msra.mxu0 %v2330
    %3384 = vmatpush.msra.mxu0 %v2329
    %3385 = vmatpush.msra.mxu0 %v2328
    %3386 = vmatpush.msra.mxu0 %v2327
    %3387 = vmatpush.msra.mxu0 %v2326
    %3388 = vmatpush.msra.mxu0 %v2325
    %3389 = vmatpush.msra.mxu0 %v2324
    %3390 = vmatpush.msra.mxu0 %v2323
    %3391 = vmatpush.msra.mxu0 %v2322
    %3392 = vmatpush.msra.mxu0 %v2321
    %3393 = vmatpush.msra.mxu0 %v2320
    %3394 = vmatpush.msra.mxu0 %v2319
    %3395 = vmatpush.msra.mxu0 %v2318
    %3396 = vmatpush.msra.mxu0 %v2317
    %3397 = vmatpush.msra.mxu0 %v2316
    %3398 = vmatpush.msra.mxu0 %v2315
    %3399 = vmatmul.f32.gmra.mxu0 %v2743
    %v3400 = vpop.f32.mrf.mxu0
    %v3401 = vadd.f32 %v3381, %v3400
    %3402 = vdwg.mxu0
    %3403 = vmatpush.msra.mxu0 %v2346
    %3404 = vmatpush.msra.mxu0 %v2345
    %3405 = vmatpush.msra.mxu0 %v2344
    %3406 = vmatpush.msra.mxu0 %v2343
    %3407 = vmatpush.msra.mxu0 %v2342
    %3408 = vmatpush.msra.mxu0 %v2341
    %3409 = vmatpush.msra.mxu0 %v2340
    %3410 = vmatpush.msra.mxu0 %v2339
    %3411 = vmatpush.msra.mxu0 %v2338
    %3412 = vmatpush.msra.mxu0 %v2337
    %3413 = vmatpush.msra.mxu0 %v2336
    %3414 = vmatpush.msra.mxu0 %v2335
    %3415 = vmatpush.msra.mxu0 %v2334
    %3416 = vmatpush.msra.mxu0 %v2333
    %3417 = vmatpush.msra.mxu0 %v2332
    %3418 = vmatpush.msra.mxu0 %v2331
    %3419 = vmatmul.f32.gmra.mxu0 %v2744
    %v3420 = vpop.f32.mrf.mxu0
    %v3421 = vadd.f32 %v3401, %v3420
    %3422 = vdwg.mxu0
    %3423 = vmatpush.msra.mxu0 %v2362
    %3424 = vmatpush.msra.mxu0 %v2361
    %3425 = vmatpush.msra.mxu0 %v2360
    %3426 = vmatpush.msra.mxu0 %v2359
    %3427 = vmatpush.msra.mxu0 %v2358
    %3428 = vmatpush.msra.mxu0 %v2357
    %3429 = vmatpush.msra.mxu0 %v2356
    %3430 = vmatpush.msra.mxu0 %v2355
    %3431 = vmatpush.msra.mxu0 %v2354
    %3432 = vmatpush.msra.mxu0 %v2353
    %3433 = vmatpush.msra.mxu0 %v2352
    %3434 = vmatpush.msra.mxu0 %v2351
    %3435 = vmatpush.msra.mxu0 %v2350
    %3436 = vmatpush.msra.mxu0 %v2349
    %3437 = vmatpush.msra.mxu0 %v2348
    %3438 = vmatpush.msra.mxu0 %v2347
    %3439 = vmatmul.f32.gmra.mxu0 %v2745
    %v3440 = vpop.f32.mrf.mxu0
    %v3441 = vadd.f32 %v3421, %v3440
    %3442 = vdwg.mxu0
    %3443 = vmatpush.msra.mxu0 %v2378
    %3444 = vmatpush.msra.mxu0 %v2377
    %3445 = vmatpush.msra.mxu0 %v2376
    %3446 = vmatpush.msra.mxu0 %v2375
    %3447 = vmatpush.msra.mxu0 %v2374
    %3448 = vmatpush.msra.mxu0 %v2373
    %3449 = vmatpush.msra.mxu0 %v2372
    %3450 = vmatpush.msra.mxu0 %v2371
    %3451 = vmatpush.msra.mxu0 %v2370
    %3452 = vmatpush.msra.mxu0 %v2369
    %3453 = vmatpush.msra.mxu0 %v2368
    %3454 = vmatpush.msra.mxu0 %v2367
    %3455 = vmatpush.msra.mxu0 %v2366
    %3456 = vmatpush.msra.mxu0 %v2365
    %3457 = vmatpush.msra.mxu0 %v2364
    %3458 = vmatpush.msra.mxu0 %v2363
    %3459 = vmatmul.f32.gmra.mxu0 %v2746
    %v3460 = vpop.f32.mrf.mxu0
    %v3461 = vadd.f32 %v3441, %v3460
    %3462 = vdwg.mxu0
    %3463 = vmatpush.msra.mxu0 %v2394
    %3464 = vmatpush.msra.mxu0 %v2393
    %3465 = vmatpush.msra.mxu0 %v2392
    %3466 = vmatpush.msra.mxu0 %v2391
    %3467 = vmatpush.msra.mxu0 %v2390
    %3468 = vmatpush.msra.mxu0 %v2389
    %3469 = vmatpush.msra.mxu0 %v2388
    %3470 = vmatpush.msra.mxu0 %v2387
    %3471 = vmatpush.msra.mxu0 %v2386
    %3472 = vmatpush.msra.mxu0 %v2385
    %3473 = vmatpush.msra.mxu0 %v2384
    %3474 = vmatpush.msra.mxu0 %v2383
    %3475 = vmatpush.msra.mxu0 %v2382
    %3476 = vmatpush.msra.mxu0 %v2381
    %3477 = vmatpush.msra.mxu0 %v2380
    %3478 = vmatpush.msra.mxu0 %v2379
    %3479 = vmatmul.f32.gmra.mxu0 %v2747
    %v3480 = vpop.f32.mrf.mxu0
    %v3481 = vadd.f32 %v3461, %v3480
    %3482 = vdwg.mxu0
    %3483 = vmatpush.msra.mxu0 %v2410
    %3484 = vmatpush.msra.mxu0 %v2409
    %3485 = vmatpush.msra.mxu0 %v2408
    %3486 = vmatpush.msra.mxu0 %v2407
    %3487 = vmatpush.msra.mxu0 %v2406
    %3488 = vmatpush.msra.mxu0 %v2405
    %3489 = vmatpush.msra.mxu0 %v2404
    %3490 = vmatpush.msra.mxu0 %v2403
    %3491 = vmatpush.msra.mxu0 %v2402
    %3492 = vmatpush.msra.mxu0 %v2401
    %3493 = vmatpush.msra.mxu0 %v2400
    %3494 = vmatpush.msra.mxu0 %v2399
    %3495 = vmatpush.msra.mxu0 %v2398
    %3496 = vmatpush.msra.mxu0 %v2397
    %3497 = vmatpush.msra.mxu0 %v2396
    %3498 = vmatpush.msra.mxu0 %v2395
    %3499 = vmatmul.f32.gmra.mxu0 %v2748
    %v3500 = vpop.f32.mrf.mxu0
    %v3501 = vadd.f32 %v3481, %v3500
    %3502 = vdwg.mxu0
    %3503 = vmatpush.msra.mxu0 %v2426
    %3504 = vmatpush.msra.mxu0 %v2425
    %3505 = vmatpush.msra.mxu0 %v2424
    %3506 = vmatpush.msra.mxu0 %v2423
    %3507 = vmatpush.msra.mxu0 %v2422
    %3508 = vmatpush.msra.mxu0 %v2421
    %3509 = vmatpush.msra.mxu0 %v2420
    %3510 = vmatpush.msra.mxu0 %v2419
    %3511 = vmatpush.msra.mxu0 %v2418
    %3512 = vmatpush.msra.mxu0 %v2417
    %3513 = vmatpush.msra.mxu0 %v2416
    %3514 = vmatpush.msra.mxu0 %v2415
    %3515 = vmatpush.msra.mxu0 %v2414
    %3516 = vmatpush.msra.mxu0 %v2413
    %3517 = vmatpush.msra.mxu0 %v2412
    %3518 = vmatpush.msra.mxu0 %v2411
    %3519 = vmatmul.f32.gmra.mxu0 %v2749
    %v3520 = vpop.f32.mrf.mxu0
    %v3521 = vadd.f32 %v3501, %v3520
    %3522 = vdwg.mxu0
    %3523 = vmatpush.msra.mxu0 %v2442
    %3524 = vmatpush.msra.mxu0 %v2441
    %3525 = vmatpush.msra.mxu0 %v2440
    %3526 = vmatpush.msra.mxu0 %v2439
    %3527 = vmatpush.msra.mxu0 %v2438
    %3528 = vmatpush.msra.mxu0 %v2437
    %3529 = vmatpush.msra.mxu0 %v2436
    %3530 = vmatpush.msra.mxu0 %v2435
    %3531 = vmatpush.msra.mxu0 %v2434
    %3532 = vmatpush.msra.mxu0 %v2433
    %3533 = vmatpush.msra.mxu0 %v2432
    %3534 = vmatpush.msra.mxu0 %v2431
    %3535 = vmatpush.msra.mxu0 %v2430
    %3536 = vmatpush.msra.mxu0 %v2429
    %3537 = vmatpush.msra.mxu0 %v2428
    %3538 = vmatpush.msra.mxu0 %v2427
    %3539 = vmatmul.f32.gmra.mxu0 %v2750
    %v3540 = vpop.f32.mrf.mxu0
    %v3541 = vadd.f32 %v3521, %v3540
    %3542 = vdwg.mxu0
    %3543 = vmatpush.msra.mxu0 %v2458
    %3544 = vmatpush.msra.mxu0 %v2457
    %3545 = vmatpush.msra.mxu0 %v2456
    %3546 = vmatpush.msra.mxu0 %v2455
    %3547 = vmatpush.msra.mxu0 %v2454
    %3548 = vmatpush.msra.mxu0 %v2453
    %3549 = vmatpush.msra.mxu0 %v2452
    %3550 = vmatpush.msra.mxu0 %v2451
    %3551 = vmatpush.msra.mxu0 %v2450
    %3552 = vmatpush.msra.mxu0 %v2449
    %3553 = vmatpush.msra.mxu0 %v2448
    %3554 = vmatpush.msra.mxu0 %v2447
    %3555 = vmatpush.msra.mxu0 %v2446
    %3556 = vmatpush.msra.mxu0 %v2445
    %3557 = vmatpush.msra.mxu0 %v2444
    %3558 = vmatpush.msra.mxu0 %v2443
    %3559 = vmatmul.f32.gmra.mxu0 %v2751
    %v3560 = vpop.f32.mrf.mxu0
    %v3561 = vadd.f32 %v3541, %v3560
    %3562 = vdwg.mxu0
    %3563 = vmatpush.msra.mxu0 %v2474
    %3564 = vmatpush.msra.mxu0 %v2473
    %3565 = vmatpush.msra.mxu0 %v2472
    %3566 = vmatpush.msra.mxu0 %v2471
    %3567 = vmatpush.msra.mxu0 %v2470
    %3568 = vmatpush.msra.mxu0 %v2469
    %3569 = vmatpush.msra.mxu0 %v2468
    %3570 = vmatpush.msra.mxu0 %v2467
    %3571 = vmatpush.msra.mxu0 %v2466
    %3572 = vmatpush.msra.mxu0 %v2465
    %3573 = vmatpush.msra.mxu0 %v2464
    %3574 = vmatpush.msra.mxu0 %v2463
    %3575 = vmatpush.msra.mxu0 %v2462
    %3576 = vmatpush.msra.mxu0 %v2461
    %3577 = vmatpush.msra.mxu0 %v2460
    %3578 = vmatpush.msra.mxu0 %v2459
    %3579 = vmatmul.f32.gmra.mxu0 %v2752
    %v3580 = vpop.f32.mrf.mxu0
    %v3581 = vadd.f32 %v3561, %v3580
    %3582 = vdwg.mxu0
    %3583 = vmatpush.msra.mxu0 %v2490
    %3584 = vmatpush.msra.mxu0 %v2489
    %3585 = vmatpush.msra.mxu0 %v2488
    %3586 = vmatpush.msra.mxu0 %v2487
    %3587 = vmatpush.msra.mxu0 %v2486
    %3588 = vmatpush.msra.mxu0 %v2485
    %3589 = vmatpush.msra.mxu0 %v2484
    %3590 = vmatpush.msra.mxu0 %v2483
    %3591 = vmatpush.msra.mxu0 %v2482
    %3592 = vmatpush.msra.mxu0 %v2481
    %3593 = vmatpush.msra.mxu0 %v2480
    %3594 = vmatpush.msra.mxu0 %v2479
    %3595 = vmatpush.msra.mxu0 %v2478
    %3596 = vmatpush.msra.mxu0 %v2477
    %3597 = vmatpush.msra.mxu0 %v2476
    %3598 = vmatpush.msra.mxu0 %v2475
    %3599 = vmatmul.f32.gmra.mxu0 %v2753
    %v3600 = vpop.f32.mrf.mxu0
    %v3601 = vadd.f32 %v3581, %v3600
    %3602 = vdwg.mxu0
    %3603 = vmatpush.msra.mxu0 %v2506
    %3604 = vmatpush.msra.mxu0 %v2505
    %3605 = vmatpush.msra.mxu0 %v2504
    %3606 = vmatpush.msra.mxu0 %v2503
    %3607 = vmatpush.msra.mxu0 %v2502
    %3608 = vmatpush.msra.mxu0 %v2501
    %3609 = vmatpush.msra.mxu0 %v2500
    %3610 = vmatpush.msra.mxu0 %v2499
    %3611 = vmatpush.msra.mxu0 %v2498
    %3612 = vmatpush.msra.mxu0 %v2497
    %3613 = vmatpush.msra.mxu0 %v2496
    %3614 = vmatpush.msra.mxu0 %v2495
    %3615 = vmatpush.msra.mxu0 %v2494
    %3616 = vmatpush.msra.mxu0 %v2493
    %3617 = vmatpush.msra.mxu0 %v2492
    %3618 = vmatpush.msra.mxu0 %v2491
    %3619 = vmatmul.f32.gmra.mxu0 %v2754
    %v3620 = vpop.f32.mrf.mxu0
    %v3621 = vadd.f32 %v3601, %v3620
    %3622 = vdwg.mxu0
    %3623 = vmatpush.msra.mxu0 %v2522
    %3624 = vmatpush.msra.mxu0 %v2521
    %3625 = vmatpush.msra.mxu0 %v2520
    %3626 = vmatpush.msra.mxu0 %v2519
    %3627 = vmatpush.msra.mxu0 %v2518
    %3628 = vmatpush.msra.mxu0 %v2517
    %3629 = vmatpush.msra.mxu0 %v2516
    %3630 = vmatpush.msra.mxu0 %v2515
    %3631 = vmatpush.msra.mxu0 %v2514
    %3632 = vmatpush.msra.mxu0 %v2513
    %3633 = vmatpush.msra.mxu0 %v2512
    %3634 = vmatpush.msra.mxu0 %v2511
    %3635 = vmatpush.msra.mxu0 %v2510
    %3636 = vmatpush.msra.mxu0 %v2509
    %3637 = vmatpush.msra.mxu0 %v2508
    %3638 = vmatpush.msra.mxu0 %v2507
    %3639 = vmatmul.f32.gmra.mxu0 %v2755
    %v3640 = vpop.f32.mrf.mxu0
    %v3641 = vadd.f32 %v3621, %v3640
    %3642 = vdwg.mxu0
    %3643 = vmatpush.msra.mxu0 %v2538
    %3644 = vmatpush.msra.mxu0 %v2537
    %3645 = vmatpush.msra.mxu0 %v2536
    %3646 = vmatpush.msra.mxu0 %v2535
    %3647 = vmatpush.msra.mxu0 %v2534
    %3648 = vmatpush.msra.mxu0 %v2533
    %3649 = vmatpush.msra.mxu0 %v2532
    %3650 = vmatpush.msra.mxu0 %v2531
    %3651 = vmatpush.msra.mxu0 %v2530
    %3652 = vmatpush.msra.mxu0 %v2529
    %3653 = vmatpush.msra.mxu0 %v2528
    %3654 = vmatpush.msra.mxu0 %v2527
    %3655 = vmatpush.msra.mxu0 %v2526
    %3656 = vmatpush.msra.mxu0 %v2525
    %3657 = vmatpush.msra.mxu0 %v2524
    %3658 = vmatpush.msra.mxu0 %v2523
    %3659 = vmatmul.f32.gmra.mxu0 %v2756
    %v3660 = vpop.f32.mrf.mxu0
    %v3661 = vadd.f32 %v3641, %v3660
    %3662 = vdwg.mxu0
    %3663 = vmatpush.msra.mxu0 %v2554
    %3664 = vmatpush.msra.mxu0 %v2553
    %3665 = vmatpush.msra.mxu0 %v2552
    %3666 = vmatpush.msra.mxu0 %v2551
    %3667 = vmatpush.msra.mxu0 %v2550
    %3668 = vmatpush.msra.mxu0 %v2549
    %3669 = vmatpush.msra.mxu0 %v2548
    %3670 = vmatpush.msra.mxu0 %v2547
    %3671 = vmatpush.msra.mxu0 %v2546
    %3672 = vmatpush.msra.mxu0 %v2545
    %3673 = vmatpush.msra.mxu0 %v2544
    %3674 = vmatpush.msra.mxu0 %v2543
    %3675 = vmatpush.msra.mxu0 %v2542
    %3676 = vmatpush.msra.mxu0 %v2541
    %3677 = vmatpush.msra.mxu0 %v2540
    %3678 = vmatpush.msra.mxu0 %v2539
    %3679 = vmatmul.f32.gmra.mxu0 %v2757
    %v3680 = vpop.f32.mrf.mxu0
    %v3681 = vadd.f32 %v3661, %v3680
    %3682 = vdwg.mxu0
    %3683 = vmatpush.msra.mxu0 %v2570
    %3684 = vmatpush.msra.mxu0 %v2569
    %3685 = vmatpush.msra.mxu0 %v2568
    %3686 = vmatpush.msra.mxu0 %v2567
    %3687 = vmatpush.msra.mxu0 %v2566
    %3688 = vmatpush.msra.mxu0 %v2565
    %3689 = vmatpush.msra.mxu0 %v2564
    %3690 = vmatpush.msra.mxu0 %v2563
    %3691 = vmatpush.msra.mxu0 %v2562
    %3692 = vmatpush.msra.mxu0 %v2561
    %3693 = vmatpush.msra.mxu0 %v2560
    %3694 = vmatpush.msra.mxu0 %v2559
    %3695 = vmatpush.msra.mxu0 %v2558
    %3696 = vmatpush.msra.mxu0 %v2557
    %3697 = vmatpush.msra.mxu0 %v2556
    %3698 = vmatpush.msra.mxu0 %v2555
    %3699 = vmatmul.f32.gmra.mxu0 %v2758
    %v3700 = vpop.f32.mrf.mxu0
    %v3701 = vadd.f32 %v3681, %v3700
    %3702 = vdwg.mxu0
    %3703 = vmatpush.msra.mxu0 %v2586
    %3704 = vmatpush.msra.mxu0 %v2585
    %3705 = vmatpush.msra.mxu0 %v2584
    %3706 = vmatpush.msra.mxu0 %v2583
    %3707 = vmatpush.msra.mxu0 %v2582
    %3708 = vmatpush.msra.mxu0 %v2581
    %3709 = vmatpush.msra.mxu0 %v2580
    %3710 = vmatpush.msra.mxu0 %v2579
    %3711 = vmatpush.msra.mxu0 %v2578
    %3712 = vmatpush.msra.mxu0 %v2577
    %3713 = vmatpush.msra.mxu0 %v2576
    %3714 = vmatpush.msra.mxu0 %v2575
    %3715 = vmatpush.msra.mxu0 %v2574
    %3716 = vmatpush.msra.mxu0 %v2573
    %3717 = vmatpush.msra.mxu0 %v2572
    %3718 = vmatpush.msra.mxu0 %v2571
    %3719 = vmatmul.f32.gmra.mxu0 %v2759
    %v3720 = vpop.f32.mrf.mxu0
    %v3721 = vadd.f32 %v3701, %v3720
    %3722 = vdwg.mxu0
    %3723 = vmatpush.msra.mxu0 %v2602
    %3724 = vmatpush.msra.mxu0 %v2601
    %3725 = vmatpush.msra.mxu0 %v2600
    %3726 = vmatpush.msra.mxu0 %v2599
    %3727 = vmatpush.msra.mxu0 %v2598
    %3728 = vmatpush.msra.mxu0 %v2597
    %3729 = vmatpush.msra.mxu0 %v2596
    %3730 = vmatpush.msra.mxu0 %v2595
    %3731 = vmatpush.msra.mxu0 %v2594
    %3732 = vmatpush.msra.mxu0 %v2593
    %3733 = vmatpush.msra.mxu0 %v2592
    %3734 = vmatpush.msra.mxu0 %v2591
    %3735 = vmatpush.msra.mxu0 %v2590
    %3736 = vmatpush.msra.mxu0 %v2589
    %3737 = vmatpush.msra.mxu0 %v2588
    %3738 = vmatpush.msra.mxu0 %v2587
    %3739 = vmatmul.f32.gmra.mxu0 %v2760
    %v3740 = vpop.f32.mrf.mxu0
    %v3741 = vadd.f32 %v3721, %v3740
    %3742 = vdwg.mxu0
    %3743 = vmatpush.msra.mxu0 %v2618
    %3744 = vmatpush.msra.mxu0 %v2617
    %3745 = vmatpush.msra.mxu0 %v2616
    %3746 = vmatpush.msra.mxu0 %v2615
    %3747 = vmatpush.msra.mxu0 %v2614
    %3748 = vmatpush.msra.mxu0 %v2613
    %3749 = vmatpush.msra.mxu0 %v2612
    %3750 = vmatpush.msra.mxu0 %v2611
    %3751 = vmatpush.msra.mxu0 %v2610
    %3752 = vmatpush.msra.mxu0 %v2609
    %3753 = vmatpush.msra.mxu0 %v2608
    %3754 = vmatpush.msra.mxu0 %v2607
    %3755 = vmatpush.msra.mxu0 %v2606
    %3756 = vmatpush.msra.mxu0 %v2605
    %3757 = vmatpush.msra.mxu0 %v2604
    %3758 = vmatpush.msra.mxu0 %v2603
    %3759 = vmatmul.f32.gmra.mxu0 %v2761
    %v3760 = vpop.f32.mrf.mxu0
    %v3761 = vadd.f32 %v3741, %v3760
    %3762 = vdwg.mxu0
    %3763 = vmatpush.msra.mxu0 %v2634
    %3764 = vmatpush.msra.mxu0 %v2633
    %3765 = vmatpush.msra.mxu0 %v2632
    %3766 = vmatpush.msra.mxu0 %v2631
    %3767 = vmatpush.msra.mxu0 %v2630
    %3768 = vmatpush.msra.mxu0 %v2629
    %3769 = vmatpush.msra.mxu0 %v2628
    %3770 = vmatpush.msra.mxu0 %v2627
    %3771 = vmatpush.msra.mxu0 %v2626
    %3772 = vmatpush.msra.mxu0 %v2625
    %3773 = vmatpush.msra.mxu0 %v2624
    %3774 = vmatpush.msra.mxu0 %v2623
    %3775 = vmatpush.msra.mxu0 %v2622
    %3776 = vmatpush.msra.mxu0 %v2621
    %3777 = vmatpush.msra.mxu0 %v2620
    %3778 = vmatpush.msra.mxu0 %v2619
    %3779 = vmatmul.f32.gmra.mxu0 %v2762
    %v3780 = vpop.f32.mrf.mxu0
    %v3781 = vadd.f32 %v3761, %v3780
    %3782 = vdwg.mxu0
    %3783 = vmatpush.msra.mxu0 %v2650
    %3784 = vmatpush.msra.mxu0 %v2649
    %3785 = vmatpush.msra.mxu0 %v2648
    %3786 = vmatpush.msra.mxu0 %v2647
    %3787 = vmatpush.msra.mxu0 %v2646
    %3788 = vmatpush.msra.mxu0 %v2645
    %3789 = vmatpush.msra.mxu0 %v2644
    %3790 = vmatpush.msra.mxu0 %v2643
    %3791 = vmatpush.msra.mxu0 %v2642
    %3792 = vmatpush.msra.mxu0 %v2641
    %3793 = vmatpush.msra.mxu0 %v2640
    %3794 = vmatpush.msra.mxu0 %v2639
    %3795 = vmatpush.msra.mxu0 %v2638
    %3796 = vmatpush.msra.mxu0 %v2637
    %3797 = vmatpush.msra.mxu0 %v2636
    %3798 = vmatpush.msra.mxu0 %v2635
    %3799 = vmatmul.f32.gmra.mxu0 %v2763
    %v3800 = vpop.f32.mrf.mxu0
    %v3801 = vadd.f32 %v3781, %v3800
    %3802 = vdwg.mxu0
    %3803 = vmatpush.msra.mxu0 %v2666
    %3804 = vmatpush.msra.mxu0 %v2665
    %3805 = vmatpush.msra.mxu0 %v2664
    %3806 = vmatpush.msra.mxu0 %v2663
    %3807 = vmatpush.msra.mxu0 %v2662
    %3808 = vmatpush.msra.mxu0 %v2661
    %3809 = vmatpush.msra.mxu0 %v2660
    %3810 = vmatpush.msra.mxu0 %v2659
    %3811 = vmatpush.msra.mxu0 %v2658
    %3812 = vmatpush.msra.mxu0 %v2657
    %3813 = vmatpush.msra.mxu0 %v2656
    %3814 = vmatpush.msra.mxu0 %v2655
    %3815 = vmatpush.msra.mxu0 %v2654
    %3816 = vmatpush.msra.mxu0 %v2653
    %3817 = vmatpush.msra.mxu0 %v2652
    %3818 = vmatpush.msra.mxu0 %v2651
    %3819 = vmatmul.f32.gmra.mxu0 %v2764
    %v3820 = vpop.f32.mrf.mxu0
    %v3821 = vadd.f32 %v3801, %v3820
    %3822 = vdwg.mxu0
    %3823 = vmatpush.msra.mxu0 %v2682
    %3824 = vmatpush.msra.mxu0 %v2681
    %3825 = vmatpush.msra.mxu0 %v2680
    %3826 = vmatpush.msra.mxu0 %v2679
    %3827 = vmatpush.msra.mxu0 %v2678
    %3828 = vmatpush.msra.mxu0 %v2677
    %3829 = vmatpush.msra.mxu0 %v2676
    %3830 = vmatpush.msra.mxu0 %v2675
    %3831 = vmatpush.msra.mxu0 %v2674
    %3832 = vmatpush.msra.mxu0 %v2673
    %3833 = vmatpush.msra.mxu0 %v2672
    %3834 = vmatpush.msra.mxu0 %v2671
    %3835 = vmatpush.msra.mxu0 %v2670
    %3836 = vmatpush.msra.mxu0 %v2669
    %3837 = vmatpush.msra.mxu0 %v2668
    %3838 = vmatpush.msra.mxu0 %v2667
    %3839 = vmatmul.f32.gmra.mxu0 %v2765
    %v3840 = vpop.f32.mrf.mxu0
    %v3841 = vadd.f32 %v3821, %v3840
    %3842 = vdwg.mxu0
    %3843 = vmatpush.msra.mxu0 %v2698
    %3844 = vmatpush.msra.mxu0 %v2697
    %3845 = vmatpush.msra.mxu0 %v2696
    %3846 = vmatpush.msra.mxu0 %v2695
    %3847 = vmatpush.msra.mxu0 %v2694
    %3848 = vmatpush.msra.mxu0 %v2693
    %3849 = vmatpush.msra.mxu0 %v2692
    %3850 = vmatpush.msra.mxu0 %v2691
    %3851 = vmatpush.msra.mxu0 %v2690
    %3852 = vmatpush.msra.mxu0 %v2689
    %3853 = vmatpush.msra.mxu0 %v2688
    %3854 = vmatpush.msra.mxu0 %v2687
    %3855 = vmatpush.msra.mxu0 %v2686
    %3856 = vmatpush.msra.mxu0 %v2685
    %3857 = vmatpush.msra.mxu0 %v2684
    %3858 = vmatpush.msra.mxu0 %v2683
    %3859 = vmatmul.f32.gmra.mxu0 %v2766
    %v3860 = vpop.f32.mrf.mxu0
    %v3861 = vadd.f32 %v3841, %v3860
    %3862 = vdwg.mxu0
    %3863 = vmatpush.msra.mxu0 0.0
    %3864 = vmatpush.msra.mxu0 0.0
    %3865 = vmatpush.msra.mxu0 0.0
    %3866 = vmatpush.msra.mxu0 0.0
    %3867 = vmatpush.msra.mxu0 0.0
    %3868 = vmatpush.msra.mxu0 0.0
    %3869 = vmatpush.msra.mxu0 0.0
    %3870 = vmatpush.msra.mxu0 0.0
    %3871 = vmatpush.msra.mxu0 %v2706
    %3872 = vmatpush.msra.mxu0 %v2705
    %3873 = vmatpush.msra.mxu0 %v2704
    %3874 = vmatpush.msra.mxu0 %v2703
    %3875 = vmatpush.msra.mxu0 %v2702
    %3876 = vmatpush.msra.mxu0 %v2701
    %3877 = vmatpush.msra.mxu0 %v2700
    %3878 = vmatpush.msra.mxu0 %v2699
    %3879 = vmatmul.f32.gmra.mxu0 %v2821
    %v3880 = vpop.f32.mrf.mxu0
    %v3881 = vadd.f32 %v3861, %v3880
    %3882 = vdwg.mxu0
    %v3883 = vmax.f32 %v3881, 0.0
    %v3884 = vld [vmem:[%s7] sm:$0xff]
    %v3885 = vld [vmem:[%s7 + $0x8] sm:$0xff]
    %v3886 = vld [vmem:[%s7 + $0x10] sm:$0xff]
    %v3887 = vld [vmem:[%s7 + $0x18] sm:$0xff]
    %v3888 = vld [vmem:[%s8] sm:$0x1]
    %v3890 = vsel %vm917, %v3883, 0
    %3892 = vmatpush.msra.mxu0 0.0
    %3893 = vmatpush.msra.mxu0 0.0
    %3894 = vmatpush.msra.mxu0 0.0
    %3895 = vmatpush.msra.mxu0 0.0
    %3896 = vmatpush.msra.mxu0 0.0
    %3897 = vmatpush.msra.mxu0 0.0
    %3898 = vmatpush.msra.mxu0 0.0
    %3899 = vmatpush.msra.mxu0 0.0
    %3900 = vmatpush.msra.mxu0 0.0
    %3901 = vmatpush.msra.mxu0 0.0
    %3902 = vmatpush.msra.mxu0 0.0
    %3903 = vmatpush.msra.mxu0 0.0
    %3904 = vmatpush.msra.mxu0 %v3887
    %3905 = vmatpush.msra.mxu0 %v3886
    %3906 = vmatpush.msra.mxu0 %v3885
    %3907 = vmatpush.msra.mxu0 %v3884
    %3908 = vmatmul.f32.gmra.mxu0 %v3890
    %v3909 = vpop.f32.mrf.mxu0
    %v3910 = vadd.f32 %v3888, %v3909
    %3911 = vdwg.mxu0
    %vm3912 = vcmask 73728
    %3913 = vst.msk [vmem:[#allocation4] sm:$0x1] %vm3912, %v3910
    // Predicated region
    $region38: #{convnet_forward.1} parent=1 // pred_check
      _
    $region39: #{convnet_forward.1} parent=1 // pred_check_branch
      %3915 = sbr.rel (0) target = $region41
    $region40: #{convnet_forward.1} parent=1 // pred_region
      %3917 = vsyncadd [#allocation5], 0
      %s3919 = sshll.u32 [#allocation4], 4
      %s3920 = int_to_ptr.vmem [resolvable:$true] %s3919
      %s3921 = sshll.u32 %s9, 4
      %s3922 = int_to_ptr.hbm [resolvable:$true] %s3921
      %3924 = dma.vmem_to_hbm [thread:$0]  %s3920, 16, %s3922, [#allocation5]
    $region41: #{convnet_forward.1} parent=1 // pred_fallthru
      _
    // Predicated region
    $region42: #{convnet_forward.1} parent=1 // pred_check
      _
    $region43: #{convnet_forward.1} parent=1 // pred_check_branch
      %3926 = sbr.rel (0) target = $region45
    $region44: #{convnet_forward.1} parent=1 // pred_region
      %3928 = dma.done [#allocation5], 16
    $region45: #{convnet_forward.1} parent=1 // pred_fallthru
      _
    %3929 = vsyncpa [#allocation5], 1

</llo_original>
